<compile_context>
chip_gen: v5e
topology: v5e:2x2
jax: 0.10.0
libtpu: 0.0.40
codegen_flags: <defaults>
</compile_context>

<pallas_src>
import functools

import jax
import jax.numpy as jnp
import numpy as np
from jax.experimental import pallas as pl
from jax.experimental.pallas import tpu as pltpu

# (Cin, Cout, kernel_size, padding) per layer, and its activation.
_LAYERS = [
    (3, 16, 5, 2),
    (16, 32, 5, 2),
    (32, 8, 3, 1),
    (8, 3, 3, 1),
]
_ACTS = ["relu", "relu", "relu", "sigmoid"]


def _ae_fused_kernel(x_ref, t1, b1, t2, b2, t3, b3, t4, b4, o_ref,
                     a1, a2, a3, a4, *, H, W):
    # layout: activations are (rows = y, lanes = (x, channel)); a* are the
    # per-layer padded input buffers (Hp, Wp*Cin) with the W*Cin interior
    # columns FIRST and the zero-padding columns at the end (the Toeplitz
    # weights are built with the matching column permutation).
    t_refs = (t1, t2, t3, t4)
    b_refs = (b1, b2, b3, b4)
    a_refs = (a1, a2, a3, a4)

    # Zero the padded scratch buffers -> provides the conv zero padding.
    for a in a_refs:
        a[...] = jnp.zeros(a.shape, a.dtype)

    cur = x_ref[0].astype(jnp.float32)                  # (H, W*Cin0)
    for idx, ((cin, cout, k, pad), act) in enumerate(zip(_LAYERS, _ACTS)):
        a = a_refs[idx]
        # Place this layer's input into the interior of its padded buffer
        # (sublane offset `pad`, lane offset 0 -> cheap store).
        a[pl.ds(pad, H), pl.ds(0, W * cin)] = cur
        # conv = sum over kernel rows kh of (H, Wp*Cin) @ (Wp*Cin, W*Cout).
        acc = jnp.zeros((H, W * cout), jnp.float32)
        for kh in range(k):                             # static unrolled
            acc = acc + jnp.dot(a[pl.ds(kh, H), :], t_refs[idx][kh],
                                preferred_element_type=jnp.float32)
        acc = acc + b_refs[idx][...]                    # (1, W*Cout) broadcast
        if act == "relu":
            cur = jnp.maximum(acc, 0.0)
        else:                                           # sigmoid (exp -> EUP)
            cur = 1.0 / (1.0 + jnp.exp(-acc))
    o_ref[0] = cur.astype(o_ref.dtype)                  # (H, W*3)


def _build_toeplitz(w_hwio, W):
    """Block-Toeplitz per-kernel-row weight matrices.

    T[kh][col, xo*Cout+cout] with col indexing the (padded-x, cin) columns of
    the padded activation; the padded-x axis is permuted so the W interior
    positions come first (matching the in-kernel buffer layout).
    """
    KH, KW, Cin, Cout = w_hwio.shape
    pad = (KW - 1) // 2
    Wp = W + 2 * pad
    S = np.zeros((KW, Wp, W), np.float32)               # S[kw, xi, xo]=[xi==xo+kw]
    for kw in range(KW):
        for xo in range(W):
            S[kw, xo + kw, xo] = 1.0
    order = (list(range(pad, pad + W)) + list(range(0, pad))
             + list(range(pad + W, Wp)))                # interior-first columns
    S = S[:, order, :]
    T = jnp.einsum("kio,hkcd->hicod", jnp.asarray(S), w_hwio)
    return T.reshape(KH, Wp * Cin, W * Cout)


def _pack_params(params, W):
    packed = []
    for (w, b, _pad) in params:
        cout = w.shape[-1]
        t = _build_toeplitz(w, W)
        b_t = jnp.tile(b, W).reshape(1, W * cout)       # bias per (x, cout) lane
        packed.append((t, b_t))
    return packed


def ae_forward(x_nchw, params):
    """Fused Pallas forward. Accepts / returns NCHW like the PyTorch module."""
    N, C0, H, W = x_nchw.shape
    (t1, b1), (t2, b2), (t3, b3), (t4, b4) = _pack_params(params, W)
    c_out = _LAYERS[-1][1]

    # Input slab: (N, H, W*Cin) -- rows = y, lanes = (x, cin).
    x_in = jnp.transpose(x_nchw, (0, 2, 3, 1)).reshape(N, H, W * C0)

    kernel = functools.partial(_ae_fused_kernel, H=H, W=W)

    out = pl.pallas_call(
        kernel,
        out_shape=jax.ShapeDtypeStruct((N, H, W * c_out), x_nchw.dtype),
        grid_spec=pltpu.PrefetchScalarGridSpec(
            num_scalar_prefetch=0,
            grid=(N,),
            in_specs=[
                pl.BlockSpec((1, H, W * C0), lambda n: (n, 0, 0)),
                pl.BlockSpec(t1.shape, lambda n: (0, 0, 0)),
                pl.BlockSpec(b1.shape, lambda n: (0, 0)),
                pl.BlockSpec(t2.shape, lambda n: (0, 0, 0)),
                pl.BlockSpec(b2.shape, lambda n: (0, 0)),
                pl.BlockSpec(t3.shape, lambda n: (0, 0, 0)),
                pl.BlockSpec(b3.shape, lambda n: (0, 0)),
                pl.BlockSpec(t4.shape, lambda n: (0, 0, 0)),
                pl.BlockSpec(b4.shape, lambda n: (0, 0)),
            ],
            out_specs=pl.BlockSpec((1, H, W * c_out), lambda n: (n, 0, 0)),
            scratch_shapes=[
                pltpu.VMEM((H + 2 * p, (W + 2 * p) * cin), jnp.float32)
                for (cin, _co, _k, p) in _LAYERS        # (20,60)(20,320)(18,576)(18,144)
            ],
        ),
        compiler_params=pltpu.CompilerParams(
            dimension_semantics=("parallel",)),
    )(x_in, t1, b1, t2, b2, t3, b3, t4, b4)

    # (N, H, W*Cout) -> NCHW (tiny 6 KB layout-plumbing transpose in XLA).
    return jnp.transpose(out.reshape(N, H, W, c_out), (0, 3, 1, 2))


# ---------------------------------------------------------------------------
# Parameter construction (deterministic, PyTorch Conv2d default-init style)
# and a plain-JAX reference for correctness checking.
# ---------------------------------------------------------------------------
def init_params(key):
    params = []
    for (cin, cout, k, pad) in _LAYERS:
        key, kw_, kb_ = jax.random.split(key, 3)
        bound = 1.0 / float(np.sqrt(cin * k * k))
        w = jax.random.uniform(kw_, (k, k, cin, cout), jnp.float32, -bound, bound)
        b = jax.random.uniform(kb_, (cout,), jnp.float32, -bound, bound)
        params.append((w, b, pad))
    return params


def ae_forward_reference(x_nchw, params):
    x = jnp.transpose(x_nchw, (0, 2, 3, 1))
    for (w, b, pad), act in zip(params, _ACTS):
        x = jax.lax.conv_general_dilated(
            x, w, window_strides=(1, 1), padding=[(pad, pad), (pad, pad)],
            dimension_numbers=("NHWC", "HWIO", "NHWC")) + b
        x = jnp.maximum(x, 0.0) if act == "relu" else jax.nn.sigmoid(x)
    return jnp.transpose(x, (0, 3, 1, 2))


if __name__ == "__main__":
    key = jax.random.PRNGKey(0)
    kx, kp = jax.random.split(key)
    x = jax.random.normal(kx, (2, 3, 16, 16), jnp.float32)  # NCHW, like PyTorch
    params = init_params(kp)

    fwd = jax.jit(lambda inp: ae_forward(inp, params))      # weights fold at compile
    out = jax.block_until_ready(fwd(x))
    ref = jax.block_until_ready(ae_forward_reference(x, params))

    assert out.shape == (2, 3, 16, 16), out.shape
    np.testing.assert_allclose(np.asarray(out), np.asarray(ref),
                               rtol=1e-4, atol=1e-5)
    print("KERNEL_OK")
</pallas_src>

<mosaic_0001>
module attributes {stable_mosaic.version = 11 : i64} {
  func.func @_ae_fused_kernel(%arg0: i32, %arg1: memref<1x16x48xf32, #tpu.memory_space<vmem>>, %arg2: memref<5x60x256xf32, #tpu.memory_space<vmem>>, %arg3: memref<1x256xf32, #tpu.memory_space<vmem>>, %arg4: memref<5x320x512xf32, #tpu.memory_space<vmem>>, %arg5: memref<1x512xf32, #tpu.memory_space<vmem>>, %arg6: memref<3x576x128xf32, #tpu.memory_space<vmem>>, %arg7: memref<1x128xf32, #tpu.memory_space<vmem>>, %arg8: memref<3x144x48xf32, #tpu.memory_space<vmem>>, %arg9: memref<1x48xf32, #tpu.memory_space<vmem>>, %arg10: memref<1x16x48xf32, #tpu.memory_space<vmem>>, %arg11: memref<20x60xf32, #tpu.memory_space<vmem>>, %arg12: memref<20x320xf32, #tpu.memory_space<vmem>>, %arg13: memref<18x576xf32, #tpu.memory_space<vmem>>, %arg14: memref<18x144xf32, #tpu.memory_space<vmem>>) attributes {dimension_semantics = [#tpu.dimension_semantics<parallel>], iteration_bounds = array<i64: 2>, scalar_prefetch = 0 : i64, scratch_operands = 4 : i64, tpu.core_type = #tpu.core_type<tc>, window_params = [{transform_indices = @transform_0, window_bounds = array<i64: 1, 16, 48>}, {pipeline_mode = #tpu.pipeline_mode<synchronous>, transform_indices = @transform_1, window_bounds = array<i64: 5, 60, 256>}, {pipeline_mode = #tpu.pipeline_mode<synchronous>, transform_indices = @transform_2, window_bounds = array<i64: 1, 256>}, {pipeline_mode = #tpu.pipeline_mode<synchronous>, transform_indices = @transform_3, window_bounds = array<i64: 5, 320, 512>}, {pipeline_mode = #tpu.pipeline_mode<synchronous>, transform_indices = @transform_4, window_bounds = array<i64: 1, 512>}, {pipeline_mode = #tpu.pipeline_mode<synchronous>, transform_indices = @transform_5, window_bounds = array<i64: 3, 576, 128>}, {pipeline_mode = #tpu.pipeline_mode<synchronous>, transform_indices = @transform_6, window_bounds = array<i64: 1, 128>}, {pipeline_mode = #tpu.pipeline_mode<synchronous>, transform_indices = @transform_7, window_bounds = array<i64: 3, 144, 48>}, {pipeline_mode = #tpu.pipeline_mode<synchronous>, transform_indices = @transform_8, window_bounds = array<i64: 1, 48>}, {transform_indices = @transform_9, window_bounds = array<i64: 1, 16, 48>}]} {
    %cst = arith.constant 0.000000e+00 : f32
    %0 = vector.broadcast %cst : f32 to vector<20x60xf32>
    %c0 = arith.constant 0 : index
    %c0_0 = arith.constant 0 : index
    %1 = vector.load %arg11[%c0, %c0_0] : memref<20x60xf32, #tpu.memory_space<vmem>>, vector<20x60xf32>
    tpu.vector_store %arg11[%c0, %c0_0], %0 {strides = array<i32>} : memref<20x60xf32, #tpu.memory_space<vmem>>, vector<20x60xf32>,
    %cst_1 = arith.constant 0.000000e+00 : f32
    %2 = vector.broadcast %cst_1 : f32 to vector<20x320xf32>
    %c0_2 = arith.constant 0 : index
    %c0_3 = arith.constant 0 : index
    %3 = vector.load %arg12[%c0_2, %c0_3] : memref<20x320xf32, #tpu.memory_space<vmem>>, vector<20x320xf32>
    tpu.vector_store %arg12[%c0_2, %c0_3], %2 {strides = array<i32>} : memref<20x320xf32, #tpu.memory_space<vmem>>, vector<20x320xf32>,
    %cst_4 = arith.constant 0.000000e+00 : f32
    %4 = vector.broadcast %cst_4 : f32 to vector<18x576xf32>
    %c0_5 = arith.constant 0 : index
    %c0_6 = arith.constant 0 : index
    %5 = vector.load %arg13[%c0_5, %c0_6] : memref<18x576xf32, #tpu.memory_space<vmem>>, vector<18x576xf32>
    tpu.vector_store %arg13[%c0_5, %c0_6], %4 {strides = array<i32>} : memref<18x576xf32, #tpu.memory_space<vmem>>, vector<18x576xf32>,
    %cst_7 = arith.constant 0.000000e+00 : f32
    %6 = vector.broadcast %cst_7 : f32 to vector<18x144xf32>
    %c0_8 = arith.constant 0 : index
    %c0_9 = arith.constant 0 : index
    %7 = vector.load %arg14[%c0_8, %c0_9] : memref<18x144xf32, #tpu.memory_space<vmem>>, vector<18x144xf32>
    tpu.vector_store %arg14[%c0_8, %c0_9], %6 {strides = array<i32>} : memref<18x144xf32, #tpu.memory_space<vmem>>, vector<18x144xf32>,
    %c0_10 = arith.constant 0 : index
    %c0_11 = arith.constant 0 : index
    %c0_12 = arith.constant 0 : index
    %8 = vector.load %arg1[%c0_10, %c0_11, %c0_12] : memref<1x16x48xf32, #tpu.memory_space<vmem>>, vector<1x16x48xf32>
    %9 = vector.shape_cast %8 : vector<1x16x48xf32> to vector<16x48xf32>
    %c2 = arith.constant 2 : index
    %c0_13 = arith.constant 0 : index
    %10 = vector.load %arg11[%c2, %c0_13] : memref<20x60xf32, #tpu.memory_space<vmem>>, vector<16x48xf32>
    tpu.vector_store %arg11[%c2, %c0_13], %9 {strides = array<i32>} : memref<20x60xf32, #tpu.memory_space<vmem>>, vector<16x48xf32>,
    %cst_14 = arith.constant 0.000000e+00 : f32
    %11 = vector.broadcast %cst_14 : f32 to vector<16x256xf32>
    %c0_15 = arith.constant 0 : index
    %c0_16 = arith.constant 0 : index
    %12 = vector.load %arg11[%c0_15, %c0_16] : memref<20x60xf32, #tpu.memory_space<vmem>>, vector<16x60xf32>
    %c0_17 = arith.constant 0 : index
    %c0_18 = arith.constant 0 : index
    %c0_19 = arith.constant 0 : index
    %13 = vector.load %arg2[%c0_17, %c0_18, %c0_19] : memref<5x60x256xf32, #tpu.memory_space<vmem>>, vector<1x60x256xf32>
    %14 = vector.shape_cast %13 : vector<1x60x256xf32> to vector<60x256xf32>
    %cst_20 = arith.constant dense<0.000000e+00> : vector<16x256xf32>
    %15 = tpu.matmul %12, %14, %cst_20 {dimension_numbers = #tpu.dot_dimension_numbers<[1], [0], [0], [1], [0, 0, 1, 1], [], []>} : vector<16x60xf32>, vector<60x256xf32>, vector<16x256xf32> -> vector<16x256xf32>
    %16 = arith.addf %11, %15 : vector<16x256xf32>
    %c1 = arith.constant 1 : index
    %c0_21 = arith.constant 0 : index
    %17 = vector.load %arg11[%c1, %c0_21] : memref<20x60xf32, #tpu.memory_space<vmem>>, vector<16x60xf32>
    %c1_22 = arith.constant 1 : index
    %c0_23 = arith.constant 0 : index
    %c0_24 = arith.constant 0 : index
    %18 = vector.load %arg2[%c1_22, %c0_23, %c0_24] : memref<5x60x256xf32, #tpu.memory_space<vmem>>, vector<1x60x256xf32>
    %19 = vector.shape_cast %18 : vector<1x60x256xf32> to vector<60x256xf32>
    %cst_25 = arith.constant dense<0.000000e+00> : vector<16x256xf32>
    %20 = tpu.matmul %17, %19, %cst_25 {dimension_numbers = #tpu.dot_dimension_numbers<[1], [0], [0], [1], [0, 0, 1, 1], [], []>} : vector<16x60xf32>, vector<60x256xf32>, vector<16x256xf32> -> vector<16x256xf32>
    %21 = arith.addf %16, %20 : vector<16x256xf32>
    %c2_26 = arith.constant 2 : index
    %c0_27 = arith.constant 0 : index
    %22 = vector.load %arg11[%c2_26, %c0_27] : memref<20x60xf32, #tpu.memory_space<vmem>>, vector<16x60xf32>
    %c2_28 = arith.constant 2 : index
    %c0_29 = arith.constant 0 : index
    %c0_30 = arith.constant 0 : index
    %23 = vector.load %arg2[%c2_28, %c0_29, %c0_30] : memref<5x60x256xf32, #tpu.memory_space<vmem>>, vector<1x60x256xf32>
    %24 = vector.shape_cast %23 : vector<1x60x256xf32> to vector<60x256xf32>
    %cst_31 = arith.constant dense<0.000000e+00> : vector<16x256xf32>
    %25 = tpu.matmul %22, %24, %cst_31 {dimension_numbers = #tpu.dot_dimension_numbers<[1], [0], [0], [1], [0, 0, 1, 1], [], []>} : vector<16x60xf32>, vector<60x256xf32>, vector<16x256xf32> -> vector<16x256xf32>
    %26 = arith.addf %21, %25 : vector<16x256xf32>
    %c3 = arith.constant 3 : index
    %c0_32 = arith.constant 0 : index
    %27 = vector.load %arg11[%c3, %c0_32] : memref<20x60xf32, #tpu.memory_space<vmem>>, vector<16x60xf32>
    %c3_33 = arith.constant 3 : index
    %c0_34 = arith.constant 0 : index
    %c0_35 = arith.constant 0 : index
    %28 = vector.load %arg2[%c3_33, %c0_34, %c0_35] : memref<5x60x256xf32, #tpu.memory_space<vmem>>, vector<1x60x256xf32>
    %29 = vector.shape_cast %28 : vector<1x60x256xf32> to vector<60x256xf32>
    %cst_36 = arith.constant dense<0.000000e+00> : vector<16x256xf32>
    %30 = tpu.matmul %27, %29, %cst_36 {dimension_numbers = #tpu.dot_dimension_numbers<[1], [0], [0], [1], [0, 0, 1, 1], [], []>} : vector<16x60xf32>, vector<60x256xf32>, vector<16x256xf32> -> vector<16x256xf32>
    %31 = arith.addf %26, %30 : vector<16x256xf32>
    %c4 = arith.constant 4 : index
    %c0_37 = arith.constant 0 : index
    %32 = vector.load %arg11[%c4, %c0_37] : memref<20x60xf32, #tpu.memory_space<vmem>>, vector<16x60xf32>
    %c4_38 = arith.constant 4 : index
    %c0_39 = arith.constant 0 : index
    %c0_40 = arith.constant 0 : index
    %33 = vector.load %arg2[%c4_38, %c0_39, %c0_40] : memref<5x60x256xf32, #tpu.memory_space<vmem>>, vector<1x60x256xf32>
    %34 = vector.shape_cast %33 : vector<1x60x256xf32> to vector<60x256xf32>
    %cst_41 = arith.constant dense<0.000000e+00> : vector<16x256xf32>
    %35 = tpu.matmul %32, %34, %cst_41 {dimension_numbers = #tpu.dot_dimension_numbers<[1], [0], [0], [1], [0, 0, 1, 1], [], []>} : vector<16x60xf32>, vector<60x256xf32>, vector<16x256xf32> -> vector<16x256xf32>
    %36 = arith.addf %31, %35 : vector<16x256xf32>
    %c0_42 = arith.constant 0 : index
    %c0_43 = arith.constant 0 : index
    %37 = vector.load %arg3[%c0_42, %c0_43] : memref<1x256xf32, #tpu.memory_space<vmem>>, vector<1x256xf32>
    %38 = vector.broadcast %37 : vector<1x256xf32> to vector<16x256xf32>
    %39 = arith.addf %36, %38 : vector<16x256xf32>
    %cst_44 = arith.constant 0.000000e+00 : f32
    %40 = vector.broadcast %cst_44 : f32 to vector<16x256xf32>
    %41 = arith.maximumf %39, %40 : vector<16x256xf32>
    %c2_45 = arith.constant 2 : index
    %c0_46 = arith.constant 0 : index
    %42 = vector.load %arg12[%c2_45, %c0_46] : memref<20x320xf32, #tpu.memory_space<vmem>>, vector<16x256xf32>
    tpu.vector_store %arg12[%c2_45, %c0_46], %41 {strides = array<i32>} : memref<20x320xf32, #tpu.memory_space<vmem>>, vector<16x256xf32>,
    %cst_47 = arith.constant 0.000000e+00 : f32
    %43 = vector.broadcast %cst_47 : f32 to vector<16x512xf32>
    %c0_48 = arith.constant 0 : index
    %c0_49 = arith.constant 0 : index
    %44 = vector.load %arg12[%c0_48, %c0_49] : memref<20x320xf32, #tpu.memory_space<vmem>>, vector<16x320xf32>
    %c0_50 = arith.constant 0 : index
    %c0_51 = arith.constant 0 : index
    %c0_52 = arith.constant 0 : index
    %45 = vector.load %arg4[%c0_50, %c0_51, %c0_52] : memref<5x320x512xf32, #tpu.memory_space<vmem>>, vector<1x320x512xf32>
    %46 = vector.shape_cast %45 : vector<1x320x512xf32> to vector<320x512xf32>
    %cst_53 = arith.constant dense<0.000000e+00> : vector<16x512xf32>
    %47 = tpu.matmul %44, %46, %cst_53 {dimension_numbers = #tpu.dot_dimension_numbers<[1], [0], [0], [1], [0, 0, 1, 1], [], []>} : vector<16x320xf32>, vector<320x512xf32>, vector<16x512xf32> -> vector<16x512xf32>
    %48 = arith.addf %43, %47 : vector<16x512xf32>
    %c1_54 = arith.constant 1 : index
    %c0_55 = arith.constant 0 : index
    %49 = vector.load %arg12[%c1_54, %c0_55] : memref<20x320xf32, #tpu.memory_space<vmem>>, vector<16x320xf32>
    %c1_56 = arith.constant 1 : index
    %c0_57 = arith.constant 0 : index
    %c0_58 = arith.constant 0 : index
    %50 = vector.load %arg4[%c1_56, %c0_57, %c0_58] : memref<5x320x512xf32, #tpu.memory_space<vmem>>, vector<1x320x512xf32>
    %51 = vector.shape_cast %50 : vector<1x320x512xf32> to vector<320x512xf32>
    %cst_59 = arith.constant dense<0.000000e+00> : vector<16x512xf32>
    %52 = tpu.matmul %49, %51, %cst_59 {dimension_numbers = #tpu.dot_dimension_numbers<[1], [0], [0], [1], [0, 0, 1, 1], [], []>} : vector<16x320xf32>, vector<320x512xf32>, vector<16x512xf32> -> vector<16x512xf32>
    %53 = arith.addf %48, %52 : vector<16x512xf32>
    %c2_60 = arith.constant 2 : index
    %c0_61 = arith.constant 0 : index
    %54 = vector.load %arg12[%c2_60, %c0_61] : memref<20x320xf32, #tpu.memory_space<vmem>>, vector<16x320xf32>
    %c2_62 = arith.constant 2 : index
    %c0_63 = arith.constant 0 : index
    %c0_64 = arith.constant 0 : index
    %55 = vector.load %arg4[%c2_62, %c0_63, %c0_64] : memref<5x320x512xf32, #tpu.memory_space<vmem>>, vector<1x320x512xf32>
    %56 = vector.shape_cast %55 : vector<1x320x512xf32> to vector<320x512xf32>
    %cst_65 = arith.constant dense<0.000000e+00> : vector<16x512xf32>
    %57 = tpu.matmul %54, %56, %cst_65 {dimension_numbers = #tpu.dot_dimension_numbers<[1], [0], [0], [1], [0, 0, 1, 1], [], []>} : vector<16x320xf32>, vector<320x512xf32>, vector<16x512xf32> -> vector<16x512xf32>
    %58 = arith.addf %53, %57 : vector<16x512xf32>
    %c3_66 = arith.constant 3 : index
    %c0_67 = arith.constant 0 : index
    %59 = vector.load %arg12[%c3_66, %c0_67] : memref<20x320xf32, #tpu.memory_space<vmem>>, vector<16x320xf32>
    %c3_68 = arith.constant 3 : index
    %c0_69 = arith.constant 0 : index
    %c0_70 = arith.constant 0 : index
    %60 = vector.load %arg4[%c3_68, %c0_69, %c0_70] : memref<5x320x512xf32, #tpu.memory_space<vmem>>, vector<1x320x512xf32>
    %61 = vector.shape_cast %60 : vector<1x320x512xf32> to vector<320x512xf32>
    %cst_71 = arith.constant dense<0.000000e+00> : vector<16x512xf32>
    %62 = tpu.matmul %59, %61, %cst_71 {dimension_numbers = #tpu.dot_dimension_numbers<[1], [0], [0], [1], [0, 0, 1, 1], [], []>} : vector<16x320xf32>, vector<320x512xf32>, vector<16x512xf32> -> vector<16x512xf32>
    %63 = arith.addf %58, %62 : vector<16x512xf32>
    %c4_72 = arith.constant 4 : index
    %c0_73 = arith.constant 0 : index
    %64 = vector.load %arg12[%c4_72, %c0_73] : memref<20x320xf32, #tpu.memory_space<vmem>>, vector<16x320xf32>
    %c4_74 = arith.constant 4 : index
    %c0_75 = arith.constant 0 : index
    %c0_76 = arith.constant 0 : index
    %65 = vector.load %arg4[%c4_74, %c0_75, %c0_76] : memref<5x320x512xf32, #tpu.memory_space<vmem>>, vector<1x320x512xf32>
    %66 = vector.shape_cast %65 : vector<1x320x512xf32> to vector<320x512xf32>
    %cst_77 = arith.constant dense<0.000000e+00> : vector<16x512xf32>
    %67 = tpu.matmul %64, %66, %cst_77 {dimension_numbers = #tpu.dot_dimension_numbers<[1], [0], [0], [1], [0, 0, 1, 1], [], []>} : vector<16x320xf32>, vector<320x512xf32>, vector<16x512xf32> -> vector<16x512xf32>
    %68 = arith.addf %63, %67 : vector<16x512xf32>
    %c0_78 = arith.constant 0 : index
    %c0_79 = arith.constant 0 : index
    %69 = vector.load %arg5[%c0_78, %c0_79] : memref<1x512xf32, #tpu.memory_space<vmem>>, vector<1x512xf32>
    %70 = vector.broadcast %69 : vector<1x512xf32> to vector<16x512xf32>
    %71 = arith.addf %68, %70 : vector<16x512xf32>
    %cst_80 = arith.constant 0.000000e+00 : f32
    %72 = vector.broadcast %cst_80 : f32 to vector<16x512xf32>
    %73 = arith.maximumf %71, %72 : vector<16x512xf32>
    %c1_81 = arith.constant 1 : index
    %c0_82 = arith.constant 0 : index
    %74 = vector.load %arg13[%c1_81, %c0_82] : memref<18x576xf32, #tpu.memory_space<vmem>>, vector<16x512xf32>
    tpu.vector_store %arg13[%c1_81, %c0_82], %73 {strides = array<i32>} : memref<18x576xf32, #tpu.memory_space<vmem>>, vector<16x512xf32>,
    %cst_83 = arith.constant 0.000000e+00 : f32
    %75 = vector.broadcast %cst_83 : f32 to vector<16x128xf32>
    %c0_84 = arith.constant 0 : index
    %c0_85 = arith.constant 0 : index
    %76 = vector.load %arg13[%c0_84, %c0_85] : memref<18x576xf32, #tpu.memory_space<vmem>>, vector<16x576xf32>
    %c0_86 = arith.constant 0 : index
    %c0_87 = arith.constant 0 : index
    %c0_88 = arith.constant 0 : index
    %77 = vector.load %arg6[%c0_86, %c0_87, %c0_88] : memref<3x576x128xf32, #tpu.memory_space<vmem>>, vector<1x576x128xf32>
    %78 = vector.shape_cast %77 : vector<1x576x128xf32> to vector<576x128xf32>
    %cst_89 = arith.constant dense<0.000000e+00> : vector<16x128xf32>
    %79 = tpu.matmul %76, %78, %cst_89 {dimension_numbers = #tpu.dot_dimension_numbers<[1], [0], [0], [1], [0, 0, 1, 1], [], []>} : vector<16x576xf32>, vector<576x128xf32>, vector<16x128xf32> -> vector<16x128xf32>
    %80 = arith.addf %75, %79 : vector<16x128xf32>
    %c1_90 = arith.constant 1 : index
    %c0_91 = arith.constant 0 : index
    %81 = vector.load %arg13[%c1_90, %c0_91] : memref<18x576xf32, #tpu.memory_space<vmem>>, vector<16x576xf32>
    %c1_92 = arith.constant 1 : index
    %c0_93 = arith.constant 0 : index
    %c0_94 = arith.constant 0 : index
    %82 = vector.load %arg6[%c1_92, %c0_93, %c0_94] : memref<3x576x128xf32, #tpu.memory_space<vmem>>, vector<1x576x128xf32>
    %83 = vector.shape_cast %82 : vector<1x576x128xf32> to vector<576x128xf32>
    %cst_95 = arith.constant dense<0.000000e+00> : vector<16x128xf32>
    %84 = tpu.matmul %81, %83, %cst_95 {dimension_numbers = #tpu.dot_dimension_numbers<[1], [0], [0], [1], [0, 0, 1, 1], [], []>} : vector<16x576xf32>, vector<576x128xf32>, vector<16x128xf32> -> vector<16x128xf32>
    %85 = arith.addf %80, %84 : vector<16x128xf32>
    %c2_96 = arith.constant 2 : index
    %c0_97 = arith.constant 0 : index
    %86 = vector.load %arg13[%c2_96, %c0_97] : memref<18x576xf32, #tpu.memory_space<vmem>>, vector<16x576xf32>
    %c2_98 = arith.constant 2 : index
    %c0_99 = arith.constant 0 : index
    %c0_100 = arith.constant 0 : index
    %87 = vector.load %arg6[%c2_98, %c0_99, %c0_100] : memref<3x576x128xf32, #tpu.memory_space<vmem>>, vector<1x576x128xf32>
    %88 = vector.shape_cast %87 : vector<1x576x128xf32> to vector<576x128xf32>
    %cst_101 = arith.constant dense<0.000000e+00> : vector<16x128xf32>
    %89 = tpu.matmul %86, %88, %cst_101 {dimension_numbers = #tpu.dot_dimension_numbers<[1], [0], [0], [1], [0, 0, 1, 1], [], []>} : vector<16x576xf32>, vector<576x128xf32>, vector<16x128xf32> -> vector<16x128xf32>
    %90 = arith.addf %85, %89 : vector<16x128xf32>
    %c0_102 = arith.constant 0 : index
    %c0_103 = arith.constant 0 : index
    %91 = vector.load %arg7[%c0_102, %c0_103] : memref<1x128xf32, #tpu.memory_space<vmem>>, vector<1x128xf32>
    %92 = vector.broadcast %91 : vector<1x128xf32> to vector<16x128xf32>
    %93 = arith.addf %90, %92 : vector<16x128xf32>
    %cst_104 = arith.constant 0.000000e+00 : f32
    %94 = vector.broadcast %cst_104 : f32 to vector<16x128xf32>
    %95 = arith.maximumf %93, %94 : vector<16x128xf32>
    %c1_105 = arith.constant 1 : index
    %c0_106 = arith.constant 0 : index
    %96 = vector.load %arg14[%c1_105, %c0_106] : memref<18x144xf32, #tpu.memory_space<vmem>>, vector<16x128xf32>
    tpu.vector_store %arg14[%c1_105, %c0_106], %95 {strides = array<i32>} : memref<18x144xf32, #tpu.memory_space<vmem>>, vector<16x128xf32>,
    %cst_107 = arith.constant 0.000000e+00 : f32
    %97 = vector.broadcast %cst_107 : f32 to vector<16x48xf32>
    %c0_108 = arith.constant 0 : index
    %c0_109 = arith.constant 0 : index
    %98 = vector.load %arg14[%c0_108, %c0_109] : memref<18x144xf32, #tpu.memory_space<vmem>>, vector<16x144xf32>
    %c0_110 = arith.constant 0 : index
    %c0_111 = arith.constant 0 : index
    %c0_112 = arith.constant 0 : index
    %99 = vector.load %arg8[%c0_110, %c0_111, %c0_112] : memref<3x144x48xf32, #tpu.memory_space<vmem>>, vector<1x144x48xf32>
    %100 = vector.shape_cast %99 : vector<1x144x48xf32> to vector<144x48xf32>
    %cst_113 = arith.constant dense<0.000000e+00> : vector<16x48xf32>
    %101 = tpu.matmul %98, %100, %cst_113 {dimension_numbers = #tpu.dot_dimension_numbers<[1], [0], [0], [1], [0, 0, 1, 1], [], []>} : vector<16x144xf32>, vector<144x48xf32>, vector<16x48xf32> -> vector<16x48xf32>
    %102 = arith.addf %97, %101 : vector<16x48xf32>
    %c1_114 = arith.constant 1 : index
    %c0_115 = arith.constant 0 : index
    %103 = vector.load %arg14[%c1_114, %c0_115] : memref<18x144xf32, #tpu.memory_space<vmem>>, vector<16x144xf32>
    %c1_116 = arith.constant 1 : index
    %c0_117 = arith.constant 0 : index
    %c0_118 = arith.constant 0 : index
    %104 = vector.load %arg8[%c1_116, %c0_117, %c0_118] : memref<3x144x48xf32, #tpu.memory_space<vmem>>, vector<1x144x48xf32>
    %105 = vector.shape_cast %104 : vector<1x144x48xf32> to vector<144x48xf32>
    %cst_119 = arith.constant dense<0.000000e+00> : vector<16x48xf32>
    %106 = tpu.matmul %103, %105, %cst_119 {dimension_numbers = #tpu.dot_dimension_numbers<[1], [0], [0], [1], [0, 0, 1, 1], [], []>} : vector<16x144xf32>, vector<144x48xf32>, vector<16x48xf32> -> vector<16x48xf32>
    %107 = arith.addf %102, %106 : vector<16x48xf32>
    %c2_120 = arith.constant 2 : index
    %c0_121 = arith.constant 0 : index
    %108 = vector.load %arg14[%c2_120, %c0_121] : memref<18x144xf32, #tpu.memory_space<vmem>>, vector<16x144xf32>
    %c2_122 = arith.constant 2 : index
    %c0_123 = arith.constant 0 : index
    %c0_124 = arith.constant 0 : index
    %109 = vector.load %arg8[%c2_122, %c0_123, %c0_124] : memref<3x144x48xf32, #tpu.memory_space<vmem>>, vector<1x144x48xf32>
    %110 = vector.shape_cast %109 : vector<1x144x48xf32> to vector<144x48xf32>
    %cst_125 = arith.constant dense<0.000000e+00> : vector<16x48xf32>
    %111 = tpu.matmul %108, %110, %cst_125 {dimension_numbers = #tpu.dot_dimension_numbers<[1], [0], [0], [1], [0, 0, 1, 1], [], []>} : vector<16x144xf32>, vector<144x48xf32>, vector<16x48xf32> -> vector<16x48xf32>
    %112 = arith.addf %107, %111 : vector<16x48xf32>
    %c0_126 = arith.constant 0 : index
    %c0_127 = arith.constant 0 : index
    %113 = vector.load %arg9[%c0_126, %c0_127] : memref<1x48xf32, #tpu.memory_space<vmem>>, vector<1x48xf32>
    %114 = vector.broadcast %113 : vector<1x48xf32> to vector<16x48xf32>
    %115 = arith.addf %112, %114 : vector<16x48xf32>
    %cst_128 = arith.constant 0.000000e+00 : f32
    %116 = vector.broadcast %cst_128 : f32 to vector<16x48xf32>
    %117 = arith.subf %116, %115 : vector<16x48xf32>
    %118 = math.exp %117 : vector<16x48xf32>
    %cst_129 = arith.constant 1.000000e+00 : f32
    %119 = vector.broadcast %cst_129 : f32 to vector<16x48xf32>
    %120 = arith.addf %119, %118 : vector<16x48xf32>
    %cst_130 = arith.constant 1.000000e+00 : f32
    %121 = vector.broadcast %cst_130 : f32 to vector<16x48xf32>
    %122 = arith.divf %121, %120 : vector<16x48xf32>
    %c0_131 = arith.constant 0 : index
    %c0_132 = arith.constant 0 : index
    %c0_133 = arith.constant 0 : index
    %123 = vector.load %arg10[%c0_131, %c0_132, %c0_133] : memref<1x16x48xf32, #tpu.memory_space<vmem>>, vector<1x16x48xf32>
    %124 = vector.shape_cast %123 : vector<1x16x48xf32> to vector<16x48xf32>
    %125 = vector.shape_cast %122 : vector<16x48xf32> to vector<1x16x48xf32>
    tpu.vector_store %arg10[%c0_131, %c0_132, %c0_133], %125 {strides = array<i32>} : memref<1x16x48xf32, #tpu.memory_space<vmem>>, vector<1x16x48xf32>,
    return
  }
  func.func @transform_0(%arg0: i32) -> (i32, i32, i32) {
    %c0_i32 = arith.constant 0 : i32
    %c0_i32_0 = arith.constant 0 : i32
    %c0_i32_1 = arith.constant 0 : i32
    return %arg0, %c0_i32, %c0_i32_0 : i32, i32, i32
  }
  func.func @transform_1(%arg0: i32) -> (i32, i32, i32) {
    %c0_i32 = arith.constant 0 : i32
    %c0_i32_0 = arith.constant 0 : i32
    %c0_i32_1 = arith.constant 0 : i32
    %c0_i32_2 = arith.constant 0 : i32
    return %c0_i32, %c0_i32_0, %c0_i32_1 : i32, i32, i32
  }
  func.func @transform_2(%arg0: i32) -> (i32, i32) {
    %c0_i32 = arith.constant 0 : i32
    %c0_i32_0 = arith.constant 0 : i32
    %c0_i32_1 = arith.constant 0 : i32
    return %c0_i32, %c0_i32_0 : i32, i32
  }
  func.func @transform_3(%arg0: i32) -> (i32, i32, i32) {
    %c0_i32 = arith.constant 0 : i32
    %c0_i32_0 = arith.constant 0 : i32
    %c0_i32_1 = arith.constant 0 : i32
    %c0_i32_2 = arith.constant 0 : i32
    return %c0_i32, %c0_i32_0, %c0_i32_1 : i32, i32, i32
  }
  func.func @transform_4(%arg0: i32) -> (i32, i32) {
    %c0_i32 = arith.constant 0 : i32
    %c0_i32_0 = arith.constant 0 : i32
    %c0_i32_1 = arith.constant 0 : i32
    return %c0_i32, %c0_i32_0 : i32, i32
  }
  func.func @transform_5(%arg0: i32) -> (i32, i32, i32) {
    %c0_i32 = arith.constant 0 : i32
    %c0_i32_0 = arith.constant 0 : i32
    %c0_i32_1 = arith.constant 0 : i32
    %c0_i32_2 = arith.constant 0 : i32
    return %c0_i32, %c0_i32_0, %c0_i32_1 : i32, i32, i32
  }
  func.func @transform_6(%arg0: i32) -> (i32, i32) {
    %c0_i32 = arith.constant 0 : i32
    %c0_i32_0 = arith.constant 0 : i32
    %c0_i32_1 = arith.constant 0 : i32
    return %c0_i32, %c0_i32_0 : i32, i32
  }
  func.func @transform_7(%arg0: i32) -> (i32, i32, i32) {
    %c0_i32 = arith.constant 0 : i32
    %c0_i32_0 = arith.constant 0 : i32
    %c0_i32_1 = arith.constant 0 : i32
    %c0_i32_2 = arith.constant 0 : i32
    return %c0_i32, %c0_i32_0, %c0_i32_1 : i32, i32, i32
  }
  func.func @transform_8(%arg0: i32) -> (i32, i32) {
    %c0_i32 = arith.constant 0 : i32
    %c0_i32_0 = arith.constant 0 : i32
    %c0_i32_1 = arith.constant 0 : i32
    return %c0_i32, %c0_i32_0 : i32, i32
  }
  func.func @transform_9(%arg0: i32) -> (i32, i32, i32) {
    %c0_i32 = arith.constant 0 : i32
    %c0_i32_0 = arith.constant 0 : i32
    %c0_i32_1 = arith.constant 0 : i32
    return %arg0, %c0_i32, %c0_i32_0 : i32, i32, i32
  }
}

</mosaic_0001>

<llo_original>
// kernel: tile.23
$region0: #{tile.23}
  %s0 = inlined_call_operand.vmem [shape: f32[16,32], index: 0, kind: input, shape index: {}]
  %s1 = inlined_call_operand.vmem [shape: f32[1,512], index: 1, kind: output, shape index: {}]
  $region1: #{tile.23} parent=0
    #allocation0 [shape = 'u8[16384]{0}', space=vmem, size = 0x4000, scoped, tag = 'scoped mem for output reshape']
    %v2 = vld [vmem:[%s0] ss:$4 sm:$0xf]
    %vm3 = vcmask 261120
    %4 = vst.msk [vmem:[#allocation0] ss:$8 sm:$0xf] %vm3, %v2
    %s5 = scalar_lea.vmem %s0, 3
    %v6 = vld [vmem:[%s5] ss:$4 sm:$0xf]
    %7 = vrot.lane.b32.xlu0 %v6, 96
    %v8 = vpop.permute.xlu0 %7
    %vm9 = vcmask 1048320
    %10 = vst.msk [vmem:[#allocation0] ss:$8 sm:$0xf] %vm9, %v8
    %s11 = scalar_lea.vmem %s0, 2
    %v12 = vld [vmem:[%s11] ss:$4 sm:$0xf]
    %13 = vrot.lane.b32.xlu0 %v12, 64
    %v14 = vpop.permute.xlu0 %13
    %vm15 = vcmask 785920
    %16 = vst.msk [vmem:[#allocation0] ss:$8 sm:$0xf] %vm15, %v14
    %s17 = scalar_lea.vmem %s0, 1
    %v18 = vld [vmem:[%s17] ss:$4 sm:$0xf]
    %19 = vrot.lane.b32.xlu0 %v18, 32
    %v20 = vpop.permute.xlu0 %19
    %vm21 = vcmask 523520
    %22 = vst.msk [vmem:[#allocation0] ss:$8 sm:$0xf] %vm21, %v20
    %s24 = ssub.s32 2, 1
    %v25 = vld [vmem:[#allocation0] sm:%s24]
    %s27 = ssub.s32 2, 1
    %28 = vst [vmem:[%s1] sm:%s27] %v25
    %s29 = scalar_lea.vmem [#allocation0], 8
    %v30 = vld [vmem:[%s29] sm:%s24]
    %s32 = ssub.s32 2, 1
    %s33 = scalar_lea.vmem %s1, 1
    %34 = vst [vmem:[%s33] sm:%s32] %v30
    %s35 = scalar_lea.vmem [#allocation0], 16
    %v36 = vld [vmem:[%s35] sm:%s24]
    %s38 = ssub.s32 2, 1
    %s39 = scalar_lea.vmem %s1, 2
    %40 = vst [vmem:[%s39] sm:%s38] %v36
    %s41 = scalar_lea.vmem [#allocation0], 24
    %v42 = vld [vmem:[%s41] sm:%s24]
    %s44 = ssub.s32 2, 1
    %s45 = scalar_lea.vmem %s1, 3
    %46 = vst [vmem:[%s45] sm:%s44] %v42

// kernel: tile.19
$region0: #{tile.19}
  %s0 = inlined_call_operand.vmem [shape: f32[16,16], index: 0, kind: input, shape index: {}]
  %s1 = inlined_call_operand.vmem [shape: f32[1,256], index: 1, kind: output, shape index: {}]
  $region1: #{tile.19} parent=0
    #allocation0 [shape = 'u8[8192]{0}', space=vmem, size = 0x2000, scoped, tag = 'scoped mem for output reshape']
    %s2 = smov 3
    %v3 = vld [vmem:[%s0] ss:$8 sm:%s2]
    %vm4 = vcmask 130048
    %5 = vst.msk [vmem:[#allocation0] ss:$8 sm:$0x3] %vm4, %v3
    %s6 = scalar_lea.vmem %s0, 7
    %s7 = smov 3
    %v8 = vld [vmem:[%s6] ss:$8 sm:%s7]
    %9 = vrot.lane.b32.xlu0 %v8, 112
    %v10 = vpop.permute.xlu0 %9
    %vm11 = vcmask 1048448
    %12 = vst.msk [vmem:[#allocation0] ss:$8 sm:$0x3] %vm11, %v10
    %s13 = scalar_lea.vmem %s0, 6
    %s14 = smov 3
    %v15 = vld [vmem:[%s13] ss:$8 sm:%s14]
    %16 = vrot.lane.b32.xlu0 %v15, 96
    %v17 = vpop.permute.xlu0 %16
    %vm18 = vcmask 917248
    %19 = vst.msk [vmem:[#allocation0] ss:$8 sm:$0x3] %vm18, %v17
    %s20 = scalar_lea.vmem %s0, 5
    %s21 = smov 3
    %v22 = vld [vmem:[%s20] ss:$8 sm:%s21]
    %23 = vrot.lane.b32.xlu0 %v22, 80
    %v24 = vpop.permute.xlu0 %23
    %vm25 = vcmask 786048
    %26 = vst.msk [vmem:[#allocation0] ss:$8 sm:$0x3] %vm25, %v24
    %s27 = scalar_lea.vmem %s0, 4
    %s28 = smov 3
    %v29 = vld [vmem:[%s27] ss:$8 sm:%s28]
    %30 = vrot.lane.b32.xlu0 %v29, 64
    %v31 = vpop.permute.xlu0 %30
    %vm32 = vcmask 654848
    %33 = vst.msk [vmem:[#allocation0] ss:$8 sm:$0x3] %vm32, %v31
    %s34 = scalar_lea.vmem %s0, 3
    %s35 = smov 3
    %v36 = vld [vmem:[%s34] ss:$8 sm:%s35]
    %37 = vrot.lane.b32.xlu0 %v36, 48
    %v38 = vpop.permute.xlu0 %37
    %vm39 = vcmask 523648
    %40 = vst.msk [vmem:[#allocation0] ss:$8 sm:$0x3] %vm39, %v38
    %s41 = scalar_lea.vmem %s0, 2
    %s42 = smov 3
    %v43 = vld [vmem:[%s41] ss:$8 sm:%s42]
    %44 = vrot.lane.b32.xlu0 %v43, 32
    %v45 = vpop.permute.xlu0 %44
    %vm46 = vcmask 392448
    %47 = vst.msk [vmem:[#allocation0] ss:$8 sm:$0x3] %vm46, %v45
    %s48 = scalar_lea.vmem %s0, 1
    %s49 = smov 3
    %v50 = vld [vmem:[%s48] ss:$8 sm:%s49]
    %51 = vrot.lane.b32.xlu0 %v50, 16
    %v52 = vpop.permute.xlu0 %51
    %vm53 = vcmask 261248
    %54 = vst.msk [vmem:[#allocation0] ss:$8 sm:$0x3] %vm53, %v52
    %s56 = ssub.s32 2, 1
    %v57 = vld [vmem:[#allocation0] sm:%s56]
    %s59 = ssub.s32 2, 1
    %60 = vst [vmem:[%s1] sm:%s59] %v57
    %s61 = scalar_lea.vmem [#allocation0], 8
    %v62 = vld [vmem:[%s61] sm:%s56]
    %s64 = ssub.s32 2, 1
    %s65 = scalar_lea.vmem %s1, 1
    %66 = vst [vmem:[%s65] sm:%s64] %v62

// kernel: tile.22
$region0: #{tile.22}
  #allocation2 [shape = 's32[1]{0}', space=sflag, size = 0x4, scoped, tag = 'scoped memory for tile.22']
  %s0 = inlined_call_operand.hbm [shape: f32[32], index: 0, kind: input, shape index: {}]
  %s1 = inlined_call_operand.vmem [shape: f32[16,32], index: 1, kind: output, shape index: {}]
  $region1: #{tile.22} parent=0
    #allocation0 [shape = 'u8[512]{0}', space=vmem, size = 0x400, scoped, tag = 'operand span for operand 0']
    #allocation1 [shape = 's32[1]{0}', space=sflag, size = 0x4, scoped, tag = 'scoped memory for tile.22']
    %2 = vsyncpa [#allocation1], 0
    // Predicated region
    $region2: #{tile.22} parent=1 // pred_check
      _
    $region3: #{tile.22} parent=1 // pred_check_branch
      %4 = sbr.rel (0) target = $region5
    $region4: #{tile.22} parent=1 // pred_region
      %6 = vsyncadd [#allocation1], 0
      %s8 = sshll.u32 %s0, 4
      %s9 = int_to_ptr.hbm [resolvable:$true] %s8
      %s10 = sshll.u32 [#allocation0], 4
      %s11 = int_to_ptr.vmem [resolvable:$true] %s10
      %13 = dma.hbm_to_vmem [thread:$0]  %s9, 16, %s11, [#allocation1]
    $region5: #{tile.22} parent=1 // pred_fallthru
      _
    // Predicated region
    $region6: #{tile.22} parent=1 // pred_check
      _
    $region7: #{tile.22} parent=1 // pred_check_branch
      %15 = sbr.rel (0) target = $region9
    $region8: #{tile.22} parent=1 // pred_region
      %17 = dma.done [#allocation1], 16
    $region9: #{tile.22} parent=1 // pred_fallthru
      _
    %v18 = vld [vmem:[#allocation0] ss:$0 sm:$0xff]
    %19 = vst [vmem:[%s1] sm:$0xff] %v18
    %s20 = scalar_lea.vmem %s1, 8
    %21 = vst [vmem:[%s20] sm:$0xff] %v18
    %22 = vsyncpa [#allocation1], 1

// kernel: tile.18
$region0: #{tile.18}
  #allocation2 [shape = 's32[1]{0}', space=sflag, size = 0x4, scoped, tag = 'scoped memory for tile.18']
  %s0 = inlined_call_operand.hbm [shape: f32[16], index: 0, kind: input, shape index: {}]
  %s1 = inlined_call_operand.vmem [shape: f32[16,16], index: 1, kind: output, shape index: {}]
  $region1: #{tile.18} parent=0
    #allocation0 [shape = 'u8[512]{0}', space=vmem, size = 0x400, scoped, tag = 'operand span for operand 0']
    #allocation1 [shape = 's32[1]{0}', space=sflag, size = 0x4, scoped, tag = 'scoped memory for tile.18']
    %2 = vsyncpa [#allocation1], 0
    // Predicated region
    $region2: #{tile.18} parent=1 // pred_check
      _
    $region3: #{tile.18} parent=1 // pred_check_branch
      %4 = sbr.rel (0) target = $region5
    $region4: #{tile.18} parent=1 // pred_region
      %6 = vsyncadd [#allocation1], 0
      %s8 = sshll.u32 %s0, 4
      %s9 = int_to_ptr.hbm [resolvable:$true] %s8
      %s10 = sshll.u32 [#allocation0], 4
      %s11 = int_to_ptr.vmem [resolvable:$true] %s10
      %13 = dma.hbm_to_vmem [thread:$0]  %s9, 16, %s11, [#allocation1]
    $region5: #{tile.18} parent=1 // pred_fallthru
      _
    // Predicated region
    $region6: #{tile.18} parent=1 // pred_check
      _
    $region7: #{tile.18} parent=1 // pred_check_branch
      %15 = sbr.rel (0) target = $region9
    $region8: #{tile.18} parent=1 // pred_region
      %17 = dma.done [#allocation1], 16
    $region9: #{tile.18} parent=1 // pred_fallthru
      _
    %v18 = vld [vmem:[#allocation0] ss:$0 sm:$0xff]
    %19 = vst [vmem:[%s1] sm:$0xff] %v18
    %s20 = scalar_lea.vmem %s1, 8
    %21 = vst [vmem:[%s20] sm:$0xff] %v18
    %22 = vsyncpa [#allocation1], 1

// kernel: tile.26
$region0: #{tile.26}
  #allocation2 [shape = 's32[1]{0}', space=sflag, size = 0x4, scoped, tag = 'scoped memory for tile.26']
  %s0 = inlined_call_operand.hbm [shape: f32[8], index: 0, kind: input, shape index: {}]
  %s1 = inlined_call_operand.vmem [shape: f32[16,8], index: 1, kind: output, shape index: {}]
  $region1: #{tile.26} parent=0
    #allocation0 [shape = 'u8[512]{0}', space=vmem, size = 0x400, scoped, tag = 'operand span for operand 0']
    #allocation1 [shape = 's32[1]{0}', space=sflag, size = 0x4, scoped, tag = 'scoped memory for tile.26']
    %2 = vsyncpa [#allocation1], 0
    // Predicated region
    $region2: #{tile.26} parent=1 // pred_check
      _
    $region3: #{tile.26} parent=1 // pred_check_branch
      %4 = sbr.rel (0) target = $region5
    $region4: #{tile.26} parent=1 // pred_region
      %6 = vsyncadd [#allocation1], 0
      %s8 = sshll.u32 %s0, 4
      %s9 = int_to_ptr.hbm [resolvable:$true] %s8
      %s10 = sshll.u32 [#allocation0], 4
      %s11 = int_to_ptr.vmem [resolvable:$true] %s10
      %13 = dma.hbm_to_vmem [thread:$0]  %s9, 16, %s11, [#allocation1]
    $region5: #{tile.26} parent=1 // pred_fallthru
      _
    // Predicated region
    $region6: #{tile.26} parent=1 // pred_check
      _
    $region7: #{tile.26} parent=1 // pred_check_branch
      %15 = sbr.rel (0) target = $region9
    $region8: #{tile.26} parent=1 // pred_region
      %17 = dma.done [#allocation1], 16
    $region9: #{tile.26} parent=1 // pred_fallthru
      _
    %v18 = vld [vmem:[#allocation0] ss:$0 sm:$0xff]
    %19 = vst [vmem:[%s1] sm:$0xff] %v18
    %s20 = scalar_lea.vmem %s1, 8
    %21 = vst [vmem:[%s20] sm:$0xff] %v18
    %22 = vsyncpa [#allocation1], 1

// kernel: tile.27
$region0: #{tile.27}
  %s0 = inlined_call_operand.vmem [shape: f32[16,8], index: 0, kind: input, shape index: {}]
  %s1 = inlined_call_operand.vmem [shape: f32[1,128], index: 1, kind: output, shape index: {}]
  $region1: #{tile.27} parent=0
    #allocation0 [shape = 'u8[4096]{0}', space=vmem, size = 0x1000, scoped, tag = 'scoped mem for output reshape']
    %v2 = vld [vmem:[%s0] sm:$0x1]
    %vm3 = vcmask 64512
    %4 = vst.msk [vmem:[#allocation0] sm:$0x1] %vm3, %v2
    %s5 = scalar_lea.vmem %s0, 15
    %v6 = vld [vmem:[%s5] sm:$0x1]
    %7 = vrot.lane.b32.xlu0 %v6, 120
    %v8 = vpop.permute.xlu0 %7
    %vm9 = vcmask 1048512
    %10 = vst.msk [vmem:[#allocation0] sm:$0x1] %vm9, %v8
    %s11 = scalar_lea.vmem %s0, 14
    %v12 = vld [vmem:[%s11] sm:$0x1]
    %13 = vrot.lane.b32.xlu0 %v12, 112
    %v14 = vpop.permute.xlu0 %13
    %vm15 = vcmask 982912
    %16 = vst.msk [vmem:[#allocation0] sm:$0x1] %vm15, %v14
    %s17 = scalar_lea.vmem %s0, 13
    %v18 = vld [vmem:[%s17] sm:$0x1]
    %19 = vrot.lane.b32.xlu0 %v18, 104
    %v20 = vpop.permute.xlu0 %19
    %vm21 = vcmask 917312
    %22 = vst.msk [vmem:[#allocation0] sm:$0x1] %vm21, %v20
    %s23 = scalar_lea.vmem %s0, 12
    %v24 = vld [vmem:[%s23] sm:$0x1]
    %25 = vrot.lane.b32.xlu0 %v24, 96
    %v26 = vpop.permute.xlu0 %25
    %vm27 = vcmask 851712
    %28 = vst.msk [vmem:[#allocation0] sm:$0x1] %vm27, %v26
    %s29 = scalar_lea.vmem %s0, 11
    %v30 = vld [vmem:[%s29] sm:$0x1]
    %31 = vrot.lane.b32.xlu0 %v30, 88
    %v32 = vpop.permute.xlu0 %31
    %vm33 = vcmask 786112
    %34 = vst.msk [vmem:[#allocation0] sm:$0x1] %vm33, %v32
    %s35 = scalar_lea.vmem %s0, 10
    %v36 = vld [vmem:[%s35] sm:$0x1]
    %37 = vrot.lane.b32.xlu0 %v36, 80
    %v38 = vpop.permute.xlu0 %37
    %vm39 = vcmask 720512
    %40 = vst.msk [vmem:[#allocation0] sm:$0x1] %vm39, %v38
    %s41 = scalar_lea.vmem %s0, 9
    %v42 = vld [vmem:[%s41] sm:$0x1]
    %43 = vrot.lane.b32.xlu0 %v42, 72
    %v44 = vpop.permute.xlu0 %43
    %vm45 = vcmask 654912
    %46 = vst.msk [vmem:[#allocation0] sm:$0x1] %vm45, %v44
    %s47 = scalar_lea.vmem %s0, 8
    %v48 = vld [vmem:[%s47] sm:$0x1]
    %49 = vrot.lane.b32.xlu0 %v48, 64
    %v50 = vpop.permute.xlu0 %49
    %vm51 = vcmask 589312
    %52 = vst.msk [vmem:[#allocation0] sm:$0x1] %vm51, %v50
    %s53 = scalar_lea.vmem %s0, 7
    %v54 = vld [vmem:[%s53] sm:$0x1]
    %55 = vrot.lane.b32.xlu0 %v54, 56
    %v56 = vpop.permute.xlu0 %55
    %vm57 = vcmask 523712
    %58 = vst.msk [vmem:[#allocation0] sm:$0x1] %vm57, %v56
    %s59 = scalar_lea.vmem %s0, 6
    %v60 = vld [vmem:[%s59] sm:$0x1]
    %61 = vrot.lane.b32.xlu0 %v60, 48
    %v62 = vpop.permute.xlu0 %61
    %vm63 = vcmask 458112
    %64 = vst.msk [vmem:[#allocation0] sm:$0x1] %vm63, %v62
    %s65 = scalar_lea.vmem %s0, 5
    %v66 = vld [vmem:[%s65] sm:$0x1]
    %67 = vrot.lane.b32.xlu0 %v66, 40
    %v68 = vpop.permute.xlu0 %67
    %vm69 = vcmask 392512
    %70 = vst.msk [vmem:[#allocation0] sm:$0x1] %vm69, %v68
    %s71 = scalar_lea.vmem %s0, 4
    %v72 = vld [vmem:[%s71] sm:$0x1]
    %73 = vrot.lane.b32.xlu0 %v72, 32
    %v74 = vpop.permute.xlu0 %73
    %vm75 = vcmask 326912
    %76 = vst.msk [vmem:[#allocation0] sm:$0x1] %vm75, %v74
    %s77 = scalar_lea.vmem %s0, 3
    %v78 = vld [vmem:[%s77] sm:$0x1]
    %79 = vrot.lane.b32.xlu0 %v78, 24
    %v80 = vpop.permute.xlu0 %79
    %vm81 = vcmask 261312
    %82 = vst.msk [vmem:[#allocation0] sm:$0x1] %vm81, %v80
    %s83 = scalar_lea.vmem %s0, 2
    %v84 = vld [vmem:[%s83] sm:$0x1]
    %85 = vrot.lane.b32.xlu0 %v84, 16
    %v86 = vpop.permute.xlu0 %85
    %vm87 = vcmask 195712
    %88 = vst.msk [vmem:[#allocation0] sm:$0x1] %vm87, %v86
    %s89 = scalar_lea.vmem %s0, 1
    %v90 = vld [vmem:[%s89] sm:$0x1]
    %91 = vrot.lane.b32.xlu0 %v90, 8
    %v92 = vpop.permute.xlu0 %91
    %vm93 = vcmask 130112
    %94 = vst.msk [vmem:[#allocation0] sm:$0x1] %vm93, %v92
    %s96 = ssub.s32 2, 1
    %v97 = vld [vmem:[#allocation0] sm:%s96]
    %s99 = ssub.s32 2, 1
    %100 = vst [vmem:[%s1] sm:%s99] %v97

// kernel: tile.30
$region0: #{tile.30}
  #allocation2 [shape = 's32[1]{0}', space=sflag, size = 0x4, scoped, tag = 'scoped memory for tile.30']
  %s0 = inlined_call_operand.hbm [shape: f32[3], index: 0, kind: input, shape index: {}]
  %s1 = inlined_call_operand.vmem [shape: f32[16,3], index: 1, kind: output, shape index: {}]
  $region1: #{tile.30} parent=0
    #allocation0 [shape = 'u8[512]{0}', space=vmem, size = 0x400, scoped, tag = 'operand span for operand 0']
    #allocation1 [shape = 's32[1]{0}', space=sflag, size = 0x4, scoped, tag = 'scoped memory for tile.30']
    %2 = vsyncpa [#allocation1], 0
    // Predicated region
    $region2: #{tile.30} parent=1 // pred_check
      _
    $region3: #{tile.30} parent=1 // pred_check_branch
      %4 = sbr.rel (0) target = $region5
    $region4: #{tile.30} parent=1 // pred_region
      %6 = vsyncadd [#allocation1], 0
      %s8 = sshll.u32 %s0, 4
      %s9 = int_to_ptr.hbm [resolvable:$true] %s8
      %s10 = sshll.u32 [#allocation0], 4
      %s11 = int_to_ptr.vmem [resolvable:$true] %s10
      %13 = dma.hbm_to_vmem [thread:$0]  %s9, 16, %s11, [#allocation1]
    $region5: #{tile.30} parent=1 // pred_fallthru
      _
    // Predicated region
    $region6: #{tile.30} parent=1 // pred_check
      _
    $region7: #{tile.30} parent=1 // pred_check_branch
      %15 = sbr.rel (0) target = $region9
    $region8: #{tile.30} parent=1 // pred_region
      %17 = dma.done [#allocation1], 16
    $region9: #{tile.30} parent=1 // pred_fallthru
      _
    %v18 = vld [vmem:[#allocation0] ss:$0 sm:$0xff]
    %19 = vst [vmem:[%s1] sm:$0xff] %v18
    %s20 = scalar_lea.vmem %s1, 8
    %21 = vst [vmem:[%s20] sm:$0xff] %v18
    %22 = vsyncpa [#allocation1], 1

// kernel: tile.31
$region0: #{tile.31}
  %s0 = inlined_call_operand.vmem [shape: f32[16,3], index: 0, kind: input, shape index: {}]
  %s1 = inlined_call_operand.vmem [shape: f32[1,48], index: 1, kind: output, shape index: {}]
  $region1: #{tile.31} parent=0
    #allocation0 [shape = 'u8[4096]{0}', space=vmem, size = 0x1000, scoped, tag = 'scoped mem for output reshape']
    %v2 = vld [vmem:[%s0] sm:$0x1]
    %vm3 = vcmask 23552
    %4 = vst.msk [vmem:[#allocation0] sm:$0x1] %vm3, %v2
    %s5 = scalar_lea.vmem %s0, 15
    %v6 = vld [vmem:[%s5] sm:$0x1]
    %7 = vrot.lane.b32.xlu0 %v6, 45
    %v8 = vpop.permute.xlu0 %7
    %vm9 = vcmask 392552
    %10 = vst.msk [vmem:[#allocation0] sm:$0x1] %vm9, %v8
    %s11 = scalar_lea.vmem %s0, 14
    %v12 = vld [vmem:[%s11] sm:$0x1]
    %13 = vrot.lane.b32.xlu0 %v12, 42
    %v14 = vpop.permute.xlu0 %13
    %vm15 = vcmask 367952
    %16 = vst.msk [vmem:[#allocation0] sm:$0x1] %vm15, %v14
    %s17 = scalar_lea.vmem %s0, 13
    %v18 = vld [vmem:[%s17] sm:$0x1]
    %19 = vrot.lane.b32.xlu0 %v18, 39
    %v20 = vpop.permute.xlu0 %19
    %vm21 = vcmask 343352
    %22 = vst.msk [vmem:[#allocation0] sm:$0x1] %vm21, %v20
    %s23 = scalar_lea.vmem %s0, 12
    %v24 = vld [vmem:[%s23] sm:$0x1]
    %25 = vrot.lane.b32.xlu0 %v24, 36
    %v26 = vpop.permute.xlu0 %25
    %vm27 = vcmask 318752
    %28 = vst.msk [vmem:[#allocation0] sm:$0x1] %vm27, %v26
    %s29 = scalar_lea.vmem %s0, 11
    %v30 = vld [vmem:[%s29] sm:$0x1]
    %31 = vrot.lane.b32.xlu0 %v30, 33
    %v32 = vpop.permute.xlu0 %31
    %vm33 = vcmask 294152
    %34 = vst.msk [vmem:[#allocation0] sm:$0x1] %vm33, %v32
    %s35 = scalar_lea.vmem %s0, 10
    %v36 = vld [vmem:[%s35] sm:$0x1]
    %37 = vrot.lane.b32.xlu0 %v36, 30
    %v38 = vpop.permute.xlu0 %37
    %vm39 = vcmask 269552
    %40 = vst.msk [vmem:[#allocation0] sm:$0x1] %vm39, %v38
    %s41 = scalar_lea.vmem %s0, 9
    %v42 = vld [vmem:[%s41] sm:$0x1]
    %43 = vrot.lane.b32.xlu0 %v42, 27
    %v44 = vpop.permute.xlu0 %43
    %vm45 = vcmask 244952
    %46 = vst.msk [vmem:[#allocation0] sm:$0x1] %vm45, %v44
    %s47 = scalar_lea.vmem %s0, 8
    %v48 = vld [vmem:[%s47] sm:$0x1]
    %49 = vrot.lane.b32.xlu0 %v48, 24
    %v50 = vpop.permute.xlu0 %49
    %vm51 = vcmask 220352
    %52 = vst.msk [vmem:[#allocation0] sm:$0x1] %vm51, %v50
    %s53 = scalar_lea.vmem %s0, 7
    %v54 = vld [vmem:[%s53] sm:$0x1]
    %55 = vrot.lane.b32.xlu0 %v54, 21
    %v56 = vpop.permute.xlu0 %55
    %vm57 = vcmask 195752
    %58 = vst.msk [vmem:[#allocation0] sm:$0x1] %vm57, %v56
    %s59 = scalar_lea.vmem %s0, 6
    %v60 = vld [vmem:[%s59] sm:$0x1]
    %61 = vrot.lane.b32.xlu0 %v60, 18
    %v62 = vpop.permute.xlu0 %61
    %vm63 = vcmask 171152
    %64 = vst.msk [vmem:[#allocation0] sm:$0x1] %vm63, %v62
    %s65 = scalar_lea.vmem %s0, 5
    %v66 = vld [vmem:[%s65] sm:$0x1]
    %67 = vrot.lane.b32.xlu0 %v66, 15
    %v68 = vpop.permute.xlu0 %67
    %vm69 = vcmask 146552
    %70 = vst.msk [vmem:[#allocation0] sm:$0x1] %vm69, %v68
    %s71 = scalar_lea.vmem %s0, 4
    %v72 = vld [vmem:[%s71] sm:$0x1]
    %73 = vrot.lane.b32.xlu0 %v72, 12
    %v74 = vpop.permute.xlu0 %73
    %vm75 = vcmask 121952
    %76 = vst.msk [vmem:[#allocation0] sm:$0x1] %vm75, %v74
    %s77 = scalar_lea.vmem %s0, 3
    %v78 = vld [vmem:[%s77] sm:$0x1]
    %79 = vrot.lane.b32.xlu0 %v78, 9
    %v80 = vpop.permute.xlu0 %79
    %vm81 = vcmask 97352
    %82 = vst.msk [vmem:[#allocation0] sm:$0x1] %vm81, %v80
    %s83 = scalar_lea.vmem %s0, 2
    %v84 = vld [vmem:[%s83] sm:$0x1]
    %85 = vrot.lane.b32.xlu0 %v84, 6
    %v86 = vpop.permute.xlu0 %85
    %vm87 = vcmask 72752
    %88 = vst.msk [vmem:[#allocation0] sm:$0x1] %vm87, %v86
    %s89 = scalar_lea.vmem %s0, 1
    %v90 = vld [vmem:[%s89] sm:$0x1]
    %91 = vrot.lane.b32.xlu0 %v90, 3
    %v92 = vpop.permute.xlu0 %91
    %vm93 = vcmask 48152
    %94 = vst.msk [vmem:[#allocation0] sm:$0x1] %vm93, %v92
    %s96 = ssub.s32 2, 1
    %v97 = vld [vmem:[#allocation0] sm:%s96]
    %s99 = ssub.s32 2, 1
    %100 = vst [vmem:[%s1] sm:%s99] %v97

// kernel: _lambda_.1
$region0: #{_lambda_.1}
  #allocation0 [shape = 'u32[]', space=smem, size = 0x4, offset = 0x4, fixed_abs, tag = 'smem constant byte address 0x4 - core index']
  #allocation1 [shape = 'u32[72,128]{1,0:T(1,128)}', space=vmem, size = 0x9000, scoped, tag = 'internal scratch']
  #allocation2 [shape = 'f32[20,60]{1,0:T(8,128)}', space=vmem, size = 0x3000, scoped, tag = 'scratch operand']
  #allocation3 [shape = 'f32[20,320]{1,0:T(8,128)}', space=vmem, size = 0x9000, scoped, tag = 'scratch operand']
  #allocation4 [shape = 'f32[18,576]{1,0:T(8,128)}', space=vmem, size = 0xf000, scoped, tag = 'scratch operand']
  #allocation5 [shape = 'f32[18,144]{1,0:T(8,128)}', space=vmem, size = 0x6000, scoped, tag = 'scratch operand']
  %s0 = inlined_call_operand.vmem [shape: f32[2,16,48], index: 0, kind: input, shape index: {}]
  %s1 = inlined_call_operand.hbm [shape: f32[5,60,256], index: 1, kind: input, shape index: {}]
  %s2 = inlined_call_operand.vmem [shape: f32[1,256], index: 2, kind: input, shape index: {}]
  %s3 = inlined_call_operand.hbm [shape: f32[5,320,512], index: 3, kind: input, shape index: {}]
  %s4 = inlined_call_operand.vmem [shape: f32[1,512], index: 4, kind: input, shape index: {}]
  %s5 = inlined_call_operand.hbm [shape: f32[3,576,128], index: 5, kind: input, shape index: {}]
  %s6 = inlined_call_operand.vmem [shape: f32[1,128], index: 6, kind: input, shape index: {}]
  %s7 = inlined_call_operand.hbm [shape: f32[3,144,48], index: 7, kind: input, shape index: {}]
  %s8 = inlined_call_operand.vmem [shape: f32[1,48], index: 8, kind: input, shape index: {}]
  %s9 = inlined_call_operand.vmem [shape: f32[2,16,48], index: 9, kind: output, shape index: {}]
  %s10 = sld [smem:[#allocation0]]
  $region85: #{_lambda_.1} parent=0
    _
  %s12 = ssub.s32 1, %s10
  %s13 = scalar_select 0, %s12, %s10
  $region1: #{_lambda_.1} parent=0
    #allocation6 [shape = 'u8[327680]{0}', space=vmem, size = 0x50000, scoped, tag = 'input window, operand 1, single buffered']
    #allocation7 [shape = 's32[2]{0}', space=sflag, size = 0x8, scoped, tag = 'scoped memory for _lambda_.1']
    #allocation8 [shape = 'u8[3276800]{0}', space=vmem, size = 0x320000, scoped, tag = 'input window, operand 3, single buffered']
    #allocation9 [shape = 's32[1]{0}', space=sflag, size = 0x4, scoped, tag = 'scoped memory for _lambda_.1']
    #allocation10 [shape = 'u8[884736]{0}', space=vmem, size = 0xd8000, scoped, tag = 'input window, operand 5, single buffered']
    #allocation11 [shape = 'u8[221184]{0}', space=vmem, size = 0x36000, scoped, tag = 'input window, operand 7, single buffered']
    #allocation12 [shape = 's32[1]{0}', space=sflag, size = 0x4, scoped, tag = 'scoped memory for _lambda_.1']
    %14 = vsyncpa [#allocation7], 0
    %15 = vsyncpa [#allocation9], 0
    %16 = vsyncpa [#allocation12], 0
    loop: start=0, step=1, limit=4
    $region2: #{_lambda_.1} parent=1 // loop_pre_header
      _
    $region3: #{_lambda_.1} parent=1 // loop_header
      %s18 = sphi 0, %s22
      %p19 = scmp.ge.s32.totalorder %s18, 4
      %s28 = sphi 0, %s30
      %s31 = sphi 0, %s28
      %s32 = sphi 0, %s31
      %s48 = sphi 0, %s32
      %s52 = sphi 0, %s52
      %s54 = sphi 0, %s52
      %s55 = sphi 0, %s54
      %s69 = sphi 0, %s55
      %s73 = sphi 0, %s73
      %s75 = sphi 0, %s73
      %s76 = sphi 0, %s75
      %s90 = sphi 0, %s76
      %s94 = sphi 0, %s94
      %s96 = sphi 0, %s94
      %s97 = sphi 0, %s96
      %s111 = sphi 0, %s97
      %s115 = sphi 0, %s115
      %s117 = sphi 0, %s115
      %s118 = sphi 0, %s117
      %s132 = sphi 0, %s118
      %s136 = sphi 0, %s136
      %s138 = sphi 0, %s136
      %s139 = sphi 0, %s138
      %s153 = sphi 0, %s139
      %s157 = sphi 0, %s157
      %s159 = sphi 0, %s157
      %s160 = sphi 0, %s159
      %s174 = sphi 0, %s160
      %s178 = sphi 0, %s178
      %s180 = sphi 0, %s178
      %s181 = sphi 0, %s180
      %s195 = sphi 0, %s181
      %s199 = sphi 0, %s199
      %s201 = sphi 0, %s199
      %s202 = sphi 0, %s201
      %s216 = sphi 0, %s202
      %s222 = sphi 0, %s224
      %s225 = sphi 0, %s222
      %s226 = sphi 0, %s225
      %s242 = sphi 0, %s226
    $region4: #{_lambda_.1} parent=1 // loop_header_branch
      %21 = sbr.rel (%p19) target = $region8
    $region5: #{_lambda_.1} parent=1 // loop_body
      %s23 = ssub.s32 %s18, 1
      %s24 = ssub.s32 %s18, 2
      %s25 = sadd.s32 %s18, 1
      %s26 = ssub.s32 %s18, %s25
      %p27 = scmp.eq.s32.totalorder %s26, 0
      %s29 = sadd.s32 %s28, 1
      %s30 = scalar_select %p27, %s28, %s29
      %p33 = pneg %p27
      %p34 = scmp.eq.s32.totalorder %s18, 1
      %p35 = por %p33, %p34
      %p36 = scmp.ne.s32.totalorder %s28, %s31
      %p37 = scmp.eq.s32.totalorder %s18, 0
      %p38 = por %p36, %p37
      %p39 = scmp.ne.s32.totalorder %s28, %s31
      %p40 = scmp.eq.s32.totalorder %s23, 1
      %p41 = por %p39, %p40
      %p42 = scmp.ne.s32.totalorder %s31, %s32
      %p43 = scmp.eq.s32.totalorder %s23, 0
      %p44 = por %p42, %p43
      %p45 = scmp.ne.s32.totalorder %s31, %s32
      %p46 = scmp.eq.s32.totalorder %s24, 1
      %p47 = por %p45, %p46
      %p49 = scmp.ne.s32.totalorder %s32, %s48
      %p50 = scmp.eq.s32.totalorder %s24, 0
      %p51 = por %p49, %p50
      %s53 = sadd.s32 %s52, 1
      %p56 = scmp.eq.s32.totalorder %s18, 1
      %p57 = scmp.ne.s32.totalorder %s52, %s54
      %p58 = scmp.eq.s32.totalorder %s18, 0
      %p59 = por %p57, %p58
      %p60 = scmp.ne.s32.totalorder %s52, %s54
      %p61 = scmp.eq.s32.totalorder %s23, 1
      %p62 = por %p60, %p61
      %p63 = scmp.ne.s32.totalorder %s54, %s55
      %p64 = scmp.eq.s32.totalorder %s23, 0
      %p65 = por %p63, %p64
      %p66 = scmp.ne.s32.totalorder %s54, %s55
      %p67 = scmp.eq.s32.totalorder %s24, 1
      %p68 = por %p66, %p67
      %p70 = scmp.ne.s32.totalorder %s55, %s69
      %p71 = scmp.eq.s32.totalorder %s24, 0
      %p72 = por %p70, %p71
      %s74 = sadd.s32 %s73, 1
      %p77 = scmp.eq.s32.totalorder %s18, 1
      %p78 = scmp.ne.s32.totalorder %s73, %s75
      %p79 = scmp.eq.s32.totalorder %s18, 0
      %p80 = por %p78, %p79
      %p81 = scmp.ne.s32.totalorder %s73, %s75
      %p82 = scmp.eq.s32.totalorder %s23, 1
      %p83 = por %p81, %p82
      %p84 = scmp.ne.s32.totalorder %s75, %s76
      %p85 = scmp.eq.s32.totalorder %s23, 0
      %p86 = por %p84, %p85
      %p87 = scmp.ne.s32.totalorder %s75, %s76
      %p88 = scmp.eq.s32.totalorder %s24, 1
      %p89 = por %p87, %p88
      %p91 = scmp.ne.s32.totalorder %s76, %s90
      %p92 = scmp.eq.s32.totalorder %s24, 0
      %p93 = por %p91, %p92
      %s95 = sadd.s32 %s94, 1
      %p98 = scmp.eq.s32.totalorder %s18, 1
      %p99 = scmp.ne.s32.totalorder %s94, %s96
      %p100 = scmp.eq.s32.totalorder %s18, 0
      %p101 = por %p99, %p100
      %p102 = scmp.ne.s32.totalorder %s94, %s96
      %p103 = scmp.eq.s32.totalorder %s23, 1
      %p104 = por %p102, %p103
      %p105 = scmp.ne.s32.totalorder %s96, %s97
      %p106 = scmp.eq.s32.totalorder %s23, 0
      %p107 = por %p105, %p106
      %p108 = scmp.ne.s32.totalorder %s96, %s97
      %p109 = scmp.eq.s32.totalorder %s24, 1
      %p110 = por %p108, %p109
      %p112 = scmp.ne.s32.totalorder %s97, %s111
      %p113 = scmp.eq.s32.totalorder %s24, 0
      %p114 = por %p112, %p113
      %s116 = sadd.s32 %s115, 1
      %p119 = scmp.eq.s32.totalorder %s18, 1
      %p120 = scmp.ne.s32.totalorder %s115, %s117
      %p121 = scmp.eq.s32.totalorder %s18, 0
      %p122 = por %p120, %p121
      %p123 = scmp.ne.s32.totalorder %s115, %s117
      %p124 = scmp.eq.s32.totalorder %s23, 1
      %p125 = por %p123, %p124
      %p126 = scmp.ne.s32.totalorder %s117, %s118
      %p127 = scmp.eq.s32.totalorder %s23, 0
      %p128 = por %p126, %p127
      %p129 = scmp.ne.s32.totalorder %s117, %s118
      %p130 = scmp.eq.s32.totalorder %s24, 1
      %p131 = por %p129, %p130
      %p133 = scmp.ne.s32.totalorder %s118, %s132
      %p134 = scmp.eq.s32.totalorder %s24, 0
      %p135 = por %p133, %p134
      %s137 = sadd.s32 %s136, 1
      %p140 = scmp.eq.s32.totalorder %s18, 1
      %p141 = scmp.ne.s32.totalorder %s136, %s138
      %p142 = scmp.eq.s32.totalorder %s18, 0
      %p143 = por %p141, %p142
      %p144 = scmp.ne.s32.totalorder %s136, %s138
      %p145 = scmp.eq.s32.totalorder %s23, 1
      %p146 = por %p144, %p145
      %p147 = scmp.ne.s32.totalorder %s138, %s139
      %p148 = scmp.eq.s32.totalorder %s23, 0
      %p149 = por %p147, %p148
      %p150 = scmp.ne.s32.totalorder %s138, %s139
      %p151 = scmp.eq.s32.totalorder %s24, 1
      %p152 = por %p150, %p151
      %p154 = scmp.ne.s32.totalorder %s139, %s153
      %p155 = scmp.eq.s32.totalorder %s24, 0
      %p156 = por %p154, %p155
      %s158 = sadd.s32 %s157, 1
      %p161 = scmp.eq.s32.totalorder %s18, 1
      %p162 = scmp.ne.s32.totalorder %s157, %s159
      %p163 = scmp.eq.s32.totalorder %s18, 0
      %p164 = por %p162, %p163
      %p165 = scmp.ne.s32.totalorder %s157, %s159
      %p166 = scmp.eq.s32.totalorder %s23, 1
      %p167 = por %p165, %p166
      %p168 = scmp.ne.s32.totalorder %s159, %s160
      %p169 = scmp.eq.s32.totalorder %s23, 0
      %p170 = por %p168, %p169
      %p171 = scmp.ne.s32.totalorder %s159, %s160
      %p172 = scmp.eq.s32.totalorder %s24, 1
      %p173 = por %p171, %p172
      %p175 = scmp.ne.s32.totalorder %s160, %s174
      %p176 = scmp.eq.s32.totalorder %s24, 0
      %p177 = por %p175, %p176
      %s179 = sadd.s32 %s178, 1
      %p182 = scmp.eq.s32.totalorder %s18, 1
      %p183 = scmp.ne.s32.totalorder %s178, %s180
      %p184 = scmp.eq.s32.totalorder %s18, 0
      %p185 = por %p183, %p184
      %p186 = scmp.ne.s32.totalorder %s178, %s180
      %p187 = scmp.eq.s32.totalorder %s23, 1
      %p188 = por %p186, %p187
      %p189 = scmp.ne.s32.totalorder %s180, %s181
      %p190 = scmp.eq.s32.totalorder %s23, 0
      %p191 = por %p189, %p190
      %p192 = scmp.ne.s32.totalorder %s180, %s181
      %p193 = scmp.eq.s32.totalorder %s24, 1
      %p194 = por %p192, %p193
      %p196 = scmp.ne.s32.totalorder %s181, %s195
      %p197 = scmp.eq.s32.totalorder %s24, 0
      %p198 = por %p196, %p197
      %s200 = sadd.s32 %s199, 1
      %p203 = scmp.eq.s32.totalorder %s18, 1
      %p204 = scmp.ne.s32.totalorder %s199, %s201
      %p205 = scmp.eq.s32.totalorder %s18, 0
      %p206 = por %p204, %p205
      %p207 = scmp.ne.s32.totalorder %s199, %s201
      %p208 = scmp.eq.s32.totalorder %s23, 1
      %p209 = por %p207, %p208
      %p210 = scmp.ne.s32.totalorder %s201, %s202
      %p211 = scmp.eq.s32.totalorder %s23, 0
      %p212 = por %p210, %p211
      %p213 = scmp.ne.s32.totalorder %s201, %s202
      %p214 = scmp.eq.s32.totalorder %s24, 1
      %p215 = por %p213, %p214
      %p217 = scmp.ne.s32.totalorder %s202, %s216
      %p218 = scmp.eq.s32.totalorder %s24, 0
      %p219 = por %p217, %p218
      %s220 = ssub.s32 %s18, %s25
      %p221 = scmp.eq.s32.totalorder %s220, 0
      %s223 = sadd.s32 %s222, 1
      %s224 = scalar_select %p221, %s222, %s223
      %p227 = pneg %p221
      %p228 = scmp.eq.s32.totalorder %s18, 1
      %p229 = por %p227, %p228
      %p230 = scmp.ne.s32.totalorder %s222, %s225
      %p231 = scmp.eq.s32.totalorder %s18, 0
      %p232 = por %p230, %p231
      %p233 = scmp.ne.s32.totalorder %s222, %s225
      %p234 = scmp.eq.s32.totalorder %s23, 1
      %p235 = por %p233, %p234
      %p236 = scmp.ne.s32.totalorder %s225, %s226
      %p237 = scmp.eq.s32.totalorder %s23, 0
      %p238 = por %p236, %p237
      %p239 = scmp.ne.s32.totalorder %s225, %s226
      %p240 = scmp.eq.s32.totalorder %s24, 1
      %p241 = por %p239, %p240
      %p243 = scmp.ne.s32.totalorder %s226, %s242
      %p244 = scmp.eq.s32.totalorder %s24, 0
      %p245 = por %p243, %p244
      %p246 = scmp.le.s32.totalorder 1, %s18
      %p247 = scmp.lt.s32.totalorder %s18, 3
      %p248 = pnand %p246, %p247
      %p249 = pneg %p248
      // Predicated region
      $region9: #{_lambda_.1} parent=5 // pred_check
        _
      $region10: #{_lambda_.1} parent=5 // pred_check_branch
        %251 = sbr.rel (%p248) target = $region12
      $region11: #{_lambda_.1} parent=5 // pred_region
        %s252 = ssub.s32 %s18, 1
        // Predicated region
        $region13: #{_lambda_.1} parent=11 // pred_check
          %p253 = pneg %p65
        $region14: #{_lambda_.1} parent=11 // pred_check_branch
          %255 = sbr.rel (%p253) target = $region16
        $region15: #{_lambda_.1} parent=11 // pred_region
          %257 = vsyncadd [#allocation7], 0
          %s258 = sshll.u32 %s1, 4
          %s259 = int_to_ptr.hbm [resolvable:$true] %s258
          %s260 = sshll.u32 [#allocation6], 4
          %s261 = int_to_ptr.vmem [resolvable:$true] %s260
          %266 = dma.hbm_to_vmem [thread:$0]  %s259, 10240, %s261, [#allocation7], 256, 256, 16
        $region16: #{_lambda_.1} parent=11 // pred_fallthru
          _
        // Predicated region
        $region17: #{_lambda_.1} parent=11 // pred_check
          %p267 = pneg %p86
        $region18: #{_lambda_.1} parent=11 // pred_check_branch
          %269 = sbr.rel (%p267) target = $region20
        $region19: #{_lambda_.1} parent=11 // pred_region
          _
        $region20: #{_lambda_.1} parent=11 // pred_fallthru
          _
        // Predicated region
        $region21: #{_lambda_.1} parent=11 // pred_check
          %p270 = pneg %p107
        $region22: #{_lambda_.1} parent=11 // pred_check_branch
          %272 = sbr.rel (%p270) target = $region24
        $region23: #{_lambda_.1} parent=11 // pred_region
          %274 = vsyncadd [#allocation9], 0
          %s275 = sshll.u32 %s3, 4
          %s276 = int_to_ptr.hbm [resolvable:$true] %s275
          %s277 = sshll.u32 [#allocation8], 4
          %s278 = int_to_ptr.vmem [resolvable:$true] %s277
          %283 = dma.hbm_to_vmem [thread:$0]  %s276, 102400, %s278, [#allocation9], 512, 512, 32
        $region24: #{_lambda_.1} parent=11 // pred_fallthru
          _
        // Predicated region
        $region25: #{_lambda_.1} parent=11 // pred_check
          %p284 = pneg %p128
        $region26: #{_lambda_.1} parent=11 // pred_check_branch
          %286 = sbr.rel (%p284) target = $region28
        $region27: #{_lambda_.1} parent=11 // pred_region
          _
        $region28: #{_lambda_.1} parent=11 // pred_fallthru
          _
        // Predicated region
        $region29: #{_lambda_.1} parent=11 // pred_check
          %p287 = pneg %p149
        $region30: #{_lambda_.1} parent=11 // pred_check_branch
          %289 = sbr.rel (%p287) target = $region32
        $region31: #{_lambda_.1} parent=11 // pred_region
          %291 = vsyncadd [#allocation9], 0
          %s292 = sshll.u32 %s5, 4
          %s293 = int_to_ptr.hbm [resolvable:$true] %s292
          %s294 = sshll.u32 [#allocation10], 4
          %s295 = int_to_ptr.vmem [resolvable:$true] %s294
          %300 = dma.hbm_to_vmem [thread:$0]  %s293, 27648, %s295, [#allocation9], 128, 128, 8
        $region32: #{_lambda_.1} parent=11 // pred_fallthru
          _
        // Predicated region
        $region33: #{_lambda_.1} parent=11 // pred_check
          %p301 = pneg %p170
        $region34: #{_lambda_.1} parent=11 // pred_check_branch
          %303 = sbr.rel (%p301) target = $region36
        $region35: #{_lambda_.1} parent=11 // pred_region
          _
        $region36: #{_lambda_.1} parent=11 // pred_fallthru
          _
        // Predicated region
        $region37: #{_lambda_.1} parent=11 // pred_check
          %p304 = pneg %p191
        $region38: #{_lambda_.1} parent=11 // pred_check_branch
          %306 = sbr.rel (%p304) target = $region40
        $region39: #{_lambda_.1} parent=11 // pred_region
          %308 = vsyncadd [#allocation12], 0
          %s309 = sshll.u32 %s7, 4
          %s310 = int_to_ptr.hbm [resolvable:$true] %s309
          %s311 = sshll.u32 [#allocation11], 4
          %s312 = int_to_ptr.vmem [resolvable:$true] %s311
          %317 = dma.hbm_to_vmem [thread:$0]  %s310, 6912, %s312, [#allocation12], 128, 128, 8
        $region40: #{_lambda_.1} parent=11 // pred_fallthru
          _
        // Predicated region
        $region41: #{_lambda_.1} parent=11 // pred_check
          %p318 = pneg %p212
        $region42: #{_lambda_.1} parent=11 // pred_check_branch
          %320 = sbr.rel (%p318) target = $region44
        $region43: #{_lambda_.1} parent=11 // pred_region
          _
        $region44: #{_lambda_.1} parent=11 // pred_fallthru
          _
      $region12: #{_lambda_.1} parent=5 // pred_fallthru
        _
      %p321 = scmp.lt.s32.totalorder %s18, 2
      // Predicated region
      $region45: #{_lambda_.1} parent=5 // pred_check
        %p322 = pneg %p321
      $region46: #{_lambda_.1} parent=5 // pred_check_branch
        %324 = sbr.rel (%p322) target = $region48
      $region47: #{_lambda_.1} parent=5 // pred_region
        // Predicated region
        $region49: #{_lambda_.1} parent=47 // pred_check
          %p325 = pneg %p38
        $region50: #{_lambda_.1} parent=47 // pred_check_branch
          %327 = sbr.rel (%p325) target = $region52
        $region51: #{_lambda_.1} parent=47 // pred_region
          %p328 = scmp.lt.s32.totalorder %s18, 1
          %s329 = scalar_select %p328, %s18, 1
          %s330 = smul.addr %s329, 2
          %s331 = smul.addr %s330, 8
          %s332 = scalar_lea.vmem %s0, %s331
        $region52: #{_lambda_.1} parent=47 // pred_fallthru
          _
      $region48: #{_lambda_.1} parent=5 // pred_fallthru
        _
      %p333 = scmp.le.s32.totalorder 1, %s18
      %p334 = scmp.lt.s32.totalorder %s18, 3
      %p335 = pnand %p333, %p334
      %p336 = pneg %p335
      // Predicated region
      $region53: #{_lambda_.1} parent=5 // pred_check
        _
      $region54: #{_lambda_.1} parent=5 // pred_check_branch
        %338 = sbr.rel (%p335) target = $region56
      $region55: #{_lambda_.1} parent=5 // pred_region
        %s339 = ssub.s32 %s18, 1
        // Predicated region
        $region57: #{_lambda_.1} parent=55 // pred_check
          %p340 = pneg %p65
        $region58: #{_lambda_.1} parent=55 // pred_check_branch
          %342 = sbr.rel (%p340) target = $region60
        $region59: #{_lambda_.1} parent=55 // pred_region
          %344 = dma.done [#allocation7], 10240
        $region60: #{_lambda_.1} parent=55 // pred_fallthru
          _
        // Predicated region
        $region61: #{_lambda_.1} parent=55 // pred_check
          %p345 = pneg %p107
        $region62: #{_lambda_.1} parent=55 // pred_check_branch
          %347 = sbr.rel (%p345) target = $region64
        $region63: #{_lambda_.1} parent=55 // pred_region
          %349 = dma.done [#allocation9], 102400
        $region64: #{_lambda_.1} parent=55 // pred_fallthru
          _
        // Predicated region
        $region65: #{_lambda_.1} parent=55 // pred_check
          %p350 = pneg %p149
        $region66: #{_lambda_.1} parent=55 // pred_check_branch
          %352 = sbr.rel (%p350) target = $region68
        $region67: #{_lambda_.1} parent=55 // pred_region
          %354 = dma.done [#allocation9], 27648
        $region68: #{_lambda_.1} parent=55 // pred_fallthru
          _
        // Predicated region
        $region69: #{_lambda_.1} parent=55 // pred_check
          %p355 = pneg %p191
        $region70: #{_lambda_.1} parent=55 // pred_check_branch
          %357 = sbr.rel (%p355) target = $region72
        $region71: #{_lambda_.1} parent=55 // pred_region
          %359 = dma.done [#allocation12], 6912
        $region72: #{_lambda_.1} parent=55 // pred_fallthru
          _
        %p360 = scmp.lt.s32.totalorder %s23, 1
        %s361 = scalar_select %p360, %s23, 1
        %s362 = smul.addr %s361, 2
        %s363 = smul.addr %s362, 8
        %s364 = scalar_lea.vmem %s0, %s363
        %p365 = pneg %p44
        %p366 = pneg %p41
        %p367 = pneg %p65
        %p368 = pneg %p62
        %p369 = pneg %p86
        %p370 = pneg %p83
        %p371 = pneg %p107
        %p372 = pneg %p104
        %p373 = pneg %p128
        %p374 = pneg %p125
        %p375 = pneg %p149
        %p376 = pneg %p146
        %p377 = pneg %p170
        %p378 = pneg %p167
        %p379 = pneg %p191
        %p380 = pneg %p188
        %p381 = pneg %p212
        %p382 = pneg %p209
        %p383 = pneg %p238
        %p384 = pneg %p235
        %p385 = scmp.lt.s32.totalorder %s23, 1
        %s386 = scalar_select %p385, %s23, 1
        %s387 = smul.addr %s386, 2
        %s388 = smul.addr %s387, 8
        %s389 = scalar_lea.vmem %s9, %s388
        %p390 = scmp.lt.s32.totalorder %s23, 1
        %s391 = scalar_select %p390, %s23, 1
        %s392 = smul.addr %s391, 2
        %s393 = smul.addr %s392, 8
        %s394 = scalar_lea.vmem %s0, %s393
        %p395 = scmp.lt.s32.totalorder %s23, 1
        %s396 = scalar_select %p395, %s23, 1
        %s397 = smul.addr %s396, 2
        %s398 = smul.addr %s397, 8
        %s399 = scalar_lea.vmem %s9, %s398
        %vm400 = vcmask 490496
        %401 = vst.msk [vmem:[#allocation2] sm:$0xff] %vm400, 0.0
        %402 = vst.msk [vmem:[#allocation2 + $0x8] sm:$0xff] %vm400, 0.0
        %vm403 = vcmask 486400
        %404 = vst.msk [vmem:[#allocation2 + $0x10] sm:$0xf] %vm403, 0.0
        %405 = vst [vmem:[#allocation3] sm:$0xff] 0.0
        %406 = vst [vmem:[#allocation3 + $0x8] sm:$0xff] 0.0
        %vm407 = vcmask 523264
        %408 = vst.msk [vmem:[#allocation3 + $0x10] sm:$0xff] %vm407, 0.0
        %409 = vst [vmem:[#allocation3 + $0x18] sm:$0xff] 0.0
        %410 = vst [vmem:[#allocation3 + $0x20] sm:$0xff] 0.0
        %411 = vst.msk [vmem:[#allocation3 + $0x28] sm:$0xff] %vm407, 0.0
        %412 = vst [vmem:[#allocation3 + $0x30] sm:$0xf] 0.0
        %413 = vst [vmem:[#allocation3 + $0x38] sm:$0xf] 0.0
        %vm414 = vcmask 519168
        %415 = vst.msk [vmem:[#allocation3 + $0x40] sm:$0xf] %vm414, 0.0
        %416 = vst [vmem:[#allocation4] sm:$0xff] 0.0
        %417 = vst [vmem:[#allocation4 + $0x8] sm:$0xff] 0.0
        %418 = vst [vmem:[#allocation4 + $0x10] sm:$0xff] 0.0
        %419 = vst [vmem:[#allocation4 + $0x18] sm:$0xff] 0.0
        %420 = vst.msk [vmem:[#allocation4 + $0x20] sm:$0xff] %vm407, 0.0
        %421 = vst [vmem:[#allocation4 + $0x28] sm:$0xff] 0.0
        %422 = vst [vmem:[#allocation4 + $0x30] sm:$0xff] 0.0
        %423 = vst [vmem:[#allocation4 + $0x38] sm:$0xff] 0.0
        %424 = vst [vmem:[#allocation4 + $0x40] sm:$0xff] 0.0
        %425 = vst.msk [vmem:[#allocation4 + $0x48] sm:$0xff] %vm407, 0.0
        %426 = vst [vmem:[#allocation4 + $0x50] sm:$0x3] 0.0
        %427 = vst [vmem:[#allocation4 + $0x58] sm:$0x3] 0.0
        %428 = vst [vmem:[#allocation4 + $0x60] sm:$0x3] 0.0
        %429 = vst [vmem:[#allocation4 + $0x68] sm:$0x3] 0.0
        %vm430 = vcmask 517120
        %431 = vst.msk [vmem:[#allocation4 + $0x70] sm:$0x3] %vm430, 0.0
        %432 = vst [vmem:[#allocation5] sm:$0xff] 0.0
        %vm433 = vcmask 130048
        %434 = vst.msk [vmem:[#allocation5 + $0x8] sm:$0xff] %vm433, 0.0
        %435 = vst [vmem:[#allocation5 + $0x10] sm:$0xff] 0.0
        %436 = vst.msk [vmem:[#allocation5 + $0x18] sm:$0xff] %vm433, 0.0
        %437 = vst [vmem:[#allocation5 + $0x20] sm:$0x3] 0.0
        %vm438 = vcmask 123904
        %439 = vst.msk [vmem:[#allocation5 + $0x28] sm:$0x3] %vm438, 0.0
        %v440 = vld [vmem:[%s394] sm:$0xff]
        %v441 = vld [vmem:[%s394 + $0x8] sm:$0xff]
        %vm442 = vcmask 392192
        %443 = vst.msk [vmem:[#allocation2 + $0x2] sm:$0xff] %vm442, %v440
        %444 = vst.msk [vmem:[#allocation2 + $0xa] sm:$0xff] %vm442, %v441
        %v445 = vld [vmem:[#allocation2] sm:$0xff]
        %v446 = vld [vmem:[#allocation2 + $0x8] sm:$0xff]
        %v447 = vld [vmem:[#allocation6] sm:$0xff]
        %v448 = vld [vmem:[#allocation6 + $0x8] sm:$0xff]
        %v449 = vld [vmem:[#allocation6 + $0x10] sm:$0xff]
        %v450 = vld [vmem:[#allocation6 + $0x18] sm:$0xff]
        %v451 = vld [vmem:[#allocation6 + $0x20] sm:$0xff]
        %v452 = vld [vmem:[#allocation6 + $0x28] sm:$0xff]
        %v453 = vld [vmem:[#allocation6 + $0x30] sm:$0xff]
        %v454 = vld [vmem:[#allocation6 + $0x38] sm:$0xff]
        %v455 = vld [vmem:[#allocation6 + $0x40] sm:$0xff]
        %v456 = vld [vmem:[#allocation6 + $0x48] sm:$0xff]
        %v457 = vld [vmem:[#allocation6 + $0x50] sm:$0xff]
        %v458 = vld [vmem:[#allocation6 + $0x58] sm:$0xff]
        %v459 = vld [vmem:[#allocation6 + $0x60] sm:$0xff]
        %v460 = vld [vmem:[#allocation6 + $0x68] sm:$0xff]
        %v461 = vld [vmem:[#allocation6 + $0x70] sm:$0xf]
        %v462 = vld [vmem:[#allocation6 + $0x78] sm:$0xf]
        %v463 = vld [vmem:[#allocation2 + $0x1] sm:$0xff]
        %v464 = vld [vmem:[#allocation2 + $0x9] sm:$0xff]
        %s465 = scalar_lea.vmem [#allocation6], 128
        %v466 = vld [vmem:[%s465] sm:$0xff]
        %v467 = vld [vmem:[%s465 + $0x8] sm:$0xff]
        %v468 = vld [vmem:[%s465 + $0x10] sm:$0xff]
        %v469 = vld [vmem:[%s465 + $0x18] sm:$0xff]
        %v470 = vld [vmem:[%s465 + $0x20] sm:$0xff]
        %v471 = vld [vmem:[%s465 + $0x28] sm:$0xff]
        %v472 = vld [vmem:[%s465 + $0x30] sm:$0xff]
        %v473 = vld [vmem:[%s465 + $0x38] sm:$0xff]
        %v474 = vld [vmem:[%s465 + $0x40] sm:$0xff]
        %v475 = vld [vmem:[%s465 + $0x48] sm:$0xff]
        %v476 = vld [vmem:[%s465 + $0x50] sm:$0xff]
        %v477 = vld [vmem:[%s465 + $0x58] sm:$0xff]
        %v478 = vld [vmem:[%s465 + $0x60] sm:$0xff]
        %v479 = vld [vmem:[%s465 + $0x68] sm:$0xff]
        %v480 = vld [vmem:[%s465 + $0x70] sm:$0xf]
        %v481 = vld [vmem:[%s465 + $0x78] sm:$0xf]
        %v483 = vsel %vm400, %v463, 0
        %v486 = vsel %vm400, %v464, 0
        %vm488 = vcmask 1043456
        %v490 = vsel %vm488, %v480, 0
        %v493 = vsel %vm488, %v481, 0
        %495 = vmatpush.msra.mxu0 0.0
        %496 = vmatpush.msra.mxu0 0.0
        %497 = vmatpush.msra.mxu0 0.0
        %498 = vmatpush.msra.mxu0 0.0
        %499 = vmatpush.msra.mxu0 0.0
        %500 = vmatpush.msra.mxu0 0.0
        %501 = vmatpush.msra.mxu0 0.0
        %502 = vmatpush.msra.mxu0 0.0
        %503 = vmatpush.msra.mxu0 %v490
        %504 = vmatpush.msra.mxu0 %v478
        %505 = vmatpush.msra.mxu0 %v476
        %506 = vmatpush.msra.mxu0 %v474
        %507 = vmatpush.msra.mxu0 %v472
        %508 = vmatpush.msra.mxu0 %v470
        %509 = vmatpush.msra.mxu0 %v468
        %510 = vmatpush.msra.mxu0 %v466
        %511 = vmatmul.f32.gmra.mxu0 %v483
        %v512 = vpop.f32.mrf.mxu0
        %v513 = vadd.f32 0.0, %v512
        %514 = vmatmul.f32.gmra.mxu0 %v486
        %v515 = vpop.f32.mrf.mxu0
        %v516 = vadd.f32 0.0, %v515
        %517 = vdwg.mxu0
        %518 = vmatpush.msra.mxu0 0.0
        %519 = vmatpush.msra.mxu0 0.0
        %520 = vmatpush.msra.mxu0 0.0
        %521 = vmatpush.msra.mxu0 0.0
        %522 = vmatpush.msra.mxu0 0.0
        %523 = vmatpush.msra.mxu0 0.0
        %524 = vmatpush.msra.mxu0 0.0
        %525 = vmatpush.msra.mxu0 0.0
        %526 = vmatpush.msra.mxu0 %v493
        %527 = vmatpush.msra.mxu0 %v479
        %528 = vmatpush.msra.mxu0 %v477
        %529 = vmatpush.msra.mxu0 %v475
        %530 = vmatpush.msra.mxu0 %v473
        %531 = vmatpush.msra.mxu0 %v471
        %532 = vmatpush.msra.mxu0 %v469
        %533 = vmatpush.msra.mxu0 %v467
        %534 = vmatmul.f32.gmra.mxu0 %v483
        %v535 = vpop.f32.mrf.mxu0
        %v536 = vadd.f32 0.0, %v535
        %537 = vmatmul.f32.gmra.mxu0 %v486
        %v538 = vpop.f32.mrf.mxu0
        %v539 = vadd.f32 0.0, %v538
        %540 = vdwg.mxu0
        %v542 = vsel %vm400, %v445, 0
        %v545 = vsel %vm400, %v446, 0
        %v548 = vsel %vm488, %v461, 0
        %v551 = vsel %vm488, %v462, 0
        %553 = vmatpush.msra.mxu0 0.0
        %554 = vmatpush.msra.mxu0 0.0
        %555 = vmatpush.msra.mxu0 0.0
        %556 = vmatpush.msra.mxu0 0.0
        %557 = vmatpush.msra.mxu0 0.0
        %558 = vmatpush.msra.mxu0 0.0
        %559 = vmatpush.msra.mxu0 0.0
        %560 = vmatpush.msra.mxu0 0.0
        %561 = vmatpush.msra.mxu0 %v548
        %562 = vmatpush.msra.mxu0 %v459
        %563 = vmatpush.msra.mxu0 %v457
        %564 = vmatpush.msra.mxu0 %v455
        %565 = vmatpush.msra.mxu0 %v453
        %566 = vmatpush.msra.mxu0 %v451
        %567 = vmatpush.msra.mxu0 %v449
        %568 = vmatpush.msra.mxu0 %v447
        %569 = vmatmul.f32.gmra.mxu0 %v542
        %v570 = vpop.f32.mrf.mxu0
        %v571 = vadd.f32 %v513, %v570
        %572 = vmatmul.f32.gmra.mxu0 %v545
        %v573 = vpop.f32.mrf.mxu0
        %v574 = vadd.f32 %v516, %v573
        %575 = vdwg.mxu0
        %576 = vmatpush.msra.mxu0 0.0
        %577 = vmatpush.msra.mxu0 0.0
        %578 = vmatpush.msra.mxu0 0.0
        %579 = vmatpush.msra.mxu0 0.0
        %580 = vmatpush.msra.mxu0 0.0
        %581 = vmatpush.msra.mxu0 0.0
        %582 = vmatpush.msra.mxu0 0.0
        %583 = vmatpush.msra.mxu0 0.0
        %584 = vmatpush.msra.mxu0 %v551
        %585 = vmatpush.msra.mxu0 %v460
        %586 = vmatpush.msra.mxu0 %v458
        %587 = vmatpush.msra.mxu0 %v456
        %588 = vmatpush.msra.mxu0 %v454
        %589 = vmatpush.msra.mxu0 %v452
        %590 = vmatpush.msra.mxu0 %v450
        %591 = vmatpush.msra.mxu0 %v448
        %592 = vmatmul.f32.gmra.mxu0 %v542
        %v593 = vpop.f32.mrf.mxu0
        %v594 = vadd.f32 %v536, %v593
        %595 = vmatmul.f32.gmra.mxu0 %v545
        %v596 = vpop.f32.mrf.mxu0
        %v597 = vadd.f32 %v539, %v596
        %598 = vdwg.mxu0
        %v599 = vld [vmem:[#allocation2 + $0x2] sm:$0xff]
        %v600 = vld [vmem:[#allocation2 + $0xa] sm:$0xff]
        %s601 = scalar_lea.vmem [#allocation6], 256
        %v602 = vld [vmem:[%s601] sm:$0xff]
        %v603 = vld [vmem:[%s601 + $0x8] sm:$0xff]
        %v604 = vld [vmem:[%s601 + $0x10] sm:$0xff]
        %v605 = vld [vmem:[%s601 + $0x18] sm:$0xff]
        %v606 = vld [vmem:[%s601 + $0x20] sm:$0xff]
        %v607 = vld [vmem:[%s601 + $0x28] sm:$0xff]
        %v608 = vld [vmem:[%s601 + $0x30] sm:$0xff]
        %v609 = vld [vmem:[%s601 + $0x38] sm:$0xff]
        %v610 = vld [vmem:[%s601 + $0x40] sm:$0xff]
        %v611 = vld [vmem:[%s601 + $0x48] sm:$0xff]
        %v612 = vld [vmem:[%s601 + $0x50] sm:$0xff]
        %v613 = vld [vmem:[%s601 + $0x58] sm:$0xff]
        %v614 = vld [vmem:[%s601 + $0x60] sm:$0xff]
        %v615 = vld [vmem:[%s601 + $0x68] sm:$0xff]
        %v616 = vld [vmem:[%s601 + $0x70] sm:$0xf]
        %v617 = vld [vmem:[%s601 + $0x78] sm:$0xf]
        %v619 = vsel %vm400, %v599, 0
        %v622 = vsel %vm400, %v600, 0
        %v625 = vsel %vm488, %v616, 0
        %v628 = vsel %vm488, %v617, 0
        %630 = vmatpush.msra.mxu0 0.0
        %631 = vmatpush.msra.mxu0 0.0
        %632 = vmatpush.msra.mxu0 0.0
        %633 = vmatpush.msra.mxu0 0.0
        %634 = vmatpush.msra.mxu0 0.0
        %635 = vmatpush.msra.mxu0 0.0
        %636 = vmatpush.msra.mxu0 0.0
        %637 = vmatpush.msra.mxu0 0.0
        %638 = vmatpush.msra.mxu0 %v625
        %639 = vmatpush.msra.mxu0 %v614
        %640 = vmatpush.msra.mxu0 %v612
        %641 = vmatpush.msra.mxu0 %v610
        %642 = vmatpush.msra.mxu0 %v608
        %643 = vmatpush.msra.mxu0 %v606
        %644 = vmatpush.msra.mxu0 %v604
        %645 = vmatpush.msra.mxu0 %v602
        %646 = vmatmul.f32.gmra.mxu0 %v619
        %v647 = vpop.f32.mrf.mxu0
        %v648 = vadd.f32 0.0, %v647
        %649 = vmatmul.f32.gmra.mxu0 %v622
        %v650 = vpop.f32.mrf.mxu0
        %v651 = vadd.f32 0.0, %v650
        %652 = vdwg.mxu0
        %653 = vmatpush.msra.mxu0 0.0
        %654 = vmatpush.msra.mxu0 0.0
        %655 = vmatpush.msra.mxu0 0.0
        %656 = vmatpush.msra.mxu0 0.0
        %657 = vmatpush.msra.mxu0 0.0
        %658 = vmatpush.msra.mxu0 0.0
        %659 = vmatpush.msra.mxu0 0.0
        %660 = vmatpush.msra.mxu0 0.0
        %661 = vmatpush.msra.mxu0 %v628
        %662 = vmatpush.msra.mxu0 %v615
        %663 = vmatpush.msra.mxu0 %v613
        %664 = vmatpush.msra.mxu0 %v611
        %665 = vmatpush.msra.mxu0 %v609
        %666 = vmatpush.msra.mxu0 %v607
        %667 = vmatpush.msra.mxu0 %v605
        %668 = vmatpush.msra.mxu0 %v603
        %669 = vmatmul.f32.gmra.mxu0 %v619
        %v670 = vpop.f32.mrf.mxu0
        %v671 = vadd.f32 0.0, %v670
        %672 = vmatmul.f32.gmra.mxu0 %v622
        %v673 = vpop.f32.mrf.mxu0
        %v674 = vadd.f32 0.0, %v673
        %675 = vdwg.mxu0
        %v676 = vadd.f32 %v571, %v648
        %v677 = vadd.f32 %v594, %v671
        %v678 = vadd.f32 %v574, %v651
        %v679 = vadd.f32 %v597, %v674
        %v680 = vld [vmem:[#allocation2 + $0x3] sm:$0xff]
        %v681 = vld [vmem:[#allocation2 + $0xb] sm:$0xff]
        %s682 = scalar_lea.vmem [#allocation6], 384
        %v683 = vld [vmem:[%s682] sm:$0xff]
        %v684 = vld [vmem:[%s682 + $0x8] sm:$0xff]
        %v685 = vld [vmem:[%s682 + $0x10] sm:$0xff]
        %v686 = vld [vmem:[%s682 + $0x18] sm:$0xff]
        %v687 = vld [vmem:[%s682 + $0x20] sm:$0xff]
        %v688 = vld [vmem:[%s682 + $0x28] sm:$0xff]
        %v689 = vld [vmem:[%s682 + $0x30] sm:$0xff]
        %v690 = vld [vmem:[%s682 + $0x38] sm:$0xff]
        %v691 = vld [vmem:[%s682 + $0x40] sm:$0xff]
        %v692 = vld [vmem:[%s682 + $0x48] sm:$0xff]
        %v693 = vld [vmem:[%s682 + $0x50] sm:$0xff]
        %v694 = vld [vmem:[%s682 + $0x58] sm:$0xff]
        %v695 = vld [vmem:[%s682 + $0x60] sm:$0xff]
        %v696 = vld [vmem:[%s682 + $0x68] sm:$0xff]
        %v697 = vld [vmem:[%s682 + $0x70] sm:$0xf]
        %v698 = vld [vmem:[%s682 + $0x78] sm:$0xf]
        %v700 = vsel %vm400, %v680, 0
        %v703 = vsel %vm400, %v681, 0
        %v706 = vsel %vm488, %v697, 0
        %v709 = vsel %vm488, %v698, 0
        %711 = vmatpush.msra.mxu0 0.0
        %712 = vmatpush.msra.mxu0 0.0
        %713 = vmatpush.msra.mxu0 0.0
        %714 = vmatpush.msra.mxu0 0.0
        %715 = vmatpush.msra.mxu0 0.0
        %716 = vmatpush.msra.mxu0 0.0
        %717 = vmatpush.msra.mxu0 0.0
        %718 = vmatpush.msra.mxu0 0.0
        %719 = vmatpush.msra.mxu0 %v706
        %720 = vmatpush.msra.mxu0 %v695
        %721 = vmatpush.msra.mxu0 %v693
        %722 = vmatpush.msra.mxu0 %v691
        %723 = vmatpush.msra.mxu0 %v689
        %724 = vmatpush.msra.mxu0 %v687
        %725 = vmatpush.msra.mxu0 %v685
        %726 = vmatpush.msra.mxu0 %v683
        %727 = vmatmul.f32.gmra.mxu0 %v700
        %v728 = vpop.f32.mrf.mxu0
        %v729 = vadd.f32 0.0, %v728
        %730 = vmatmul.f32.gmra.mxu0 %v703
        %v731 = vpop.f32.mrf.mxu0
        %v732 = vadd.f32 0.0, %v731
        %733 = vdwg.mxu0
        %734 = vmatpush.msra.mxu0 0.0
        %735 = vmatpush.msra.mxu0 0.0
        %736 = vmatpush.msra.mxu0 0.0
        %737 = vmatpush.msra.mxu0 0.0
        %738 = vmatpush.msra.mxu0 0.0
        %739 = vmatpush.msra.mxu0 0.0
        %740 = vmatpush.msra.mxu0 0.0
        %741 = vmatpush.msra.mxu0 0.0
        %742 = vmatpush.msra.mxu0 %v709
        %743 = vmatpush.msra.mxu0 %v696
        %744 = vmatpush.msra.mxu0 %v694
        %745 = vmatpush.msra.mxu0 %v692
        %746 = vmatpush.msra.mxu0 %v690
        %747 = vmatpush.msra.mxu0 %v688
        %748 = vmatpush.msra.mxu0 %v686
        %749 = vmatpush.msra.mxu0 %v684
        %750 = vmatmul.f32.gmra.mxu0 %v700
        %v751 = vpop.f32.mrf.mxu0
        %v752 = vadd.f32 0.0, %v751
        %753 = vmatmul.f32.gmra.mxu0 %v703
        %v754 = vpop.f32.mrf.mxu0
        %v755 = vadd.f32 0.0, %v754
        %756 = vdwg.mxu0
        %v757 = vadd.f32 %v676, %v729
        %v758 = vadd.f32 %v677, %v752
        %v759 = vadd.f32 %v678, %v732
        %v760 = vadd.f32 %v679, %v755
        %v761 = vld [vmem:[#allocation2 + $0x4] sm:$0xff]
        %v762 = vld [vmem:[#allocation2 + $0xc] sm:$0xff]
        %s763 = scalar_lea.vmem [#allocation6], 512
        %v764 = vld [vmem:[%s763] sm:$0xff]
        %v765 = vld [vmem:[%s763 + $0x8] sm:$0xff]
        %v766 = vld [vmem:[%s763 + $0x10] sm:$0xff]
        %v767 = vld [vmem:[%s763 + $0x18] sm:$0xff]
        %v768 = vld [vmem:[%s763 + $0x20] sm:$0xff]
        %v769 = vld [vmem:[%s763 + $0x28] sm:$0xff]
        %v770 = vld [vmem:[%s763 + $0x30] sm:$0xff]
        %v771 = vld [vmem:[%s763 + $0x38] sm:$0xff]
        %v772 = vld [vmem:[%s763 + $0x40] sm:$0xff]
        %v773 = vld [vmem:[%s763 + $0x48] sm:$0xff]
        %v774 = vld [vmem:[%s763 + $0x50] sm:$0xff]
        %v775 = vld [vmem:[%s763 + $0x58] sm:$0xff]
        %v776 = vld [vmem:[%s763 + $0x60] sm:$0xff]
        %v777 = vld [vmem:[%s763 + $0x68] sm:$0xff]
        %v778 = vld [vmem:[%s763 + $0x70] sm:$0xf]
        %v779 = vld [vmem:[%s763 + $0x78] sm:$0xf]
        %v781 = vsel %vm400, %v761, 0
        %v784 = vsel %vm400, %v762, 0
        %v787 = vsel %vm488, %v778, 0
        %v790 = vsel %vm488, %v779, 0
        %792 = vmatpush.msra.mxu0 0.0
        %793 = vmatpush.msra.mxu0 0.0
        %794 = vmatpush.msra.mxu0 0.0
        %795 = vmatpush.msra.mxu0 0.0
        %796 = vmatpush.msra.mxu0 0.0
        %797 = vmatpush.msra.mxu0 0.0
        %798 = vmatpush.msra.mxu0 0.0
        %799 = vmatpush.msra.mxu0 0.0
        %800 = vmatpush.msra.mxu0 %v787
        %801 = vmatpush.msra.mxu0 %v776
        %802 = vmatpush.msra.mxu0 %v774
        %803 = vmatpush.msra.mxu0 %v772
        %804 = vmatpush.msra.mxu0 %v770
        %805 = vmatpush.msra.mxu0 %v768
        %806 = vmatpush.msra.mxu0 %v766
        %807 = vmatpush.msra.mxu0 %v764
        %808 = vmatmul.f32.gmra.mxu0 %v781
        %v809 = vpop.f32.mrf.mxu0
        %v810 = vadd.f32 0.0, %v809
        %811 = vmatmul.f32.gmra.mxu0 %v784
        %v812 = vpop.f32.mrf.mxu0
        %v813 = vadd.f32 0.0, %v812
        %814 = vdwg.mxu0
        %815 = vmatpush.msra.mxu0 0.0
        %816 = vmatpush.msra.mxu0 0.0
        %817 = vmatpush.msra.mxu0 0.0
        %818 = vmatpush.msra.mxu0 0.0
        %819 = vmatpush.msra.mxu0 0.0
        %820 = vmatpush.msra.mxu0 0.0
        %821 = vmatpush.msra.mxu0 0.0
        %822 = vmatpush.msra.mxu0 0.0
        %823 = vmatpush.msra.mxu0 %v790
        %824 = vmatpush.msra.mxu0 %v777
        %825 = vmatpush.msra.mxu0 %v775
        %826 = vmatpush.msra.mxu0 %v773
        %827 = vmatpush.msra.mxu0 %v771
        %828 = vmatpush.msra.mxu0 %v769
        %829 = vmatpush.msra.mxu0 %v767
        %830 = vmatpush.msra.mxu0 %v765
        %831 = vmatmul.f32.gmra.mxu0 %v781
        %v832 = vpop.f32.mrf.mxu0
        %v833 = vadd.f32 0.0, %v832
        %834 = vmatmul.f32.gmra.mxu0 %v784
        %v835 = vpop.f32.mrf.mxu0
        %v836 = vadd.f32 0.0, %v835
        %837 = vdwg.mxu0
        %v838 = vadd.f32 %v757, %v810
        %v839 = vadd.f32 %v758, %v833
        %v840 = vadd.f32 %v759, %v813
        %v841 = vadd.f32 %v760, %v836
        %v842 = vld [vmem:[%s2] sm:$0x3]
        %v844 = vperm.slane %v842, 0
        %v845 = vperm.slane %v842, 1
        %v848 = vadd.f32 %v838, %v844
        %v849 = vadd.f32 %v839, %v845
        %v850 = vadd.f32 %v840, %v844
        %v851 = vadd.f32 %v841, %v845
        %v852 = vmax.f32 %v848, 0.0
        %v853 = vmax.f32 %v849, 0.0
        %v854 = vmax.f32 %v850, 0.0
        %v855 = vmax.f32 %v851, 0.0
        %vm860 = vcmask 1041408
        %v861 = vrot.slane %v852, 6
        %v862 = vrot.slane %v853, 6
        %v863 = vrot.slane %v854, 6
        %v864 = vsel %vm860, %v861, %v863
        %v865 = vrot.slane %v855, 6
        %v866 = vsel %vm860, %v862, %v865
        %873 = vst [vmem:[#allocation3] sm:$0xfc] %v861
        %874 = vst [vmem:[#allocation3 + $0x8] sm:$0xfc] %v862
        %875 = vst [vmem:[#allocation3 + $0x18] sm:$0xff] %v864
        %876 = vst [vmem:[#allocation3 + $0x20] sm:$0xff] %v866
        %877 = vst [vmem:[#allocation3 + $0x30] sm:$0x3] %v863
        %878 = vst [vmem:[#allocation3 + $0x38] sm:$0x3] %v865
        %v879 = vld [vmem:[#allocation3] sm:$0xff]
        %v880 = vld [vmem:[#allocation3 + $0x8] sm:$0xff]
        %v881 = vld [vmem:[#allocation3 + $0x10] sm:$0xff]
        %v882 = vld [vmem:[#allocation3 + $0x18] sm:$0xff]
        %v883 = vld [vmem:[#allocation3 + $0x20] sm:$0xff]
        %v884 = vld [vmem:[#allocation3 + $0x28] sm:$0xff]
        %v885 = vld [vmem:[#allocation8] sm:$0xff]
        %v886 = vld [vmem:[#allocation8 + $0x8] sm:$0xff]
        %v887 = vld [vmem:[#allocation8 + $0x10] sm:$0xff]
        %v888 = vld [vmem:[#allocation8 + $0x18] sm:$0xff]
        %v889 = vld [vmem:[#allocation8 + $0x20] sm:$0xff]
        %v890 = vld [vmem:[#allocation8 + $0x28] sm:$0xff]
        %v891 = vld [vmem:[#allocation8 + $0x30] sm:$0xff]
        %v892 = vld [vmem:[#allocation8 + $0x38] sm:$0xff]
        %v893 = vld [vmem:[#allocation8 + $0x40] sm:$0xff]
        %v894 = vld [vmem:[#allocation8 + $0x48] sm:$0xff]
        %v895 = vld [vmem:[#allocation8 + $0x50] sm:$0xff]
        %v896 = vld [vmem:[#allocation8 + $0x58] sm:$0xff]
        %v897 = vld [vmem:[#allocation8 + $0x60] sm:$0xff]
        %v898 = vld [vmem:[#allocation8 + $0x68] sm:$0xff]
        %v899 = vld [vmem:[#allocation8 + $0x70] sm:$0xff]
        %v900 = vld [vmem:[#allocation8 + $0x78] sm:$0xff]
        %v901 = vld [vmem:[#allocation8 + $0x80] sm:$0xff]
        %v902 = vld [vmem:[#allocation8 + $0x88] sm:$0xff]
        %v903 = vld [vmem:[#allocation8 + $0x90] sm:$0xff]
        %v904 = vld [vmem:[#allocation8 + $0x98] sm:$0xff]
        %v905 = vld [vmem:[#allocation8 + $0xa0] sm:$0xff]
        %v906 = vld [vmem:[#allocation8 + $0xa8] sm:$0xff]
        %v907 = vld [vmem:[#allocation8 + $0xb0] sm:$0xff]
        %v908 = vld [vmem:[#allocation8 + $0xb8] sm:$0xff]
        %v909 = vld [vmem:[#allocation8 + $0xc0] sm:$0xff]
        %v910 = vld [vmem:[#allocation8 + $0xc8] sm:$0xff]
        %v911 = vld [vmem:[#allocation8 + $0xd0] sm:$0xff]
        %v912 = vld [vmem:[#allocation8 + $0xd8] sm:$0xff]
        %v913 = vld [vmem:[#allocation8 + $0xe0] sm:$0xff]
        %v914 = vld [vmem:[#allocation8 + $0xe8] sm:$0xff]
        %v915 = vld [vmem:[#allocation8 + $0xf0] sm:$0xff]
        %v916 = vld [vmem:[#allocation8 + $0xf8] sm:$0xff]
        %v917 = vld [vmem:[#allocation8 + $0x100] sm:$0xff]
        %v918 = vld [vmem:[#allocation8 + $0x108] sm:$0xff]
        %v919 = vld [vmem:[#allocation8 + $0x110] sm:$0xff]
        %v920 = vld [vmem:[#allocation8 + $0x118] sm:$0xff]
        %v921 = vld [vmem:[#allocation8 + $0x120] sm:$0xff]
        %v922 = vld [vmem:[#allocation8 + $0x128] sm:$0xff]
        %v923 = vld [vmem:[#allocation8 + $0x130] sm:$0xff]
        %v924 = vld [vmem:[#allocation8 + $0x138] sm:$0xff]
        %v925 = vld [vmem:[#allocation8 + $0x140] sm:$0xff]
        %v926 = vld [vmem:[#allocation8 + $0x148] sm:$0xff]
        %v927 = vld [vmem:[#allocation8 + $0x150] sm:$0xff]
        %v928 = vld [vmem:[#allocation8 + $0x158] sm:$0xff]
        %v929 = vld [vmem:[#allocation8 + $0x160] sm:$0xff]
        %v930 = vld [vmem:[#allocation8 + $0x168] sm:$0xff]
        %v931 = vld [vmem:[#allocation8 + $0x170] sm:$0xff]
        %v932 = vld [vmem:[#allocation8 + $0x178] sm:$0xff]
        %v933 = vld [vmem:[#allocation8 + $0x180] sm:$0xff]
        %v934 = vld [vmem:[#allocation8 + $0x188] sm:$0xff]
        %v935 = vld [vmem:[#allocation8 + $0x190] sm:$0xff]
        %v936 = vld [vmem:[#allocation8 + $0x198] sm:$0xff]
        %v937 = vld [vmem:[#allocation8 + $0x1a0] sm:$0xff]
        %v938 = vld [vmem:[#allocation8 + $0x1a8] sm:$0xff]
        %v939 = vld [vmem:[#allocation8 + $0x1b0] sm:$0xff]
        %v940 = vld [vmem:[#allocation8 + $0x1b8] sm:$0xff]
        %v941 = vld [vmem:[#allocation8 + $0x1c0] sm:$0xff]
        %v942 = vld [vmem:[#allocation8 + $0x1c8] sm:$0xff]
        %v943 = vld [vmem:[#allocation8 + $0x1d0] sm:$0xff]
        %v944 = vld [vmem:[#allocation8 + $0x1d8] sm:$0xff]
        %v945 = vld [vmem:[#allocation8 + $0x1e0] sm:$0xff]
        %v946 = vld [vmem:[#allocation8 + $0x1e8] sm:$0xff]
        %v947 = vld [vmem:[#allocation8 + $0x1f0] sm:$0xff]
        %v948 = vld [vmem:[#allocation8 + $0x1f8] sm:$0xff]
        %v949 = vld [vmem:[#allocation8 + $0x200] sm:$0xff]
        %v950 = vld [vmem:[#allocation8 + $0x208] sm:$0xff]
        %v951 = vld [vmem:[#allocation8 + $0x210] sm:$0xff]
        %v952 = vld [vmem:[#allocation8 + $0x218] sm:$0xff]
        %v953 = vld [vmem:[#allocation8 + $0x220] sm:$0xff]
        %v954 = vld [vmem:[#allocation8 + $0x228] sm:$0xff]
        %v955 = vld [vmem:[#allocation8 + $0x230] sm:$0xff]
        %v956 = vld [vmem:[#allocation8 + $0x238] sm:$0xff]
        %v957 = vld [vmem:[#allocation8 + $0x240] sm:$0xff]
        %v958 = vld [vmem:[#allocation8 + $0x248] sm:$0xff]
        %v959 = vld [vmem:[#allocation8 + $0x250] sm:$0xff]
        %v960 = vld [vmem:[#allocation8 + $0x258] sm:$0xff]
        %v961 = vld [vmem:[#allocation8 + $0x260] sm:$0xff]
        %v962 = vld [vmem:[#allocation8 + $0x268] sm:$0xff]
        %v963 = vld [vmem:[#allocation8 + $0x270] sm:$0xff]
        %v964 = vld [vmem:[#allocation8 + $0x278] sm:$0xff]
        %v965 = vld [vmem:[#allocation8 + $0x280] sm:$0xff]
        %v966 = vld [vmem:[#allocation8 + $0x288] sm:$0xff]
        %v967 = vld [vmem:[#allocation8 + $0x290] sm:$0xff]
        %v968 = vld [vmem:[#allocation8 + $0x298] sm:$0xff]
        %v969 = vld [vmem:[#allocation8 + $0x2a0] sm:$0xff]
        %v970 = vld [vmem:[#allocation8 + $0x2a8] sm:$0xff]
        %v971 = vld [vmem:[#allocation8 + $0x2b0] sm:$0xff]
        %v972 = vld [vmem:[#allocation8 + $0x2b8] sm:$0xff]
        %v973 = vld [vmem:[#allocation8 + $0x2c0] sm:$0xff]
        %v974 = vld [vmem:[#allocation8 + $0x2c8] sm:$0xff]
        %v975 = vld [vmem:[#allocation8 + $0x2d0] sm:$0xff]
        %v976 = vld [vmem:[#allocation8 + $0x2d8] sm:$0xff]
        %v977 = vld [vmem:[#allocation8 + $0x2e0] sm:$0xff]
        %v978 = vld [vmem:[#allocation8 + $0x2e8] sm:$0xff]
        %v979 = vld [vmem:[#allocation8 + $0x2f0] sm:$0xff]
        %v980 = vld [vmem:[#allocation8 + $0x2f8] sm:$0xff]
        %v981 = vld [vmem:[#allocation8 + $0x300] sm:$0xff]
        %v982 = vld [vmem:[#allocation8 + $0x308] sm:$0xff]
        %v983 = vld [vmem:[#allocation8 + $0x310] sm:$0xff]
        %v984 = vld [vmem:[#allocation8 + $0x318] sm:$0xff]
        %v985 = vld [vmem:[#allocation8 + $0x320] sm:$0xff]
        %v986 = vld [vmem:[#allocation8 + $0x328] sm:$0xff]
        %v987 = vld [vmem:[#allocation8 + $0x330] sm:$0xff]
        %v988 = vld [vmem:[#allocation8 + $0x338] sm:$0xff]
        %v989 = vld [vmem:[#allocation8 + $0x340] sm:$0xff]
        %v990 = vld [vmem:[#allocation8 + $0x348] sm:$0xff]
        %v991 = vld [vmem:[#allocation8 + $0x350] sm:$0xff]
        %v992 = vld [vmem:[#allocation8 + $0x358] sm:$0xff]
        %v993 = vld [vmem:[#allocation8 + $0x360] sm:$0xff]
        %v994 = vld [vmem:[#allocation8 + $0x368] sm:$0xff]
        %v995 = vld [vmem:[#allocation8 + $0x370] sm:$0xff]
        %v996 = vld [vmem:[#allocation8 + $0x378] sm:$0xff]
        %v997 = vld [vmem:[#allocation8 + $0x380] sm:$0xff]
        %v998 = vld [vmem:[#allocation8 + $0x388] sm:$0xff]
        %v999 = vld [vmem:[#allocation8 + $0x390] sm:$0xff]
        %v1000 = vld [vmem:[#allocation8 + $0x398] sm:$0xff]
        %v1001 = vld [vmem:[#allocation8 + $0x3a0] sm:$0xff]
        %v1002 = vld [vmem:[#allocation8 + $0x3a8] sm:$0xff]
        %v1003 = vld [vmem:[#allocation8 + $0x3b0] sm:$0xff]
        %v1004 = vld [vmem:[#allocation8 + $0x3b8] sm:$0xff]
        %v1005 = vld [vmem:[#allocation8 + $0x3c0] sm:$0xff]
        %v1006 = vld [vmem:[#allocation8 + $0x3c8] sm:$0xff]
        %v1007 = vld [vmem:[#allocation8 + $0x3d0] sm:$0xff]
        %v1008 = vld [vmem:[#allocation8 + $0x3d8] sm:$0xff]
        %v1009 = vld [vmem:[#allocation8 + $0x3e0] sm:$0xff]
        %v1010 = vld [vmem:[#allocation8 + $0x3e8] sm:$0xff]
        %v1011 = vld [vmem:[#allocation8 + $0x3f0] sm:$0xff]
        %v1012 = vld [vmem:[#allocation8 + $0x3f8] sm:$0xff]
        %v1013 = vld [vmem:[#allocation8 + $0x400] sm:$0xff]
        %v1014 = vld [vmem:[#allocation8 + $0x408] sm:$0xff]
        %v1015 = vld [vmem:[#allocation8 + $0x410] sm:$0xff]
        %v1016 = vld [vmem:[#allocation8 + $0x418] sm:$0xff]
        %v1017 = vld [vmem:[#allocation8 + $0x420] sm:$0xff]
        %v1018 = vld [vmem:[#allocation8 + $0x428] sm:$0xff]
        %v1019 = vld [vmem:[#allocation8 + $0x430] sm:$0xff]
        %v1020 = vld [vmem:[#allocation8 + $0x438] sm:$0xff]
        %v1021 = vld [vmem:[#allocation8 + $0x440] sm:$0xff]
        %v1022 = vld [vmem:[#allocation8 + $0x448] sm:$0xff]
        %v1023 = vld [vmem:[#allocation8 + $0x450] sm:$0xff]
        %v1024 = vld [vmem:[#allocation8 + $0x458] sm:$0xff]
        %v1025 = vld [vmem:[#allocation8 + $0x460] sm:$0xff]
        %v1026 = vld [vmem:[#allocation8 + $0x468] sm:$0xff]
        %v1027 = vld [vmem:[#allocation8 + $0x470] sm:$0xff]
        %v1028 = vld [vmem:[#allocation8 + $0x478] sm:$0xff]
        %v1029 = vld [vmem:[#allocation8 + $0x480] sm:$0xff]
        %v1030 = vld [vmem:[#allocation8 + $0x488] sm:$0xff]
        %v1031 = vld [vmem:[#allocation8 + $0x490] sm:$0xff]
        %v1032 = vld [vmem:[#allocation8 + $0x498] sm:$0xff]
        %v1033 = vld [vmem:[#allocation8 + $0x4a0] sm:$0xff]
        %v1034 = vld [vmem:[#allocation8 + $0x4a8] sm:$0xff]
        %v1035 = vld [vmem:[#allocation8 + $0x4b0] sm:$0xff]
        %v1036 = vld [vmem:[#allocation8 + $0x4b8] sm:$0xff]
        %v1037 = vld [vmem:[#allocation8 + $0x4c0] sm:$0xff]
        %v1038 = vld [vmem:[#allocation8 + $0x4c8] sm:$0xff]
        %v1039 = vld [vmem:[#allocation8 + $0x4d0] sm:$0xff]
        %v1040 = vld [vmem:[#allocation8 + $0x4d8] sm:$0xff]
        %v1041 = vld [vmem:[#allocation8 + $0x4e0] sm:$0xff]
        %v1042 = vld [vmem:[#allocation8 + $0x4e8] sm:$0xff]
        %v1043 = vld [vmem:[#allocation8 + $0x4f0] sm:$0xff]
        %v1044 = vld [vmem:[#allocation8 + $0x4f8] sm:$0xff]
        %v1045 = vld [vmem:[#allocation3] sm:$0xfe]
        %v1046 = vld [vmem:[#allocation3 + $0x8] sm:$0xfe]
        %v1047 = vld [vmem:[#allocation3 + $0x10] sm:$0xfe]
        %v1048 = vld [vmem:[#allocation3 + $0x30] sm:$0x1]
        %v1049 = vld [vmem:[#allocation3 + $0x38] sm:$0x1]
        %v1050 = vld [vmem:[#allocation3 + $0x40] sm:$0x1]
        %s1051 = scalar_lea.vmem [#allocation8], 1280
        %v1052 = vld [vmem:[%s1051] sm:$0xff]
        %v1053 = vld [vmem:[%s1051 + $0x8] sm:$0xff]
        %v1054 = vld [vmem:[%s1051 + $0x10] sm:$0xff]
        %v1055 = vld [vmem:[%s1051 + $0x18] sm:$0xff]
        %v1056 = vld [vmem:[%s1051 + $0x20] sm:$0xff]
        %v1057 = vld [vmem:[%s1051 + $0x28] sm:$0xff]
        %v1058 = vld [vmem:[%s1051 + $0x30] sm:$0xff]
        %v1059 = vld [vmem:[%s1051 + $0x38] sm:$0xff]
        %v1060 = vld [vmem:[%s1051 + $0x40] sm:$0xff]
        %v1061 = vld [vmem:[%s1051 + $0x48] sm:$0xff]
        %v1062 = vld [vmem:[%s1051 + $0x50] sm:$0xff]
        %v1063 = vld [vmem:[%s1051 + $0x58] sm:$0xff]
        %v1064 = vld [vmem:[%s1051 + $0x60] sm:$0xff]
        %v1065 = vld [vmem:[%s1051 + $0x68] sm:$0xff]
        %v1066 = vld [vmem:[%s1051 + $0x70] sm:$0xff]
        %v1067 = vld [vmem:[%s1051 + $0x78] sm:$0xff]
        %v1068 = vld [vmem:[%s1051 + $0x80] sm:$0xff]
        %v1069 = vld [vmem:[%s1051 + $0x88] sm:$0xff]
        %v1070 = vld [vmem:[%s1051 + $0x90] sm:$0xff]
        %v1071 = vld [vmem:[%s1051 + $0x98] sm:$0xff]
        %v1072 = vld [vmem:[%s1051 + $0xa0] sm:$0xff]
        %v1073 = vld [vmem:[%s1051 + $0xa8] sm:$0xff]
        %v1074 = vld [vmem:[%s1051 + $0xb0] sm:$0xff]
        %v1075 = vld [vmem:[%s1051 + $0xb8] sm:$0xff]
        %v1076 = vld [vmem:[%s1051 + $0xc0] sm:$0xff]
        %v1077 = vld [vmem:[%s1051 + $0xc8] sm:$0xff]
        %v1078 = vld [vmem:[%s1051 + $0xd0] sm:$0xff]
        %v1079 = vld [vmem:[%s1051 + $0xd8] sm:$0xff]
        %v1080 = vld [vmem:[%s1051 + $0xe0] sm:$0xff]
        %v1081 = vld [vmem:[%s1051 + $0xe8] sm:$0xff]
        %v1082 = vld [vmem:[%s1051 + $0xf0] sm:$0xff]
        %v1083 = vld [vmem:[%s1051 + $0xf8] sm:$0xff]
        %v1084 = vld [vmem:[%s1051 + $0x100] sm:$0xff]
        %v1085 = vld [vmem:[%s1051 + $0x108] sm:$0xff]
        %v1086 = vld [vmem:[%s1051 + $0x110] sm:$0xff]
        %v1087 = vld [vmem:[%s1051 + $0x118] sm:$0xff]
        %v1088 = vld [vmem:[%s1051 + $0x120] sm:$0xff]
        %v1089 = vld [vmem:[%s1051 + $0x128] sm:$0xff]
        %v1090 = vld [vmem:[%s1051 + $0x130] sm:$0xff]
        %v1091 = vld [vmem:[%s1051 + $0x138] sm:$0xff]
        %v1092 = vld [vmem:[%s1051 + $0x140] sm:$0xff]
        %v1093 = vld [vmem:[%s1051 + $0x148] sm:$0xff]
        %v1094 = vld [vmem:[%s1051 + $0x150] sm:$0xff]
        %v1095 = vld [vmem:[%s1051 + $0x158] sm:$0xff]
        %v1096 = vld [vmem:[%s1051 + $0x160] sm:$0xff]
        %v1097 = vld [vmem:[%s1051 + $0x168] sm:$0xff]
        %v1098 = vld [vmem:[%s1051 + $0x170] sm:$0xff]
        %v1099 = vld [vmem:[%s1051 + $0x178] sm:$0xff]
        %v1100 = vld [vmem:[%s1051 + $0x180] sm:$0xff]
        %v1101 = vld [vmem:[%s1051 + $0x188] sm:$0xff]
        %v1102 = vld [vmem:[%s1051 + $0x190] sm:$0xff]
        %v1103 = vld [vmem:[%s1051 + $0x198] sm:$0xff]
        %v1104 = vld [vmem:[%s1051 + $0x1a0] sm:$0xff]
        %v1105 = vld [vmem:[%s1051 + $0x1a8] sm:$0xff]
        %v1106 = vld [vmem:[%s1051 + $0x1b0] sm:$0xff]
        %v1107 = vld [vmem:[%s1051 + $0x1b8] sm:$0xff]
        %v1108 = vld [vmem:[%s1051 + $0x1c0] sm:$0xff]
        %v1109 = vld [vmem:[%s1051 + $0x1c8] sm:$0xff]
        %v1110 = vld [vmem:[%s1051 + $0x1d0] sm:$0xff]
        %v1111 = vld [vmem:[%s1051 + $0x1d8] sm:$0xff]
        %v1112 = vld [vmem:[%s1051 + $0x1e0] sm:$0xff]
        %v1113 = vld [vmem:[%s1051 + $0x1e8] sm:$0xff]
        %v1114 = vld [vmem:[%s1051 + $0x1f0] sm:$0xff]
        %v1115 = vld [vmem:[%s1051 + $0x1f8] sm:$0xff]
        %v1116 = vld [vmem:[%s1051 + $0x200] sm:$0xff]
        %v1117 = vld [vmem:[%s1051 + $0x208] sm:$0xff]
        %v1118 = vld [vmem:[%s1051 + $0x210] sm:$0xff]
        %v1119 = vld [vmem:[%s1051 + $0x218] sm:$0xff]
        %v1120 = vld [vmem:[%s1051 + $0x220] sm:$0xff]
        %v1121 = vld [vmem:[%s1051 + $0x228] sm:$0xff]
        %v1122 = vld [vmem:[%s1051 + $0x230] sm:$0xff]
        %v1123 = vld [vmem:[%s1051 + $0x238] sm:$0xff]
        %v1124 = vld [vmem:[%s1051 + $0x240] sm:$0xff]
        %v1125 = vld [vmem:[%s1051 + $0x248] sm:$0xff]
        %v1126 = vld [vmem:[%s1051 + $0x250] sm:$0xff]
        %v1127 = vld [vmem:[%s1051 + $0x258] sm:$0xff]
        %v1128 = vld [vmem:[%s1051 + $0x260] sm:$0xff]
        %v1129 = vld [vmem:[%s1051 + $0x268] sm:$0xff]
        %v1130 = vld [vmem:[%s1051 + $0x270] sm:$0xff]
        %v1131 = vld [vmem:[%s1051 + $0x278] sm:$0xff]
        %v1132 = vld [vmem:[%s1051 + $0x280] sm:$0xff]
        %v1133 = vld [vmem:[%s1051 + $0x288] sm:$0xff]
        %v1134 = vld [vmem:[%s1051 + $0x290] sm:$0xff]
        %v1135 = vld [vmem:[%s1051 + $0x298] sm:$0xff]
        %v1136 = vld [vmem:[%s1051 + $0x2a0] sm:$0xff]
        %v1137 = vld [vmem:[%s1051 + $0x2a8] sm:$0xff]
        %v1138 = vld [vmem:[%s1051 + $0x2b0] sm:$0xff]
        %v1139 = vld [vmem:[%s1051 + $0x2b8] sm:$0xff]
        %v1140 = vld [vmem:[%s1051 + $0x2c0] sm:$0xff]
        %v1141 = vld [vmem:[%s1051 + $0x2c8] sm:$0xff]
        %v1142 = vld [vmem:[%s1051 + $0x2d0] sm:$0xff]
        %v1143 = vld [vmem:[%s1051 + $0x2d8] sm:$0xff]
        %v1144 = vld [vmem:[%s1051 + $0x2e0] sm:$0xff]
        %v1145 = vld [vmem:[%s1051 + $0x2e8] sm:$0xff]
        %v1146 = vld [vmem:[%s1051 + $0x2f0] sm:$0xff]
        %v1147 = vld [vmem:[%s1051 + $0x2f8] sm:$0xff]
        %v1148 = vld [vmem:[%s1051 + $0x300] sm:$0xff]
        %v1149 = vld [vmem:[%s1051 + $0x308] sm:$0xff]
        %v1150 = vld [vmem:[%s1051 + $0x310] sm:$0xff]
        %v1151 = vld [vmem:[%s1051 + $0x318] sm:$0xff]
        %v1152 = vld [vmem:[%s1051 + $0x320] sm:$0xff]
        %v1153 = vld [vmem:[%s1051 + $0x328] sm:$0xff]
        %v1154 = vld [vmem:[%s1051 + $0x330] sm:$0xff]
        %v1155 = vld [vmem:[%s1051 + $0x338] sm:$0xff]
        %v1156 = vld [vmem:[%s1051 + $0x340] sm:$0xff]
        %v1157 = vld [vmem:[%s1051 + $0x348] sm:$0xff]
        %v1158 = vld [vmem:[%s1051 + $0x350] sm:$0xff]
        %v1159 = vld [vmem:[%s1051 + $0x358] sm:$0xff]
        %v1160 = vld [vmem:[%s1051 + $0x360] sm:$0xff]
        %v1161 = vld [vmem:[%s1051 + $0x368] sm:$0xff]
        %v1162 = vld [vmem:[%s1051 + $0x370] sm:$0xff]
        %v1163 = vld [vmem:[%s1051 + $0x378] sm:$0xff]
        %v1164 = vld [vmem:[%s1051 + $0x380] sm:$0xff]
        %v1165 = vld [vmem:[%s1051 + $0x388] sm:$0xff]
        %v1166 = vld [vmem:[%s1051 + $0x390] sm:$0xff]
        %v1167 = vld [vmem:[%s1051 + $0x398] sm:$0xff]
        %v1168 = vld [vmem:[%s1051 + $0x3a0] sm:$0xff]
        %v1169 = vld [vmem:[%s1051 + $0x3a8] sm:$0xff]
        %v1170 = vld [vmem:[%s1051 + $0x3b0] sm:$0xff]
        %v1171 = vld [vmem:[%s1051 + $0x3b8] sm:$0xff]
        %v1172 = vld [vmem:[%s1051 + $0x3c0] sm:$0xff]
        %v1173 = vld [vmem:[%s1051 + $0x3c8] sm:$0xff]
        %v1174 = vld [vmem:[%s1051 + $0x3d0] sm:$0xff]
        %v1175 = vld [vmem:[%s1051 + $0x3d8] sm:$0xff]
        %v1176 = vld [vmem:[%s1051 + $0x3e0] sm:$0xff]
        %v1177 = vld [vmem:[%s1051 + $0x3e8] sm:$0xff]
        %v1178 = vld [vmem:[%s1051 + $0x3f0] sm:$0xff]
        %v1179 = vld [vmem:[%s1051 + $0x3f8] sm:$0xff]
        %v1180 = vld [vmem:[%s1051 + $0x400] sm:$0xff]
        %v1181 = vld [vmem:[%s1051 + $0x408] sm:$0xff]
        %v1182 = vld [vmem:[%s1051 + $0x410] sm:$0xff]
        %v1183 = vld [vmem:[%s1051 + $0x418] sm:$0xff]
        %v1184 = vld [vmem:[%s1051 + $0x420] sm:$0xff]
        %v1185 = vld [vmem:[%s1051 + $0x428] sm:$0xff]
        %v1186 = vld [vmem:[%s1051 + $0x430] sm:$0xff]
        %v1187 = vld [vmem:[%s1051 + $0x438] sm:$0xff]
        %v1188 = vld [vmem:[%s1051 + $0x440] sm:$0xff]
        %v1189 = vld [vmem:[%s1051 + $0x448] sm:$0xff]
        %v1190 = vld [vmem:[%s1051 + $0x450] sm:$0xff]
        %v1191 = vld [vmem:[%s1051 + $0x458] sm:$0xff]
        %v1192 = vld [vmem:[%s1051 + $0x460] sm:$0xff]
        %v1193 = vld [vmem:[%s1051 + $0x468] sm:$0xff]
        %v1194 = vld [vmem:[%s1051 + $0x470] sm:$0xff]
        %v1195 = vld [vmem:[%s1051 + $0x478] sm:$0xff]
        %v1196 = vld [vmem:[%s1051 + $0x480] sm:$0xff]
        %v1197 = vld [vmem:[%s1051 + $0x488] sm:$0xff]
        %v1198 = vld [vmem:[%s1051 + $0x490] sm:$0xff]
        %v1199 = vld [vmem:[%s1051 + $0x498] sm:$0xff]
        %v1200 = vld [vmem:[%s1051 + $0x4a0] sm:$0xff]
        %v1201 = vld [vmem:[%s1051 + $0x4a8] sm:$0xff]
        %v1202 = vld [vmem:[%s1051 + $0x4b0] sm:$0xff]
        %v1203 = vld [vmem:[%s1051 + $0x4b8] sm:$0xff]
        %v1204 = vld [vmem:[%s1051 + $0x4c0] sm:$0xff]
        %v1205 = vld [vmem:[%s1051 + $0x4c8] sm:$0xff]
        %v1206 = vld [vmem:[%s1051 + $0x4d0] sm:$0xff]
        %v1207 = vld [vmem:[%s1051 + $0x4d8] sm:$0xff]
        %v1208 = vld [vmem:[%s1051 + $0x4e0] sm:$0xff]
        %v1209 = vld [vmem:[%s1051 + $0x4e8] sm:$0xff]
        %v1210 = vld [vmem:[%s1051 + $0x4f0] sm:$0xff]
        %v1211 = vld [vmem:[%s1051 + $0x4f8] sm:$0xff]
        %vm1221 = vcmask 1046528
        %v1222 = vrot.slane %v1045, 1
        %v1223 = vrot.slane %v882, 1
        %v1224 = vsel %vm1221, %v1222, %v1223
        %v1225 = vrot.slane %v1046, 1
        %v1226 = vrot.slane %v883, 1
        %v1227 = vsel %vm1221, %v1225, %v1226
        %v1228 = vrot.slane %v1047, 1
        %v1229 = vrot.slane %v884, 1
        %v1230 = vsel %vm1221, %v1228, %v1229
        %v1231 = vrot.slane %v1048, 1
        %v1232 = vsel %vm1221, %v1223, %v1231
        %v1233 = vrot.slane %v1049, 1
        %v1234 = vsel %vm1221, %v1226, %v1233
        %v1235 = vrot.slane %v1050, 1
        %v1236 = vsel %vm1221, %v1229, %v1235
        %v1241 = vsel %vm407, %v1230, 0
        %v1243 = vsel %vm407, %v1236, 0
        %1245 = vmatpush.msra.mxu0 %v1112
        %1246 = vmatpush.msra.mxu0 %v1108
        %1247 = vmatpush.msra.mxu0 %v1104
        %1248 = vmatpush.msra.mxu0 %v1100
        %1249 = vmatpush.msra.mxu0 %v1096
        %1250 = vmatpush.msra.mxu0 %v1092
        %1251 = vmatpush.msra.mxu0 %v1088
        %1252 = vmatpush.msra.mxu0 %v1084
        %1253 = vmatpush.msra.mxu0 %v1080
        %1254 = vmatpush.msra.mxu0 %v1076
        %1255 = vmatpush.msra.mxu0 %v1072
        %1256 = vmatpush.msra.mxu0 %v1068
        %1257 = vmatpush.msra.mxu0 %v1064
        %1258 = vmatpush.msra.mxu0 %v1060
        %1259 = vmatpush.msra.mxu0 %v1056
        %1260 = vmatpush.msra.mxu0 %v1052
        %1261 = vmatmul.f32.gmra.mxu0 %v1224
        %v1262 = vpop.f32.mrf.mxu0
        %v1263 = vadd.f32 0.0, %v1262
        %1264 = vmatmul.f32.gmra.mxu0 %v1232
        %v1265 = vpop.f32.mrf.mxu0
        %v1266 = vadd.f32 0.0, %v1265
        %1267 = vdwg.mxu0
        %1268 = vmatpush.msra.mxu0 %v1176
        %1269 = vmatpush.msra.mxu0 %v1172
        %1270 = vmatpush.msra.mxu0 %v1168
        %1271 = vmatpush.msra.mxu0 %v1164
        %1272 = vmatpush.msra.mxu0 %v1160
        %1273 = vmatpush.msra.mxu0 %v1156
        %1274 = vmatpush.msra.mxu0 %v1152
        %1275 = vmatpush.msra.mxu0 %v1148
        %1276 = vmatpush.msra.mxu0 %v1144
        %1277 = vmatpush.msra.mxu0 %v1140
        %1278 = vmatpush.msra.mxu0 %v1136
        %1279 = vmatpush.msra.mxu0 %v1132
        %1280 = vmatpush.msra.mxu0 %v1128
        %1281 = vmatpush.msra.mxu0 %v1124
        %1282 = vmatpush.msra.mxu0 %v1120
        %1283 = vmatpush.msra.mxu0 %v1116
        %1284 = vmatmul.f32.gmra.mxu0 %v1227
        %v1285 = vpop.f32.mrf.mxu0
        %v1286 = vadd.f32 %v1263, %v1285
        %1287 = vmatmul.f32.gmra.mxu0 %v1234
        %v1288 = vpop.f32.mrf.mxu0
        %v1289 = vadd.f32 %v1266, %v1288
        %1290 = vdwg.mxu0
        %1291 = vmatpush.msra.mxu0 0.0
        %1292 = vmatpush.msra.mxu0 0.0
        %1293 = vmatpush.msra.mxu0 0.0
        %1294 = vmatpush.msra.mxu0 0.0
        %1295 = vmatpush.msra.mxu0 0.0
        %1296 = vmatpush.msra.mxu0 0.0
        %1297 = vmatpush.msra.mxu0 0.0
        %1298 = vmatpush.msra.mxu0 0.0
        %1299 = vmatpush.msra.mxu0 %v1208
        %1300 = vmatpush.msra.mxu0 %v1204
        %1301 = vmatpush.msra.mxu0 %v1200
        %1302 = vmatpush.msra.mxu0 %v1196
        %1303 = vmatpush.msra.mxu0 %v1192
        %1304 = vmatpush.msra.mxu0 %v1188
        %1305 = vmatpush.msra.mxu0 %v1184
        %1306 = vmatpush.msra.mxu0 %v1180
        %1307 = vmatmul.f32.gmra.mxu0 %v1241
        %v1308 = vpop.f32.mrf.mxu0
        %v1309 = vadd.f32 %v1286, %v1308
        %1310 = vmatmul.f32.gmra.mxu0 %v1243
        %v1311 = vpop.f32.mrf.mxu0
        %v1312 = vadd.f32 %v1289, %v1311
        %1313 = vdwg.mxu0
        %1314 = vmatpush.msra.mxu0 %v1113
        %1315 = vmatpush.msra.mxu0 %v1109
        %1316 = vmatpush.msra.mxu0 %v1105
        %1317 = vmatpush.msra.mxu0 %v1101
        %1318 = vmatpush.msra.mxu0 %v1097
        %1319 = vmatpush.msra.mxu0 %v1093
        %1320 = vmatpush.msra.mxu0 %v1089
        %1321 = vmatpush.msra.mxu0 %v1085
        %1322 = vmatpush.msra.mxu0 %v1081
        %1323 = vmatpush.msra.mxu0 %v1077
        %1324 = vmatpush.msra.mxu0 %v1073
        %1325 = vmatpush.msra.mxu0 %v1069
        %1326 = vmatpush.msra.mxu0 %v1065
        %1327 = vmatpush.msra.mxu0 %v1061
        %1328 = vmatpush.msra.mxu0 %v1057
        %1329 = vmatpush.msra.mxu0 %v1053
        %1330 = vmatmul.f32.gmra.mxu0 %v1224
        %v1331 = vpop.f32.mrf.mxu0
        %v1332 = vadd.f32 0.0, %v1331
        %1333 = vmatmul.f32.gmra.mxu0 %v1232
        %v1334 = vpop.f32.mrf.mxu0
        %v1335 = vadd.f32 0.0, %v1334
        %1336 = vdwg.mxu0
        %1337 = vmatpush.msra.mxu0 %v1177
        %1338 = vmatpush.msra.mxu0 %v1173
        %1339 = vmatpush.msra.mxu0 %v1169
        %1340 = vmatpush.msra.mxu0 %v1165
        %1341 = vmatpush.msra.mxu0 %v1161
        %1342 = vmatpush.msra.mxu0 %v1157
        %1343 = vmatpush.msra.mxu0 %v1153
        %1344 = vmatpush.msra.mxu0 %v1149
        %1345 = vmatpush.msra.mxu0 %v1145
        %1346 = vmatpush.msra.mxu0 %v1141
        %1347 = vmatpush.msra.mxu0 %v1137
        %1348 = vmatpush.msra.mxu0 %v1133
        %1349 = vmatpush.msra.mxu0 %v1129
        %1350 = vmatpush.msra.mxu0 %v1125
        %1351 = vmatpush.msra.mxu0 %v1121
        %1352 = vmatpush.msra.mxu0 %v1117
        %1353 = vmatmul.f32.gmra.mxu0 %v1227
        %v1354 = vpop.f32.mrf.mxu0
        %v1355 = vadd.f32 %v1332, %v1354
        %1356 = vmatmul.f32.gmra.mxu0 %v1234
        %v1357 = vpop.f32.mrf.mxu0
        %v1358 = vadd.f32 %v1335, %v1357
        %1359 = vdwg.mxu0
        %1360 = vmatpush.msra.mxu0 0.0
        %1361 = vmatpush.msra.mxu0 0.0
        %1362 = vmatpush.msra.mxu0 0.0
        %1363 = vmatpush.msra.mxu0 0.0
        %1364 = vmatpush.msra.mxu0 0.0
        %1365 = vmatpush.msra.mxu0 0.0
        %1366 = vmatpush.msra.mxu0 0.0
        %1367 = vmatpush.msra.mxu0 0.0
        %1368 = vmatpush.msra.mxu0 %v1209
        %1369 = vmatpush.msra.mxu0 %v1205
        %1370 = vmatpush.msra.mxu0 %v1201
        %1371 = vmatpush.msra.mxu0 %v1197
        %1372 = vmatpush.msra.mxu0 %v1193
        %1373 = vmatpush.msra.mxu0 %v1189
        %1374 = vmatpush.msra.mxu0 %v1185
        %1375 = vmatpush.msra.mxu0 %v1181
        %1376 = vmatmul.f32.gmra.mxu0 %v1241
        %v1377 = vpop.f32.mrf.mxu0
        %v1378 = vadd.f32 %v1355, %v1377
        %1379 = vmatmul.f32.gmra.mxu0 %v1243
        %v1380 = vpop.f32.mrf.mxu0
        %v1381 = vadd.f32 %v1358, %v1380
        %1382 = vdwg.mxu0
        %1383 = vmatpush.msra.mxu0 %v1114
        %1384 = vmatpush.msra.mxu0 %v1110
        %1385 = vmatpush.msra.mxu0 %v1106
        %1386 = vmatpush.msra.mxu0 %v1102
        %1387 = vmatpush.msra.mxu0 %v1098
        %1388 = vmatpush.msra.mxu0 %v1094
        %1389 = vmatpush.msra.mxu0 %v1090
        %1390 = vmatpush.msra.mxu0 %v1086
        %1391 = vmatpush.msra.mxu0 %v1082
        %1392 = vmatpush.msra.mxu0 %v1078
        %1393 = vmatpush.msra.mxu0 %v1074
        %1394 = vmatpush.msra.mxu0 %v1070
        %1395 = vmatpush.msra.mxu0 %v1066
        %1396 = vmatpush.msra.mxu0 %v1062
        %1397 = vmatpush.msra.mxu0 %v1058
        %1398 = vmatpush.msra.mxu0 %v1054
        %1399 = vmatmul.f32.gmra.mxu0 %v1224
        %v1400 = vpop.f32.mrf.mxu0
        %v1401 = vadd.f32 0.0, %v1400
        %1402 = vmatmul.f32.gmra.mxu0 %v1232
        %v1403 = vpop.f32.mrf.mxu0
        %v1404 = vadd.f32 0.0, %v1403
        %1405 = vdwg.mxu0
        %1406 = vmatpush.msra.mxu0 %v1178
        %1407 = vmatpush.msra.mxu0 %v1174
        %1408 = vmatpush.msra.mxu0 %v1170
        %1409 = vmatpush.msra.mxu0 %v1166
        %1410 = vmatpush.msra.mxu0 %v1162
        %1411 = vmatpush.msra.mxu0 %v1158
        %1412 = vmatpush.msra.mxu0 %v1154
        %1413 = vmatpush.msra.mxu0 %v1150
        %1414 = vmatpush.msra.mxu0 %v1146
        %1415 = vmatpush.msra.mxu0 %v1142
        %1416 = vmatpush.msra.mxu0 %v1138
        %1417 = vmatpush.msra.mxu0 %v1134
        %1418 = vmatpush.msra.mxu0 %v1130
        %1419 = vmatpush.msra.mxu0 %v1126
        %1420 = vmatpush.msra.mxu0 %v1122
        %1421 = vmatpush.msra.mxu0 %v1118
        %1422 = vmatmul.f32.gmra.mxu0 %v1227
        %v1423 = vpop.f32.mrf.mxu0
        %v1424 = vadd.f32 %v1401, %v1423
        %1425 = vmatmul.f32.gmra.mxu0 %v1234
        %v1426 = vpop.f32.mrf.mxu0
        %v1427 = vadd.f32 %v1404, %v1426
        %1428 = vdwg.mxu0
        %1429 = vmatpush.msra.mxu0 0.0
        %1430 = vmatpush.msra.mxu0 0.0
        %1431 = vmatpush.msra.mxu0 0.0
        %1432 = vmatpush.msra.mxu0 0.0
        %1433 = vmatpush.msra.mxu0 0.0
        %1434 = vmatpush.msra.mxu0 0.0
        %1435 = vmatpush.msra.mxu0 0.0
        %1436 = vmatpush.msra.mxu0 0.0
        %1437 = vmatpush.msra.mxu0 %v1210
        %1438 = vmatpush.msra.mxu0 %v1206
        %1439 = vmatpush.msra.mxu0 %v1202
        %1440 = vmatpush.msra.mxu0 %v1198
        %1441 = vmatpush.msra.mxu0 %v1194
        %1442 = vmatpush.msra.mxu0 %v1190
        %1443 = vmatpush.msra.mxu0 %v1186
        %1444 = vmatpush.msra.mxu0 %v1182
        %1445 = vmatmul.f32.gmra.mxu0 %v1241
        %v1446 = vpop.f32.mrf.mxu0
        %v1447 = vadd.f32 %v1424, %v1446
        %1448 = vmatmul.f32.gmra.mxu0 %v1243
        %v1449 = vpop.f32.mrf.mxu0
        %v1450 = vadd.f32 %v1427, %v1449
        %1451 = vdwg.mxu0
        %1452 = vmatpush.msra.mxu0 %v1115
        %1453 = vmatpush.msra.mxu0 %v1111
        %1454 = vmatpush.msra.mxu0 %v1107
        %1455 = vmatpush.msra.mxu0 %v1103
        %1456 = vmatpush.msra.mxu0 %v1099
        %1457 = vmatpush.msra.mxu0 %v1095
        %1458 = vmatpush.msra.mxu0 %v1091
        %1459 = vmatpush.msra.mxu0 %v1087
        %1460 = vmatpush.msra.mxu0 %v1083
        %1461 = vmatpush.msra.mxu0 %v1079
        %1462 = vmatpush.msra.mxu0 %v1075
        %1463 = vmatpush.msra.mxu0 %v1071
        %1464 = vmatpush.msra.mxu0 %v1067
        %1465 = vmatpush.msra.mxu0 %v1063
        %1466 = vmatpush.msra.mxu0 %v1059
        %1467 = vmatpush.msra.mxu0 %v1055
        %1468 = vmatmul.f32.gmra.mxu0 %v1224
        %v1469 = vpop.f32.mrf.mxu0
        %v1470 = vadd.f32 0.0, %v1469
        %1471 = vmatmul.f32.gmra.mxu0 %v1232
        %v1472 = vpop.f32.mrf.mxu0
        %v1473 = vadd.f32 0.0, %v1472
        %1474 = vdwg.mxu0
        %1475 = vmatpush.msra.mxu0 %v1179
        %1476 = vmatpush.msra.mxu0 %v1175
        %1477 = vmatpush.msra.mxu0 %v1171
        %1478 = vmatpush.msra.mxu0 %v1167
        %1479 = vmatpush.msra.mxu0 %v1163
        %1480 = vmatpush.msra.mxu0 %v1159
        %1481 = vmatpush.msra.mxu0 %v1155
        %1482 = vmatpush.msra.mxu0 %v1151
        %1483 = vmatpush.msra.mxu0 %v1147
        %1484 = vmatpush.msra.mxu0 %v1143
        %1485 = vmatpush.msra.mxu0 %v1139
        %1486 = vmatpush.msra.mxu0 %v1135
        %1487 = vmatpush.msra.mxu0 %v1131
        %1488 = vmatpush.msra.mxu0 %v1127
        %1489 = vmatpush.msra.mxu0 %v1123
        %1490 = vmatpush.msra.mxu0 %v1119
        %1491 = vmatmul.f32.gmra.mxu0 %v1227
        %v1492 = vpop.f32.mrf.mxu0
        %v1493 = vadd.f32 %v1470, %v1492
        %1494 = vmatmul.f32.gmra.mxu0 %v1234
        %v1495 = vpop.f32.mrf.mxu0
        %v1496 = vadd.f32 %v1473, %v1495
        %1497 = vdwg.mxu0
        %1498 = vmatpush.msra.mxu0 0.0
        %1499 = vmatpush.msra.mxu0 0.0
        %1500 = vmatpush.msra.mxu0 0.0
        %1501 = vmatpush.msra.mxu0 0.0
        %1502 = vmatpush.msra.mxu0 0.0
        %1503 = vmatpush.msra.mxu0 0.0
        %1504 = vmatpush.msra.mxu0 0.0
        %1505 = vmatpush.msra.mxu0 0.0
        %1506 = vmatpush.msra.mxu0 %v1211
        %1507 = vmatpush.msra.mxu0 %v1207
        %1508 = vmatpush.msra.mxu0 %v1203
        %1509 = vmatpush.msra.mxu0 %v1199
        %1510 = vmatpush.msra.mxu0 %v1195
        %1511 = vmatpush.msra.mxu0 %v1191
        %1512 = vmatpush.msra.mxu0 %v1187
        %1513 = vmatpush.msra.mxu0 %v1183
        %1514 = vmatmul.f32.gmra.mxu0 %v1241
        %v1515 = vpop.f32.mrf.mxu0
        %v1516 = vadd.f32 %v1493, %v1515
        %1517 = vmatmul.f32.gmra.mxu0 %v1243
        %v1518 = vpop.f32.mrf.mxu0
        %v1519 = vadd.f32 %v1496, %v1518
        %1520 = vdwg.mxu0
        %v1522 = vsel %vm407, %v881, 0
        %v1524 = vsel %vm407, %v884, 0
        %1526 = vmatpush.msra.mxu0 %v945
        %1527 = vmatpush.msra.mxu0 %v941
        %1528 = vmatpush.msra.mxu0 %v937
        %1529 = vmatpush.msra.mxu0 %v933
        %1530 = vmatpush.msra.mxu0 %v929
        %1531 = vmatpush.msra.mxu0 %v925
        %1532 = vmatpush.msra.mxu0 %v921
        %1533 = vmatpush.msra.mxu0 %v917
        %1534 = vmatpush.msra.mxu0 %v913
        %1535 = vmatpush.msra.mxu0 %v909
        %1536 = vmatpush.msra.mxu0 %v905
        %1537 = vmatpush.msra.mxu0 %v901
        %1538 = vmatpush.msra.mxu0 %v897
        %1539 = vmatpush.msra.mxu0 %v893
        %1540 = vmatpush.msra.mxu0 %v889
        %1541 = vmatpush.msra.mxu0 %v885
        %1542 = vmatmul.f32.gmra.mxu0 %v879
        %v1543 = vpop.f32.mrf.mxu0
        %v1544 = vadd.f32 %v1309, %v1543
        %1545 = vmatmul.f32.gmra.mxu0 %v882
        %v1546 = vpop.f32.mrf.mxu0
        %v1547 = vadd.f32 %v1312, %v1546
        %1548 = vdwg.mxu0
        %1549 = vmatpush.msra.mxu0 %v1009
        %1550 = vmatpush.msra.mxu0 %v1005
        %1551 = vmatpush.msra.mxu0 %v1001
        %1552 = vmatpush.msra.mxu0 %v997
        %1553 = vmatpush.msra.mxu0 %v993
        %1554 = vmatpush.msra.mxu0 %v989
        %1555 = vmatpush.msra.mxu0 %v985
        %1556 = vmatpush.msra.mxu0 %v981
        %1557 = vmatpush.msra.mxu0 %v977
        %1558 = vmatpush.msra.mxu0 %v973
        %1559 = vmatpush.msra.mxu0 %v969
        %1560 = vmatpush.msra.mxu0 %v965
        %1561 = vmatpush.msra.mxu0 %v961
        %1562 = vmatpush.msra.mxu0 %v957
        %1563 = vmatpush.msra.mxu0 %v953
        %1564 = vmatpush.msra.mxu0 %v949
        %1565 = vmatmul.f32.gmra.mxu0 %v880
        %v1566 = vpop.f32.mrf.mxu0
        %v1567 = vadd.f32 %v1544, %v1566
        %1568 = vmatmul.f32.gmra.mxu0 %v883
        %v1569 = vpop.f32.mrf.mxu0
        %v1570 = vadd.f32 %v1547, %v1569
        %1571 = vdwg.mxu0
        %1572 = vmatpush.msra.mxu0 0.0
        %1573 = vmatpush.msra.mxu0 0.0
        %1574 = vmatpush.msra.mxu0 0.0
        %1575 = vmatpush.msra.mxu0 0.0
        %1576 = vmatpush.msra.mxu0 0.0
        %1577 = vmatpush.msra.mxu0 0.0
        %1578 = vmatpush.msra.mxu0 0.0
        %1579 = vmatpush.msra.mxu0 0.0
        %1580 = vmatpush.msra.mxu0 %v1041
        %1581 = vmatpush.msra.mxu0 %v1037
        %1582 = vmatpush.msra.mxu0 %v1033
        %1583 = vmatpush.msra.mxu0 %v1029
        %1584 = vmatpush.msra.mxu0 %v1025
        %1585 = vmatpush.msra.mxu0 %v1021
        %1586 = vmatpush.msra.mxu0 %v1017
        %1587 = vmatpush.msra.mxu0 %v1013
        %1588 = vmatmul.f32.gmra.mxu0 %v1522
        %v1589 = vpop.f32.mrf.mxu0
        %v1590 = vadd.f32 %v1567, %v1589
        %1591 = vmatmul.f32.gmra.mxu0 %v1524
        %v1592 = vpop.f32.mrf.mxu0
        %v1593 = vadd.f32 %v1570, %v1592
        %1594 = vdwg.mxu0
        %1595 = vmatpush.msra.mxu0 %v946
        %1596 = vmatpush.msra.mxu0 %v942
        %1597 = vmatpush.msra.mxu0 %v938
        %1598 = vmatpush.msra.mxu0 %v934
        %1599 = vmatpush.msra.mxu0 %v930
        %1600 = vmatpush.msra.mxu0 %v926
        %1601 = vmatpush.msra.mxu0 %v922
        %1602 = vmatpush.msra.mxu0 %v918
        %1603 = vmatpush.msra.mxu0 %v914
        %1604 = vmatpush.msra.mxu0 %v910
        %1605 = vmatpush.msra.mxu0 %v906
        %1606 = vmatpush.msra.mxu0 %v902
        %1607 = vmatpush.msra.mxu0 %v898
        %1608 = vmatpush.msra.mxu0 %v894
        %1609 = vmatpush.msra.mxu0 %v890
        %1610 = vmatpush.msra.mxu0 %v886
        %1611 = vmatmul.f32.gmra.mxu0 %v879
        %v1612 = vpop.f32.mrf.mxu0
        %v1613 = vadd.f32 %v1378, %v1612
        %1614 = vmatmul.f32.gmra.mxu0 %v882
        %v1615 = vpop.f32.mrf.mxu0
        %v1616 = vadd.f32 %v1381, %v1615
        %1617 = vdwg.mxu0
        %1618 = vmatpush.msra.mxu0 %v1010
        %1619 = vmatpush.msra.mxu0 %v1006
        %1620 = vmatpush.msra.mxu0 %v1002
        %1621 = vmatpush.msra.mxu0 %v998
        %1622 = vmatpush.msra.mxu0 %v994
        %1623 = vmatpush.msra.mxu0 %v990
        %1624 = vmatpush.msra.mxu0 %v986
        %1625 = vmatpush.msra.mxu0 %v982
        %1626 = vmatpush.msra.mxu0 %v978
        %1627 = vmatpush.msra.mxu0 %v974
        %1628 = vmatpush.msra.mxu0 %v970
        %1629 = vmatpush.msra.mxu0 %v966
        %1630 = vmatpush.msra.mxu0 %v962
        %1631 = vmatpush.msra.mxu0 %v958
        %1632 = vmatpush.msra.mxu0 %v954
        %1633 = vmatpush.msra.mxu0 %v950
        %1634 = vmatmul.f32.gmra.mxu0 %v880
        %v1635 = vpop.f32.mrf.mxu0
        %v1636 = vadd.f32 %v1613, %v1635
        %1637 = vmatmul.f32.gmra.mxu0 %v883
        %v1638 = vpop.f32.mrf.mxu0
        %v1639 = vadd.f32 %v1616, %v1638
        %1640 = vdwg.mxu0
        %1641 = vmatpush.msra.mxu0 0.0
        %1642 = vmatpush.msra.mxu0 0.0
        %1643 = vmatpush.msra.mxu0 0.0
        %1644 = vmatpush.msra.mxu0 0.0
        %1645 = vmatpush.msra.mxu0 0.0
        %1646 = vmatpush.msra.mxu0 0.0
        %1647 = vmatpush.msra.mxu0 0.0
        %1648 = vmatpush.msra.mxu0 0.0
        %1649 = vmatpush.msra.mxu0 %v1042
        %1650 = vmatpush.msra.mxu0 %v1038
        %1651 = vmatpush.msra.mxu0 %v1034
        %1652 = vmatpush.msra.mxu0 %v1030
        %1653 = vmatpush.msra.mxu0 %v1026
        %1654 = vmatpush.msra.mxu0 %v1022
        %1655 = vmatpush.msra.mxu0 %v1018
        %1656 = vmatpush.msra.mxu0 %v1014
        %1657 = vmatmul.f32.gmra.mxu0 %v1522
        %v1658 = vpop.f32.mrf.mxu0
        %v1659 = vadd.f32 %v1636, %v1658
        %1660 = vmatmul.f32.gmra.mxu0 %v1524
        %v1661 = vpop.f32.mrf.mxu0
        %v1662 = vadd.f32 %v1639, %v1661
        %1663 = vdwg.mxu0
        %1664 = vmatpush.msra.mxu0 %v947
        %1665 = vmatpush.msra.mxu0 %v943
        %1666 = vmatpush.msra.mxu0 %v939
        %1667 = vmatpush.msra.mxu0 %v935
        %1668 = vmatpush.msra.mxu0 %v931
        %1669 = vmatpush.msra.mxu0 %v927
        %1670 = vmatpush.msra.mxu0 %v923
        %1671 = vmatpush.msra.mxu0 %v919
        %1672 = vmatpush.msra.mxu0 %v915
        %1673 = vmatpush.msra.mxu0 %v911
        %1674 = vmatpush.msra.mxu0 %v907
        %1675 = vmatpush.msra.mxu0 %v903
        %1676 = vmatpush.msra.mxu0 %v899
        %1677 = vmatpush.msra.mxu0 %v895
        %1678 = vmatpush.msra.mxu0 %v891
        %1679 = vmatpush.msra.mxu0 %v887
        %1680 = vmatmul.f32.gmra.mxu0 %v879
        %v1681 = vpop.f32.mrf.mxu0
        %v1682 = vadd.f32 %v1447, %v1681
        %1683 = vmatmul.f32.gmra.mxu0 %v882
        %v1684 = vpop.f32.mrf.mxu0
        %v1685 = vadd.f32 %v1450, %v1684
        %1686 = vdwg.mxu0
        %1687 = vmatpush.msra.mxu0 %v1011
        %1688 = vmatpush.msra.mxu0 %v1007
        %1689 = vmatpush.msra.mxu0 %v1003
        %1690 = vmatpush.msra.mxu0 %v999
        %1691 = vmatpush.msra.mxu0 %v995
        %1692 = vmatpush.msra.mxu0 %v991
        %1693 = vmatpush.msra.mxu0 %v987
        %1694 = vmatpush.msra.mxu0 %v983
        %1695 = vmatpush.msra.mxu0 %v979
        %1696 = vmatpush.msra.mxu0 %v975
        %1697 = vmatpush.msra.mxu0 %v971
        %1698 = vmatpush.msra.mxu0 %v967
        %1699 = vmatpush.msra.mxu0 %v963
        %1700 = vmatpush.msra.mxu0 %v959
        %1701 = vmatpush.msra.mxu0 %v955
        %1702 = vmatpush.msra.mxu0 %v951
        %1703 = vmatmul.f32.gmra.mxu0 %v880
        %v1704 = vpop.f32.mrf.mxu0
        %v1705 = vadd.f32 %v1682, %v1704
        %1706 = vmatmul.f32.gmra.mxu0 %v883
        %v1707 = vpop.f32.mrf.mxu0
        %v1708 = vadd.f32 %v1685, %v1707
        %1709 = vdwg.mxu0
        %1710 = vmatpush.msra.mxu0 0.0
        %1711 = vmatpush.msra.mxu0 0.0
        %1712 = vmatpush.msra.mxu0 0.0
        %1713 = vmatpush.msra.mxu0 0.0
        %1714 = vmatpush.msra.mxu0 0.0
        %1715 = vmatpush.msra.mxu0 0.0
        %1716 = vmatpush.msra.mxu0 0.0
        %1717 = vmatpush.msra.mxu0 0.0
        %1718 = vmatpush.msra.mxu0 %v1043
        %1719 = vmatpush.msra.mxu0 %v1039
        %1720 = vmatpush.msra.mxu0 %v1035
        %1721 = vmatpush.msra.mxu0 %v1031
        %1722 = vmatpush.msra.mxu0 %v1027
        %1723 = vmatpush.msra.mxu0 %v1023
        %1724 = vmatpush.msra.mxu0 %v1019
        %1725 = vmatpush.msra.mxu0 %v1015
        %1726 = vmatmul.f32.gmra.mxu0 %v1522
        %v1727 = vpop.f32.mrf.mxu0
        %v1728 = vadd.f32 %v1705, %v1727
        %1729 = vmatmul.f32.gmra.mxu0 %v1524
        %v1730 = vpop.f32.mrf.mxu0
        %v1731 = vadd.f32 %v1708, %v1730
        %1732 = vdwg.mxu0
        %1733 = vmatpush.msra.mxu0 %v948
        %1734 = vmatpush.msra.mxu0 %v944
        %1735 = vmatpush.msra.mxu0 %v940
        %1736 = vmatpush.msra.mxu0 %v936
        %1737 = vmatpush.msra.mxu0 %v932
        %1738 = vmatpush.msra.mxu0 %v928
        %1739 = vmatpush.msra.mxu0 %v924
        %1740 = vmatpush.msra.mxu0 %v920
        %1741 = vmatpush.msra.mxu0 %v916
        %1742 = vmatpush.msra.mxu0 %v912
        %1743 = vmatpush.msra.mxu0 %v908
        %1744 = vmatpush.msra.mxu0 %v904
        %1745 = vmatpush.msra.mxu0 %v900
        %1746 = vmatpush.msra.mxu0 %v896
        %1747 = vmatpush.msra.mxu0 %v892
        %1748 = vmatpush.msra.mxu0 %v888
        %1749 = vmatmul.f32.gmra.mxu0 %v879
        %v1750 = vpop.f32.mrf.mxu0
        %v1751 = vadd.f32 %v1516, %v1750
        %1752 = vmatmul.f32.gmra.mxu0 %v882
        %v1753 = vpop.f32.mrf.mxu0
        %v1754 = vadd.f32 %v1519, %v1753
        %1755 = vdwg.mxu0
        %1756 = vmatpush.msra.mxu0 %v1012
        %1757 = vmatpush.msra.mxu0 %v1008
        %1758 = vmatpush.msra.mxu0 %v1004
        %1759 = vmatpush.msra.mxu0 %v1000
        %1760 = vmatpush.msra.mxu0 %v996
        %1761 = vmatpush.msra.mxu0 %v992
        %1762 = vmatpush.msra.mxu0 %v988
        %1763 = vmatpush.msra.mxu0 %v984
        %1764 = vmatpush.msra.mxu0 %v980
        %1765 = vmatpush.msra.mxu0 %v976
        %1766 = vmatpush.msra.mxu0 %v972
        %1767 = vmatpush.msra.mxu0 %v968
        %1768 = vmatpush.msra.mxu0 %v964
        %1769 = vmatpush.msra.mxu0 %v960
        %1770 = vmatpush.msra.mxu0 %v956
        %1771 = vmatpush.msra.mxu0 %v952
        %1772 = vmatmul.f32.gmra.mxu0 %v880
        %v1773 = vpop.f32.mrf.mxu0
        %v1774 = vadd.f32 %v1751, %v1773
        %1775 = vmatmul.f32.gmra.mxu0 %v883
        %v1776 = vpop.f32.mrf.mxu0
        %v1777 = vadd.f32 %v1754, %v1776
        %1778 = vdwg.mxu0
        %1779 = vmatpush.msra.mxu0 0.0
        %1780 = vmatpush.msra.mxu0 0.0
        %1781 = vmatpush.msra.mxu0 0.0
        %1782 = vmatpush.msra.mxu0 0.0
        %1783 = vmatpush.msra.mxu0 0.0
        %1784 = vmatpush.msra.mxu0 0.0
        %1785 = vmatpush.msra.mxu0 0.0
        %1786 = vmatpush.msra.mxu0 0.0
        %1787 = vmatpush.msra.mxu0 %v1044
        %1788 = vmatpush.msra.mxu0 %v1040
        %1789 = vmatpush.msra.mxu0 %v1036
        %1790 = vmatpush.msra.mxu0 %v1032
        %1791 = vmatpush.msra.mxu0 %v1028
        %1792 = vmatpush.msra.mxu0 %v1024
        %1793 = vmatpush.msra.mxu0 %v1020
        %1794 = vmatpush.msra.mxu0 %v1016
        %1795 = vmatmul.f32.gmra.mxu0 %v1522
        %v1796 = vpop.f32.mrf.mxu0
        %v1797 = vadd.f32 %v1774, %v1796
        %1798 = vmatmul.f32.gmra.mxu0 %v1524
        %v1799 = vpop.f32.mrf.mxu0
        %v1800 = vadd.f32 %v1777, %v1799
        %1801 = vdwg.mxu0
        %v1802 = vld [vmem:[#allocation3] sm:$0xfc]
        %v1803 = vld [vmem:[#allocation3 + $0x8] sm:$0xfc]
        %v1804 = vld [vmem:[#allocation3 + $0x10] sm:$0xfc]
        %v1805 = vld [vmem:[#allocation3 + $0x30] sm:$0x3]
        %v1806 = vld [vmem:[#allocation3 + $0x38] sm:$0x3]
        %v1807 = vld [vmem:[#allocation3 + $0x40] sm:$0x3]
        %s1808 = scalar_lea.vmem [#allocation8], 2560
        %v1809 = vld [vmem:[%s1808] sm:$0xff]
        %v1810 = vld [vmem:[%s1808 + $0x8] sm:$0xff]
        %v1811 = vld [vmem:[%s1808 + $0x10] sm:$0xff]
        %v1812 = vld [vmem:[%s1808 + $0x18] sm:$0xff]
        %v1813 = vld [vmem:[%s1808 + $0x20] sm:$0xff]
        %v1814 = vld [vmem:[%s1808 + $0x28] sm:$0xff]
        %v1815 = vld [vmem:[%s1808 + $0x30] sm:$0xff]
        %v1816 = vld [vmem:[%s1808 + $0x38] sm:$0xff]
        %v1817 = vld [vmem:[%s1808 + $0x40] sm:$0xff]
        %v1818 = vld [vmem:[%s1808 + $0x48] sm:$0xff]
        %v1819 = vld [vmem:[%s1808 + $0x50] sm:$0xff]
        %v1820 = vld [vmem:[%s1808 + $0x58] sm:$0xff]
        %v1821 = vld [vmem:[%s1808 + $0x60] sm:$0xff]
        %v1822 = vld [vmem:[%s1808 + $0x68] sm:$0xff]
        %v1823 = vld [vmem:[%s1808 + $0x70] sm:$0xff]
        %v1824 = vld [vmem:[%s1808 + $0x78] sm:$0xff]
        %v1825 = vld [vmem:[%s1808 + $0x80] sm:$0xff]
        %v1826 = vld [vmem:[%s1808 + $0x88] sm:$0xff]
        %v1827 = vld [vmem:[%s1808 + $0x90] sm:$0xff]
        %v1828 = vld [vmem:[%s1808 + $0x98] sm:$0xff]
        %v1829 = vld [vmem:[%s1808 + $0xa0] sm:$0xff]
        %v1830 = vld [vmem:[%s1808 + $0xa8] sm:$0xff]
        %v1831 = vld [vmem:[%s1808 + $0xb0] sm:$0xff]
        %v1832 = vld [vmem:[%s1808 + $0xb8] sm:$0xff]
        %v1833 = vld [vmem:[%s1808 + $0xc0] sm:$0xff]
        %v1834 = vld [vmem:[%s1808 + $0xc8] sm:$0xff]
        %v1835 = vld [vmem:[%s1808 + $0xd0] sm:$0xff]
        %v1836 = vld [vmem:[%s1808 + $0xd8] sm:$0xff]
        %v1837 = vld [vmem:[%s1808 + $0xe0] sm:$0xff]
        %v1838 = vld [vmem:[%s1808 + $0xe8] sm:$0xff]
        %v1839 = vld [vmem:[%s1808 + $0xf0] sm:$0xff]
        %v1840 = vld [vmem:[%s1808 + $0xf8] sm:$0xff]
        %v1841 = vld [vmem:[%s1808 + $0x100] sm:$0xff]
        %v1842 = vld [vmem:[%s1808 + $0x108] sm:$0xff]
        %v1843 = vld [vmem:[%s1808 + $0x110] sm:$0xff]
        %v1844 = vld [vmem:[%s1808 + $0x118] sm:$0xff]
        %v1845 = vld [vmem:[%s1808 + $0x120] sm:$0xff]
        %v1846 = vld [vmem:[%s1808 + $0x128] sm:$0xff]
        %v1847 = vld [vmem:[%s1808 + $0x130] sm:$0xff]
        %v1848 = vld [vmem:[%s1808 + $0x138] sm:$0xff]
        %v1849 = vld [vmem:[%s1808 + $0x140] sm:$0xff]
        %v1850 = vld [vmem:[%s1808 + $0x148] sm:$0xff]
        %v1851 = vld [vmem:[%s1808 + $0x150] sm:$0xff]
        %v1852 = vld [vmem:[%s1808 + $0x158] sm:$0xff]
        %v1853 = vld [vmem:[%s1808 + $0x160] sm:$0xff]
        %v1854 = vld [vmem:[%s1808 + $0x168] sm:$0xff]
        %v1855 = vld [vmem:[%s1808 + $0x170] sm:$0xff]
        %v1856 = vld [vmem:[%s1808 + $0x178] sm:$0xff]
        %v1857 = vld [vmem:[%s1808 + $0x180] sm:$0xff]
        %v1858 = vld [vmem:[%s1808 + $0x188] sm:$0xff]
        %v1859 = vld [vmem:[%s1808 + $0x190] sm:$0xff]
        %v1860 = vld [vmem:[%s1808 + $0x198] sm:$0xff]
        %v1861 = vld [vmem:[%s1808 + $0x1a0] sm:$0xff]
        %v1862 = vld [vmem:[%s1808 + $0x1a8] sm:$0xff]
        %v1863 = vld [vmem:[%s1808 + $0x1b0] sm:$0xff]
        %v1864 = vld [vmem:[%s1808 + $0x1b8] sm:$0xff]
        %v1865 = vld [vmem:[%s1808 + $0x1c0] sm:$0xff]
        %v1866 = vld [vmem:[%s1808 + $0x1c8] sm:$0xff]
        %v1867 = vld [vmem:[%s1808 + $0x1d0] sm:$0xff]
        %v1868 = vld [vmem:[%s1808 + $0x1d8] sm:$0xff]
        %v1869 = vld [vmem:[%s1808 + $0x1e0] sm:$0xff]
        %v1870 = vld [vmem:[%s1808 + $0x1e8] sm:$0xff]
        %v1871 = vld [vmem:[%s1808 + $0x1f0] sm:$0xff]
        %v1872 = vld [vmem:[%s1808 + $0x1f8] sm:$0xff]
        %v1873 = vld [vmem:[%s1808 + $0x200] sm:$0xff]
        %v1874 = vld [vmem:[%s1808 + $0x208] sm:$0xff]
        %v1875 = vld [vmem:[%s1808 + $0x210] sm:$0xff]
        %v1876 = vld [vmem:[%s1808 + $0x218] sm:$0xff]
        %v1877 = vld [vmem:[%s1808 + $0x220] sm:$0xff]
        %v1878 = vld [vmem:[%s1808 + $0x228] sm:$0xff]
        %v1879 = vld [vmem:[%s1808 + $0x230] sm:$0xff]
        %v1880 = vld [vmem:[%s1808 + $0x238] sm:$0xff]
        %v1881 = vld [vmem:[%s1808 + $0x240] sm:$0xff]
        %v1882 = vld [vmem:[%s1808 + $0x248] sm:$0xff]
        %v1883 = vld [vmem:[%s1808 + $0x250] sm:$0xff]
        %v1884 = vld [vmem:[%s1808 + $0x258] sm:$0xff]
        %v1885 = vld [vmem:[%s1808 + $0x260] sm:$0xff]
        %v1886 = vld [vmem:[%s1808 + $0x268] sm:$0xff]
        %v1887 = vld [vmem:[%s1808 + $0x270] sm:$0xff]
        %v1888 = vld [vmem:[%s1808 + $0x278] sm:$0xff]
        %v1889 = vld [vmem:[%s1808 + $0x280] sm:$0xff]
        %v1890 = vld [vmem:[%s1808 + $0x288] sm:$0xff]
        %v1891 = vld [vmem:[%s1808 + $0x290] sm:$0xff]
        %v1892 = vld [vmem:[%s1808 + $0x298] sm:$0xff]
        %v1893 = vld [vmem:[%s1808 + $0x2a0] sm:$0xff]
        %v1894 = vld [vmem:[%s1808 + $0x2a8] sm:$0xff]
        %v1895 = vld [vmem:[%s1808 + $0x2b0] sm:$0xff]
        %v1896 = vld [vmem:[%s1808 + $0x2b8] sm:$0xff]
        %v1897 = vld [vmem:[%s1808 + $0x2c0] sm:$0xff]
        %v1898 = vld [vmem:[%s1808 + $0x2c8] sm:$0xff]
        %v1899 = vld [vmem:[%s1808 + $0x2d0] sm:$0xff]
        %v1900 = vld [vmem:[%s1808 + $0x2d8] sm:$0xff]
        %v1901 = vld [vmem:[%s1808 + $0x2e0] sm:$0xff]
        %v1902 = vld [vmem:[%s1808 + $0x2e8] sm:$0xff]
        %v1903 = vld [vmem:[%s1808 + $0x2f0] sm:$0xff]
        %v1904 = vld [vmem:[%s1808 + $0x2f8] sm:$0xff]
        %v1905 = vld [vmem:[%s1808 + $0x300] sm:$0xff]
        %v1906 = vld [vmem:[%s1808 + $0x308] sm:$0xff]
        %v1907 = vld [vmem:[%s1808 + $0x310] sm:$0xff]
        %v1908 = vld [vmem:[%s1808 + $0x318] sm:$0xff]
        %v1909 = vld [vmem:[%s1808 + $0x320] sm:$0xff]
        %v1910 = vld [vmem:[%s1808 + $0x328] sm:$0xff]
        %v1911 = vld [vmem:[%s1808 + $0x330] sm:$0xff]
        %v1912 = vld [vmem:[%s1808 + $0x338] sm:$0xff]
        %v1913 = vld [vmem:[%s1808 + $0x340] sm:$0xff]
        %v1914 = vld [vmem:[%s1808 + $0x348] sm:$0xff]
        %v1915 = vld [vmem:[%s1808 + $0x350] sm:$0xff]
        %v1916 = vld [vmem:[%s1808 + $0x358] sm:$0xff]
        %v1917 = vld [vmem:[%s1808 + $0x360] sm:$0xff]
        %v1918 = vld [vmem:[%s1808 + $0x368] sm:$0xff]
        %v1919 = vld [vmem:[%s1808 + $0x370] sm:$0xff]
        %v1920 = vld [vmem:[%s1808 + $0x378] sm:$0xff]
        %v1921 = vld [vmem:[%s1808 + $0x380] sm:$0xff]
        %v1922 = vld [vmem:[%s1808 + $0x388] sm:$0xff]
        %v1923 = vld [vmem:[%s1808 + $0x390] sm:$0xff]
        %v1924 = vld [vmem:[%s1808 + $0x398] sm:$0xff]
        %v1925 = vld [vmem:[%s1808 + $0x3a0] sm:$0xff]
        %v1926 = vld [vmem:[%s1808 + $0x3a8] sm:$0xff]
        %v1927 = vld [vmem:[%s1808 + $0x3b0] sm:$0xff]
        %v1928 = vld [vmem:[%s1808 + $0x3b8] sm:$0xff]
        %v1929 = vld [vmem:[%s1808 + $0x3c0] sm:$0xff]
        %v1930 = vld [vmem:[%s1808 + $0x3c8] sm:$0xff]
        %v1931 = vld [vmem:[%s1808 + $0x3d0] sm:$0xff]
        %v1932 = vld [vmem:[%s1808 + $0x3d8] sm:$0xff]
        %v1933 = vld [vmem:[%s1808 + $0x3e0] sm:$0xff]
        %v1934 = vld [vmem:[%s1808 + $0x3e8] sm:$0xff]
        %v1935 = vld [vmem:[%s1808 + $0x3f0] sm:$0xff]
        %v1936 = vld [vmem:[%s1808 + $0x3f8] sm:$0xff]
        %v1937 = vld [vmem:[%s1808 + $0x400] sm:$0xff]
        %v1938 = vld [vmem:[%s1808 + $0x408] sm:$0xff]
        %v1939 = vld [vmem:[%s1808 + $0x410] sm:$0xff]
        %v1940 = vld [vmem:[%s1808 + $0x418] sm:$0xff]
        %v1941 = vld [vmem:[%s1808 + $0x420] sm:$0xff]
        %v1942 = vld [vmem:[%s1808 + $0x428] sm:$0xff]
        %v1943 = vld [vmem:[%s1808 + $0x430] sm:$0xff]
        %v1944 = vld [vmem:[%s1808 + $0x438] sm:$0xff]
        %v1945 = vld [vmem:[%s1808 + $0x440] sm:$0xff]
        %v1946 = vld [vmem:[%s1808 + $0x448] sm:$0xff]
        %v1947 = vld [vmem:[%s1808 + $0x450] sm:$0xff]
        %v1948 = vld [vmem:[%s1808 + $0x458] sm:$0xff]
        %v1949 = vld [vmem:[%s1808 + $0x460] sm:$0xff]
        %v1950 = vld [vmem:[%s1808 + $0x468] sm:$0xff]
        %v1951 = vld [vmem:[%s1808 + $0x470] sm:$0xff]
        %v1952 = vld [vmem:[%s1808 + $0x478] sm:$0xff]
        %v1953 = vld [vmem:[%s1808 + $0x480] sm:$0xff]
        %v1954 = vld [vmem:[%s1808 + $0x488] sm:$0xff]
        %v1955 = vld [vmem:[%s1808 + $0x490] sm:$0xff]
        %v1956 = vld [vmem:[%s1808 + $0x498] sm:$0xff]
        %v1957 = vld [vmem:[%s1808 + $0x4a0] sm:$0xff]
        %v1958 = vld [vmem:[%s1808 + $0x4a8] sm:$0xff]
        %v1959 = vld [vmem:[%s1808 + $0x4b0] sm:$0xff]
        %v1960 = vld [vmem:[%s1808 + $0x4b8] sm:$0xff]
        %v1961 = vld [vmem:[%s1808 + $0x4c0] sm:$0xff]
        %v1962 = vld [vmem:[%s1808 + $0x4c8] sm:$0xff]
        %v1963 = vld [vmem:[%s1808 + $0x4d0] sm:$0xff]
        %v1964 = vld [vmem:[%s1808 + $0x4d8] sm:$0xff]
        %v1965 = vld [vmem:[%s1808 + $0x4e0] sm:$0xff]
        %v1966 = vld [vmem:[%s1808 + $0x4e8] sm:$0xff]
        %v1967 = vld [vmem:[%s1808 + $0x4f0] sm:$0xff]
        %v1968 = vld [vmem:[%s1808 + $0x4f8] sm:$0xff]
        %vm1975 = vcmask 1045504
        %v1976 = vrot.slane %v1802, 2
        %v1977 = vrot.slane %v882, 2
        %v1978 = vsel %vm1975, %v1976, %v1977
        %v1979 = vrot.slane %v1803, 2
        %v1980 = vrot.slane %v883, 2
        %v1981 = vsel %vm1975, %v1979, %v1980
        %v1982 = vrot.slane %v1804, 2
        %v1983 = vrot.slane %v884, 2
        %v1984 = vsel %vm1975, %v1982, %v1983
        %v1985 = vrot.slane %v1805, 2
        %v1986 = vsel %vm1975, %v1977, %v1985
        %v1987 = vrot.slane %v1806, 2
        %v1988 = vsel %vm1975, %v1980, %v1987
        %v1989 = vrot.slane %v1807, 2
        %v1990 = vsel %vm1975, %v1983, %v1989
        %v1995 = vsel %vm407, %v1984, 0
        %v1997 = vsel %vm407, %v1990, 0
        %1999 = vmatpush.msra.mxu0 %v1869
        %2000 = vmatpush.msra.mxu0 %v1865
        %2001 = vmatpush.msra.mxu0 %v1861
        %2002 = vmatpush.msra.mxu0 %v1857
        %2003 = vmatpush.msra.mxu0 %v1853
        %2004 = vmatpush.msra.mxu0 %v1849
        %2005 = vmatpush.msra.mxu0 %v1845
        %2006 = vmatpush.msra.mxu0 %v1841
        %2007 = vmatpush.msra.mxu0 %v1837
        %2008 = vmatpush.msra.mxu0 %v1833
        %2009 = vmatpush.msra.mxu0 %v1829
        %2010 = vmatpush.msra.mxu0 %v1825
        %2011 = vmatpush.msra.mxu0 %v1821
        %2012 = vmatpush.msra.mxu0 %v1817
        %2013 = vmatpush.msra.mxu0 %v1813
        %2014 = vmatpush.msra.mxu0 %v1809
        %2015 = vmatmul.f32.gmra.mxu0 %v1978
        %v2016 = vpop.f32.mrf.mxu0
        %v2017 = vadd.f32 0.0, %v2016
        %2018 = vmatmul.f32.gmra.mxu0 %v1986
        %v2019 = vpop.f32.mrf.mxu0
        %v2020 = vadd.f32 0.0, %v2019
        %2021 = vdwg.mxu0
        %2022 = vmatpush.msra.mxu0 %v1933
        %2023 = vmatpush.msra.mxu0 %v1929
        %2024 = vmatpush.msra.mxu0 %v1925
        %2025 = vmatpush.msra.mxu0 %v1921
        %2026 = vmatpush.msra.mxu0 %v1917
        %2027 = vmatpush.msra.mxu0 %v1913
        %2028 = vmatpush.msra.mxu0 %v1909
        %2029 = vmatpush.msra.mxu0 %v1905
        %2030 = vmatpush.msra.mxu0 %v1901
        %2031 = vmatpush.msra.mxu0 %v1897
        %2032 = vmatpush.msra.mxu0 %v1893
        %2033 = vmatpush.msra.mxu0 %v1889
        %2034 = vmatpush.msra.mxu0 %v1885
        %2035 = vmatpush.msra.mxu0 %v1881
        %2036 = vmatpush.msra.mxu0 %v1877
        %2037 = vmatpush.msra.mxu0 %v1873
        %2038 = vmatmul.f32.gmra.mxu0 %v1981
        %v2039 = vpop.f32.mrf.mxu0
        %v2040 = vadd.f32 %v2017, %v2039
        %2041 = vmatmul.f32.gmra.mxu0 %v1988
        %v2042 = vpop.f32.mrf.mxu0
        %v2043 = vadd.f32 %v2020, %v2042
        %2044 = vdwg.mxu0
        %2045 = vmatpush.msra.mxu0 0.0
        %2046 = vmatpush.msra.mxu0 0.0
        %2047 = vmatpush.msra.mxu0 0.0
        %2048 = vmatpush.msra.mxu0 0.0
        %2049 = vmatpush.msra.mxu0 0.0
        %2050 = vmatpush.msra.mxu0 0.0
        %2051 = vmatpush.msra.mxu0 0.0
        %2052 = vmatpush.msra.mxu0 0.0
        %2053 = vmatpush.msra.mxu0 %v1965
        %2054 = vmatpush.msra.mxu0 %v1961
        %2055 = vmatpush.msra.mxu0 %v1957
        %2056 = vmatpush.msra.mxu0 %v1953
        %2057 = vmatpush.msra.mxu0 %v1949
        %2058 = vmatpush.msra.mxu0 %v1945
        %2059 = vmatpush.msra.mxu0 %v1941
        %2060 = vmatpush.msra.mxu0 %v1937
        %2061 = vmatmul.f32.gmra.mxu0 %v1995
        %v2062 = vpop.f32.mrf.mxu0
        %v2063 = vadd.f32 %v2040, %v2062
        %2064 = vmatmul.f32.gmra.mxu0 %v1997
        %v2065 = vpop.f32.mrf.mxu0
        %v2066 = vadd.f32 %v2043, %v2065
        %2067 = vdwg.mxu0
        %2068 = vmatpush.msra.mxu0 %v1870
        %2069 = vmatpush.msra.mxu0 %v1866
        %2070 = vmatpush.msra.mxu0 %v1862
        %2071 = vmatpush.msra.mxu0 %v1858
        %2072 = vmatpush.msra.mxu0 %v1854
        %2073 = vmatpush.msra.mxu0 %v1850
        %2074 = vmatpush.msra.mxu0 %v1846
        %2075 = vmatpush.msra.mxu0 %v1842
        %2076 = vmatpush.msra.mxu0 %v1838
        %2077 = vmatpush.msra.mxu0 %v1834
        %2078 = vmatpush.msra.mxu0 %v1830
        %2079 = vmatpush.msra.mxu0 %v1826
        %2080 = vmatpush.msra.mxu0 %v1822
        %2081 = vmatpush.msra.mxu0 %v1818
        %2082 = vmatpush.msra.mxu0 %v1814
        %2083 = vmatpush.msra.mxu0 %v1810
        %2084 = vmatmul.f32.gmra.mxu0 %v1978
        %v2085 = vpop.f32.mrf.mxu0
        %v2086 = vadd.f32 0.0, %v2085
        %2087 = vmatmul.f32.gmra.mxu0 %v1986
        %v2088 = vpop.f32.mrf.mxu0
        %v2089 = vadd.f32 0.0, %v2088
        %2090 = vdwg.mxu0
        %2091 = vmatpush.msra.mxu0 %v1934
        %2092 = vmatpush.msra.mxu0 %v1930
        %2093 = vmatpush.msra.mxu0 %v1926
        %2094 = vmatpush.msra.mxu0 %v1922
        %2095 = vmatpush.msra.mxu0 %v1918
        %2096 = vmatpush.msra.mxu0 %v1914
        %2097 = vmatpush.msra.mxu0 %v1910
        %2098 = vmatpush.msra.mxu0 %v1906
        %2099 = vmatpush.msra.mxu0 %v1902
        %2100 = vmatpush.msra.mxu0 %v1898
        %2101 = vmatpush.msra.mxu0 %v1894
        %2102 = vmatpush.msra.mxu0 %v1890
        %2103 = vmatpush.msra.mxu0 %v1886
        %2104 = vmatpush.msra.mxu0 %v1882
        %2105 = vmatpush.msra.mxu0 %v1878
        %2106 = vmatpush.msra.mxu0 %v1874
        %2107 = vmatmul.f32.gmra.mxu0 %v1981
        %v2108 = vpop.f32.mrf.mxu0
        %v2109 = vadd.f32 %v2086, %v2108
        %2110 = vmatmul.f32.gmra.mxu0 %v1988
        %v2111 = vpop.f32.mrf.mxu0
        %v2112 = vadd.f32 %v2089, %v2111
        %2113 = vdwg.mxu0
        %2114 = vmatpush.msra.mxu0 0.0
        %2115 = vmatpush.msra.mxu0 0.0
        %2116 = vmatpush.msra.mxu0 0.0
        %2117 = vmatpush.msra.mxu0 0.0
        %2118 = vmatpush.msra.mxu0 0.0
        %2119 = vmatpush.msra.mxu0 0.0
        %2120 = vmatpush.msra.mxu0 0.0
        %2121 = vmatpush.msra.mxu0 0.0
        %2122 = vmatpush.msra.mxu0 %v1966
        %2123 = vmatpush.msra.mxu0 %v1962
        %2124 = vmatpush.msra.mxu0 %v1958
        %2125 = vmatpush.msra.mxu0 %v1954
        %2126 = vmatpush.msra.mxu0 %v1950
        %2127 = vmatpush.msra.mxu0 %v1946
        %2128 = vmatpush.msra.mxu0 %v1942
        %2129 = vmatpush.msra.mxu0 %v1938
        %2130 = vmatmul.f32.gmra.mxu0 %v1995
        %v2131 = vpop.f32.mrf.mxu0
        %v2132 = vadd.f32 %v2109, %v2131
        %2133 = vmatmul.f32.gmra.mxu0 %v1997
        %v2134 = vpop.f32.mrf.mxu0
        %v2135 = vadd.f32 %v2112, %v2134
        %2136 = vdwg.mxu0
        %2137 = vmatpush.msra.mxu0 %v1871
        %2138 = vmatpush.msra.mxu0 %v1867
        %2139 = vmatpush.msra.mxu0 %v1863
        %2140 = vmatpush.msra.mxu0 %v1859
        %2141 = vmatpush.msra.mxu0 %v1855
        %2142 = vmatpush.msra.mxu0 %v1851
        %2143 = vmatpush.msra.mxu0 %v1847
        %2144 = vmatpush.msra.mxu0 %v1843
        %2145 = vmatpush.msra.mxu0 %v1839
        %2146 = vmatpush.msra.mxu0 %v1835
        %2147 = vmatpush.msra.mxu0 %v1831
        %2148 = vmatpush.msra.mxu0 %v1827
        %2149 = vmatpush.msra.mxu0 %v1823
        %2150 = vmatpush.msra.mxu0 %v1819
        %2151 = vmatpush.msra.mxu0 %v1815
        %2152 = vmatpush.msra.mxu0 %v1811
        %2153 = vmatmul.f32.gmra.mxu0 %v1978
        %v2154 = vpop.f32.mrf.mxu0
        %v2155 = vadd.f32 0.0, %v2154
        %2156 = vmatmul.f32.gmra.mxu0 %v1986
        %v2157 = vpop.f32.mrf.mxu0
        %v2158 = vadd.f32 0.0, %v2157
        %2159 = vdwg.mxu0
        %2160 = vmatpush.msra.mxu0 %v1935
        %2161 = vmatpush.msra.mxu0 %v1931
        %2162 = vmatpush.msra.mxu0 %v1927
        %2163 = vmatpush.msra.mxu0 %v1923
        %2164 = vmatpush.msra.mxu0 %v1919
        %2165 = vmatpush.msra.mxu0 %v1915
        %2166 = vmatpush.msra.mxu0 %v1911
        %2167 = vmatpush.msra.mxu0 %v1907
        %2168 = vmatpush.msra.mxu0 %v1903
        %2169 = vmatpush.msra.mxu0 %v1899
        %2170 = vmatpush.msra.mxu0 %v1895
        %2171 = vmatpush.msra.mxu0 %v1891
        %2172 = vmatpush.msra.mxu0 %v1887
        %2173 = vmatpush.msra.mxu0 %v1883
        %2174 = vmatpush.msra.mxu0 %v1879
        %2175 = vmatpush.msra.mxu0 %v1875
        %2176 = vmatmul.f32.gmra.mxu0 %v1981
        %v2177 = vpop.f32.mrf.mxu0
        %v2178 = vadd.f32 %v2155, %v2177
        %2179 = vmatmul.f32.gmra.mxu0 %v1988
        %v2180 = vpop.f32.mrf.mxu0
        %v2181 = vadd.f32 %v2158, %v2180
        %2182 = vdwg.mxu0
        %2183 = vmatpush.msra.mxu0 0.0
        %2184 = vmatpush.msra.mxu0 0.0
        %2185 = vmatpush.msra.mxu0 0.0
        %2186 = vmatpush.msra.mxu0 0.0
        %2187 = vmatpush.msra.mxu0 0.0
        %2188 = vmatpush.msra.mxu0 0.0
        %2189 = vmatpush.msra.mxu0 0.0
        %2190 = vmatpush.msra.mxu0 0.0
        %2191 = vmatpush.msra.mxu0 %v1967
        %2192 = vmatpush.msra.mxu0 %v1963
        %2193 = vmatpush.msra.mxu0 %v1959
        %2194 = vmatpush.msra.mxu0 %v1955
        %2195 = vmatpush.msra.mxu0 %v1951
        %2196 = vmatpush.msra.mxu0 %v1947
        %2197 = vmatpush.msra.mxu0 %v1943
        %2198 = vmatpush.msra.mxu0 %v1939
        %2199 = vmatmul.f32.gmra.mxu0 %v1995
        %v2200 = vpop.f32.mrf.mxu0
        %v2201 = vadd.f32 %v2178, %v2200
        %2202 = vmatmul.f32.gmra.mxu0 %v1997
        %v2203 = vpop.f32.mrf.mxu0
        %v2204 = vadd.f32 %v2181, %v2203
        %2205 = vdwg.mxu0
        %2206 = vmatpush.msra.mxu0 %v1872
        %2207 = vmatpush.msra.mxu0 %v1868
        %2208 = vmatpush.msra.mxu0 %v1864
        %2209 = vmatpush.msra.mxu0 %v1860
        %2210 = vmatpush.msra.mxu0 %v1856
        %2211 = vmatpush.msra.mxu0 %v1852
        %2212 = vmatpush.msra.mxu0 %v1848
        %2213 = vmatpush.msra.mxu0 %v1844
        %2214 = vmatpush.msra.mxu0 %v1840
        %2215 = vmatpush.msra.mxu0 %v1836
        %2216 = vmatpush.msra.mxu0 %v1832
        %2217 = vmatpush.msra.mxu0 %v1828
        %2218 = vmatpush.msra.mxu0 %v1824
        %2219 = vmatpush.msra.mxu0 %v1820
        %2220 = vmatpush.msra.mxu0 %v1816
        %2221 = vmatpush.msra.mxu0 %v1812
        %2222 = vmatmul.f32.gmra.mxu0 %v1978
        %v2223 = vpop.f32.mrf.mxu0
        %v2224 = vadd.f32 0.0, %v2223
        %2225 = vmatmul.f32.gmra.mxu0 %v1986
        %v2226 = vpop.f32.mrf.mxu0
        %v2227 = vadd.f32 0.0, %v2226
        %2228 = vdwg.mxu0
        %2229 = vmatpush.msra.mxu0 %v1936
        %2230 = vmatpush.msra.mxu0 %v1932
        %2231 = vmatpush.msra.mxu0 %v1928
        %2232 = vmatpush.msra.mxu0 %v1924
        %2233 = vmatpush.msra.mxu0 %v1920
        %2234 = vmatpush.msra.mxu0 %v1916
        %2235 = vmatpush.msra.mxu0 %v1912
        %2236 = vmatpush.msra.mxu0 %v1908
        %2237 = vmatpush.msra.mxu0 %v1904
        %2238 = vmatpush.msra.mxu0 %v1900
        %2239 = vmatpush.msra.mxu0 %v1896
        %2240 = vmatpush.msra.mxu0 %v1892
        %2241 = vmatpush.msra.mxu0 %v1888
        %2242 = vmatpush.msra.mxu0 %v1884
        %2243 = vmatpush.msra.mxu0 %v1880
        %2244 = vmatpush.msra.mxu0 %v1876
        %2245 = vmatmul.f32.gmra.mxu0 %v1981
        %v2246 = vpop.f32.mrf.mxu0
        %v2247 = vadd.f32 %v2224, %v2246
        %2248 = vmatmul.f32.gmra.mxu0 %v1988
        %v2249 = vpop.f32.mrf.mxu0
        %v2250 = vadd.f32 %v2227, %v2249
        %2251 = vdwg.mxu0
        %2252 = vmatpush.msra.mxu0 0.0
        %2253 = vmatpush.msra.mxu0 0.0
        %2254 = vmatpush.msra.mxu0 0.0
        %2255 = vmatpush.msra.mxu0 0.0
        %2256 = vmatpush.msra.mxu0 0.0
        %2257 = vmatpush.msra.mxu0 0.0
        %2258 = vmatpush.msra.mxu0 0.0
        %2259 = vmatpush.msra.mxu0 0.0
        %2260 = vmatpush.msra.mxu0 %v1968
        %2261 = vmatpush.msra.mxu0 %v1964
        %2262 = vmatpush.msra.mxu0 %v1960
        %2263 = vmatpush.msra.mxu0 %v1956
        %2264 = vmatpush.msra.mxu0 %v1952
        %2265 = vmatpush.msra.mxu0 %v1948
        %2266 = vmatpush.msra.mxu0 %v1944
        %2267 = vmatpush.msra.mxu0 %v1940
        %2268 = vmatmul.f32.gmra.mxu0 %v1995
        %v2269 = vpop.f32.mrf.mxu0
        %v2270 = vadd.f32 %v2247, %v2269
        %2271 = vmatmul.f32.gmra.mxu0 %v1997
        %v2272 = vpop.f32.mrf.mxu0
        %v2273 = vadd.f32 %v2250, %v2272
        %2274 = vdwg.mxu0
        %v2275 = vadd.f32 %v1590, %v2063
        %v2276 = vadd.f32 %v1659, %v2132
        %v2277 = vadd.f32 %v1728, %v2201
        %v2278 = vadd.f32 %v1797, %v2270
        %v2279 = vadd.f32 %v1593, %v2066
        %v2280 = vadd.f32 %v1662, %v2135
        %v2281 = vadd.f32 %v1731, %v2204
        %v2282 = vadd.f32 %v1800, %v2273
        %v2283 = vld [vmem:[#allocation3] sm:$0xf8]
        %v2284 = vld [vmem:[#allocation3 + $0x8] sm:$0xf8]
        %v2285 = vld [vmem:[#allocation3 + $0x10] sm:$0xf8]
        %v2286 = vld [vmem:[#allocation3 + $0x30] sm:$0x7]
        %v2287 = vld [vmem:[#allocation3 + $0x38] sm:$0x7]
        %v2288 = vld [vmem:[#allocation3 + $0x40] sm:$0x7]
        %s2289 = scalar_lea.vmem [#allocation8], 3840
        %v2290 = vld [vmem:[%s2289] sm:$0xff]
        %v2291 = vld [vmem:[%s2289 + $0x8] sm:$0xff]
        %v2292 = vld [vmem:[%s2289 + $0x10] sm:$0xff]
        %v2293 = vld [vmem:[%s2289 + $0x18] sm:$0xff]
        %v2294 = vld [vmem:[%s2289 + $0x20] sm:$0xff]
        %v2295 = vld [vmem:[%s2289 + $0x28] sm:$0xff]
        %v2296 = vld [vmem:[%s2289 + $0x30] sm:$0xff]
        %v2297 = vld [vmem:[%s2289 + $0x38] sm:$0xff]
        %v2298 = vld [vmem:[%s2289 + $0x40] sm:$0xff]
        %v2299 = vld [vmem:[%s2289 + $0x48] sm:$0xff]
        %v2300 = vld [vmem:[%s2289 + $0x50] sm:$0xff]
        %v2301 = vld [vmem:[%s2289 + $0x58] sm:$0xff]
        %v2302 = vld [vmem:[%s2289 + $0x60] sm:$0xff]
        %v2303 = vld [vmem:[%s2289 + $0x68] sm:$0xff]
        %v2304 = vld [vmem:[%s2289 + $0x70] sm:$0xff]
        %v2305 = vld [vmem:[%s2289 + $0x78] sm:$0xff]
        %v2306 = vld [vmem:[%s2289 + $0x80] sm:$0xff]
        %v2307 = vld [vmem:[%s2289 + $0x88] sm:$0xff]
        %v2308 = vld [vmem:[%s2289 + $0x90] sm:$0xff]
        %v2309 = vld [vmem:[%s2289 + $0x98] sm:$0xff]
        %v2310 = vld [vmem:[%s2289 + $0xa0] sm:$0xff]
        %v2311 = vld [vmem:[%s2289 + $0xa8] sm:$0xff]
        %v2312 = vld [vmem:[%s2289 + $0xb0] sm:$0xff]
        %v2313 = vld [vmem:[%s2289 + $0xb8] sm:$0xff]
        %v2314 = vld [vmem:[%s2289 + $0xc0] sm:$0xff]
        %v2315 = vld [vmem:[%s2289 + $0xc8] sm:$0xff]
        %v2316 = vld [vmem:[%s2289 + $0xd0] sm:$0xff]
        %v2317 = vld [vmem:[%s2289 + $0xd8] sm:$0xff]
        %v2318 = vld [vmem:[%s2289 + $0xe0] sm:$0xff]
        %v2319 = vld [vmem:[%s2289 + $0xe8] sm:$0xff]
        %v2320 = vld [vmem:[%s2289 + $0xf0] sm:$0xff]
        %v2321 = vld [vmem:[%s2289 + $0xf8] sm:$0xff]
        %v2322 = vld [vmem:[%s2289 + $0x100] sm:$0xff]
        %v2323 = vld [vmem:[%s2289 + $0x108] sm:$0xff]
        %v2324 = vld [vmem:[%s2289 + $0x110] sm:$0xff]
        %v2325 = vld [vmem:[%s2289 + $0x118] sm:$0xff]
        %v2326 = vld [vmem:[%s2289 + $0x120] sm:$0xff]
        %v2327 = vld [vmem:[%s2289 + $0x128] sm:$0xff]
        %v2328 = vld [vmem:[%s2289 + $0x130] sm:$0xff]
        %v2329 = vld [vmem:[%s2289 + $0x138] sm:$0xff]
        %v2330 = vld [vmem:[%s2289 + $0x140] sm:$0xff]
        %v2331 = vld [vmem:[%s2289 + $0x148] sm:$0xff]
        %v2332 = vld [vmem:[%s2289 + $0x150] sm:$0xff]
        %v2333 = vld [vmem:[%s2289 + $0x158] sm:$0xff]
        %v2334 = vld [vmem:[%s2289 + $0x160] sm:$0xff]
        %v2335 = vld [vmem:[%s2289 + $0x168] sm:$0xff]
        %v2336 = vld [vmem:[%s2289 + $0x170] sm:$0xff]
        %v2337 = vld [vmem:[%s2289 + $0x178] sm:$0xff]
        %v2338 = vld [vmem:[%s2289 + $0x180] sm:$0xff]
        %v2339 = vld [vmem:[%s2289 + $0x188] sm:$0xff]
        %v2340 = vld [vmem:[%s2289 + $0x190] sm:$0xff]
        %v2341 = vld [vmem:[%s2289 + $0x198] sm:$0xff]
        %v2342 = vld [vmem:[%s2289 + $0x1a0] sm:$0xff]
        %v2343 = vld [vmem:[%s2289 + $0x1a8] sm:$0xff]
        %v2344 = vld [vmem:[%s2289 + $0x1b0] sm:$0xff]
        %v2345 = vld [vmem:[%s2289 + $0x1b8] sm:$0xff]
        %v2346 = vld [vmem:[%s2289 + $0x1c0] sm:$0xff]
        %v2347 = vld [vmem:[%s2289 + $0x1c8] sm:$0xff]
        %v2348 = vld [vmem:[%s2289 + $0x1d0] sm:$0xff]
        %v2349 = vld [vmem:[%s2289 + $0x1d8] sm:$0xff]
        %v2350 = vld [vmem:[%s2289 + $0x1e0] sm:$0xff]
        %v2351 = vld [vmem:[%s2289 + $0x1e8] sm:$0xff]
        %v2352 = vld [vmem:[%s2289 + $0x1f0] sm:$0xff]
        %v2353 = vld [vmem:[%s2289 + $0x1f8] sm:$0xff]
        %v2354 = vld [vmem:[%s2289 + $0x200] sm:$0xff]
        %v2355 = vld [vmem:[%s2289 + $0x208] sm:$0xff]
        %v2356 = vld [vmem:[%s2289 + $0x210] sm:$0xff]
        %v2357 = vld [vmem:[%s2289 + $0x218] sm:$0xff]
        %v2358 = vld [vmem:[%s2289 + $0x220] sm:$0xff]
        %v2359 = vld [vmem:[%s2289 + $0x228] sm:$0xff]
        %v2360 = vld [vmem:[%s2289 + $0x230] sm:$0xff]
        %v2361 = vld [vmem:[%s2289 + $0x238] sm:$0xff]
        %v2362 = vld [vmem:[%s2289 + $0x240] sm:$0xff]
        %v2363 = vld [vmem:[%s2289 + $0x248] sm:$0xff]
        %v2364 = vld [vmem:[%s2289 + $0x250] sm:$0xff]
        %v2365 = vld [vmem:[%s2289 + $0x258] sm:$0xff]
        %v2366 = vld [vmem:[%s2289 + $0x260] sm:$0xff]
        %v2367 = vld [vmem:[%s2289 + $0x268] sm:$0xff]
        %v2368 = vld [vmem:[%s2289 + $0x270] sm:$0xff]
        %v2369 = vld [vmem:[%s2289 + $0x278] sm:$0xff]
        %v2370 = vld [vmem:[%s2289 + $0x280] sm:$0xff]
        %v2371 = vld [vmem:[%s2289 + $0x288] sm:$0xff]
        %v2372 = vld [vmem:[%s2289 + $0x290] sm:$0xff]
        %v2373 = vld [vmem:[%s2289 + $0x298] sm:$0xff]
        %v2374 = vld [vmem:[%s2289 + $0x2a0] sm:$0xff]
        %v2375 = vld [vmem:[%s2289 + $0x2a8] sm:$0xff]
        %v2376 = vld [vmem:[%s2289 + $0x2b0] sm:$0xff]
        %v2377 = vld [vmem:[%s2289 + $0x2b8] sm:$0xff]
        %v2378 = vld [vmem:[%s2289 + $0x2c0] sm:$0xff]
        %v2379 = vld [vmem:[%s2289 + $0x2c8] sm:$0xff]
        %v2380 = vld [vmem:[%s2289 + $0x2d0] sm:$0xff]
        %v2381 = vld [vmem:[%s2289 + $0x2d8] sm:$0xff]
        %v2382 = vld [vmem:[%s2289 + $0x2e0] sm:$0xff]
        %v2383 = vld [vmem:[%s2289 + $0x2e8] sm:$0xff]
        %v2384 = vld [vmem:[%s2289 + $0x2f0] sm:$0xff]
        %v2385 = vld [vmem:[%s2289 + $0x2f8] sm:$0xff]
        %v2386 = vld [vmem:[%s2289 + $0x300] sm:$0xff]
        %v2387 = vld [vmem:[%s2289 + $0x308] sm:$0xff]
        %v2388 = vld [vmem:[%s2289 + $0x310] sm:$0xff]
        %v2389 = vld [vmem:[%s2289 + $0x318] sm:$0xff]
        %v2390 = vld [vmem:[%s2289 + $0x320] sm:$0xff]
        %v2391 = vld [vmem:[%s2289 + $0x328] sm:$0xff]
        %v2392 = vld [vmem:[%s2289 + $0x330] sm:$0xff]
        %v2393 = vld [vmem:[%s2289 + $0x338] sm:$0xff]
        %v2394 = vld [vmem:[%s2289 + $0x340] sm:$0xff]
        %v2395 = vld [vmem:[%s2289 + $0x348] sm:$0xff]
        %v2396 = vld [vmem:[%s2289 + $0x350] sm:$0xff]
        %v2397 = vld [vmem:[%s2289 + $0x358] sm:$0xff]
        %v2398 = vld [vmem:[%s2289 + $0x360] sm:$0xff]
        %v2399 = vld [vmem:[%s2289 + $0x368] sm:$0xff]
        %v2400 = vld [vmem:[%s2289 + $0x370] sm:$0xff]
        %v2401 = vld [vmem:[%s2289 + $0x378] sm:$0xff]
        %v2402 = vld [vmem:[%s2289 + $0x380] sm:$0xff]
        %v2403 = vld [vmem:[%s2289 + $0x388] sm:$0xff]
        %v2404 = vld [vmem:[%s2289 + $0x390] sm:$0xff]
        %v2405 = vld [vmem:[%s2289 + $0x398] sm:$0xff]
        %v2406 = vld [vmem:[%s2289 + $0x3a0] sm:$0xff]
        %v2407 = vld [vmem:[%s2289 + $0x3a8] sm:$0xff]
        %v2408 = vld [vmem:[%s2289 + $0x3b0] sm:$0xff]
        %v2409 = vld [vmem:[%s2289 + $0x3b8] sm:$0xff]
        %v2410 = vld [vmem:[%s2289 + $0x3c0] sm:$0xff]
        %v2411 = vld [vmem:[%s2289 + $0x3c8] sm:$0xff]
        %v2412 = vld [vmem:[%s2289 + $0x3d0] sm:$0xff]
        %v2413 = vld [vmem:[%s2289 + $0x3d8] sm:$0xff]
        %v2414 = vld [vmem:[%s2289 + $0x3e0] sm:$0xff]
        %v2415 = vld [vmem:[%s2289 + $0x3e8] sm:$0xff]
        %v2416 = vld [vmem:[%s2289 + $0x3f0] sm:$0xff]
        %v2417 = vld [vmem:[%s2289 + $0x3f8] sm:$0xff]
        %v2418 = vld [vmem:[%s2289 + $0x400] sm:$0xff]
        %v2419 = vld [vmem:[%s2289 + $0x408] sm:$0xff]
        %v2420 = vld [vmem:[%s2289 + $0x410] sm:$0xff]
        %v2421 = vld [vmem:[%s2289 + $0x418] sm:$0xff]
        %v2422 = vld [vmem:[%s2289 + $0x420] sm:$0xff]
        %v2423 = vld [vmem:[%s2289 + $0x428] sm:$0xff]
        %v2424 = vld [vmem:[%s2289 + $0x430] sm:$0xff]
        %v2425 = vld [vmem:[%s2289 + $0x438] sm:$0xff]
        %v2426 = vld [vmem:[%s2289 + $0x440] sm:$0xff]
        %v2427 = vld [vmem:[%s2289 + $0x448] sm:$0xff]
        %v2428 = vld [vmem:[%s2289 + $0x450] sm:$0xff]
        %v2429 = vld [vmem:[%s2289 + $0x458] sm:$0xff]
        %v2430 = vld [vmem:[%s2289 + $0x460] sm:$0xff]
        %v2431 = vld [vmem:[%s2289 + $0x468] sm:$0xff]
        %v2432 = vld [vmem:[%s2289 + $0x470] sm:$0xff]
        %v2433 = vld [vmem:[%s2289 + $0x478] sm:$0xff]
        %v2434 = vld [vmem:[%s2289 + $0x480] sm:$0xff]
        %v2435 = vld [vmem:[%s2289 + $0x488] sm:$0xff]
        %v2436 = vld [vmem:[%s2289 + $0x490] sm:$0xff]
        %v2437 = vld [vmem:[%s2289 + $0x498] sm:$0xff]
        %v2438 = vld [vmem:[%s2289 + $0x4a0] sm:$0xff]
        %v2439 = vld [vmem:[%s2289 + $0x4a8] sm:$0xff]
        %v2440 = vld [vmem:[%s2289 + $0x4b0] sm:$0xff]
        %v2441 = vld [vmem:[%s2289 + $0x4b8] sm:$0xff]
        %v2442 = vld [vmem:[%s2289 + $0x4c0] sm:$0xff]
        %v2443 = vld [vmem:[%s2289 + $0x4c8] sm:$0xff]
        %v2444 = vld [vmem:[%s2289 + $0x4d0] sm:$0xff]
        %v2445 = vld [vmem:[%s2289 + $0x4d8] sm:$0xff]
        %v2446 = vld [vmem:[%s2289 + $0x4e0] sm:$0xff]
        %v2447 = vld [vmem:[%s2289 + $0x4e8] sm:$0xff]
        %v2448 = vld [vmem:[%s2289 + $0x4f0] sm:$0xff]
        %v2449 = vld [vmem:[%s2289 + $0x4f8] sm:$0xff]
        %vm2456 = vcmask 1044480
        %v2457 = vrot.slane %v2283, 3
        %v2458 = vrot.slane %v882, 3
        %v2459 = vsel %vm2456, %v2457, %v2458
        %v2460 = vrot.slane %v2284, 3
        %v2461 = vrot.slane %v883, 3
        %v2462 = vsel %vm2456, %v2460, %v2461
        %v2463 = vrot.slane %v2285, 3
        %v2464 = vrot.slane %v884, 3
        %v2465 = vsel %vm2456, %v2463, %v2464
        %v2466 = vrot.slane %v2286, 3
        %v2467 = vsel %vm2456, %v2458, %v2466
        %v2468 = vrot.slane %v2287, 3
        %v2469 = vsel %vm2456, %v2461, %v2468
        %v2470 = vrot.slane %v2288, 3
        %v2471 = vsel %vm2456, %v2464, %v2470
        %v2476 = vsel %vm407, %v2465, 0
        %v2478 = vsel %vm407, %v2471, 0
        %2480 = vmatpush.msra.mxu0 %v2350
        %2481 = vmatpush.msra.mxu0 %v2346
        %2482 = vmatpush.msra.mxu0 %v2342
        %2483 = vmatpush.msra.mxu0 %v2338
        %2484 = vmatpush.msra.mxu0 %v2334
        %2485 = vmatpush.msra.mxu0 %v2330
        %2486 = vmatpush.msra.mxu0 %v2326
        %2487 = vmatpush.msra.mxu0 %v2322
        %2488 = vmatpush.msra.mxu0 %v2318
        %2489 = vmatpush.msra.mxu0 %v2314
        %2490 = vmatpush.msra.mxu0 %v2310
        %2491 = vmatpush.msra.mxu0 %v2306
        %2492 = vmatpush.msra.mxu0 %v2302
        %2493 = vmatpush.msra.mxu0 %v2298
        %2494 = vmatpush.msra.mxu0 %v2294
        %2495 = vmatpush.msra.mxu0 %v2290
        %2496 = vmatmul.f32.gmra.mxu0 %v2459
        %v2497 = vpop.f32.mrf.mxu0
        %v2498 = vadd.f32 0.0, %v2497
        %2499 = vmatmul.f32.gmra.mxu0 %v2467
        %v2500 = vpop.f32.mrf.mxu0
        %v2501 = vadd.f32 0.0, %v2500
        %2502 = vdwg.mxu0
        %2503 = vmatpush.msra.mxu0 %v2414
        %2504 = vmatpush.msra.mxu0 %v2410
        %2505 = vmatpush.msra.mxu0 %v2406
        %2506 = vmatpush.msra.mxu0 %v2402
        %2507 = vmatpush.msra.mxu0 %v2398
        %2508 = vmatpush.msra.mxu0 %v2394
        %2509 = vmatpush.msra.mxu0 %v2390
        %2510 = vmatpush.msra.mxu0 %v2386
        %2511 = vmatpush.msra.mxu0 %v2382
        %2512 = vmatpush.msra.mxu0 %v2378
        %2513 = vmatpush.msra.mxu0 %v2374
        %2514 = vmatpush.msra.mxu0 %v2370
        %2515 = vmatpush.msra.mxu0 %v2366
        %2516 = vmatpush.msra.mxu0 %v2362
        %2517 = vmatpush.msra.mxu0 %v2358
        %2518 = vmatpush.msra.mxu0 %v2354
        %2519 = vmatmul.f32.gmra.mxu0 %v2462
        %v2520 = vpop.f32.mrf.mxu0
        %v2521 = vadd.f32 %v2498, %v2520
        %2522 = vmatmul.f32.gmra.mxu0 %v2469
        %v2523 = vpop.f32.mrf.mxu0
        %v2524 = vadd.f32 %v2501, %v2523
        %2525 = vdwg.mxu0
        %2526 = vmatpush.msra.mxu0 0.0
        %2527 = vmatpush.msra.mxu0 0.0
        %2528 = vmatpush.msra.mxu0 0.0
        %2529 = vmatpush.msra.mxu0 0.0
        %2530 = vmatpush.msra.mxu0 0.0
        %2531 = vmatpush.msra.mxu0 0.0
        %2532 = vmatpush.msra.mxu0 0.0
        %2533 = vmatpush.msra.mxu0 0.0
        %2534 = vmatpush.msra.mxu0 %v2446
        %2535 = vmatpush.msra.mxu0 %v2442
        %2536 = vmatpush.msra.mxu0 %v2438
        %2537 = vmatpush.msra.mxu0 %v2434
        %2538 = vmatpush.msra.mxu0 %v2430
        %2539 = vmatpush.msra.mxu0 %v2426
        %2540 = vmatpush.msra.mxu0 %v2422
        %2541 = vmatpush.msra.mxu0 %v2418
        %2542 = vmatmul.f32.gmra.mxu0 %v2476
        %v2543 = vpop.f32.mrf.mxu0
        %v2544 = vadd.f32 %v2521, %v2543
        %2545 = vmatmul.f32.gmra.mxu0 %v2478
        %v2546 = vpop.f32.mrf.mxu0
        %v2547 = vadd.f32 %v2524, %v2546
        %2548 = vdwg.mxu0
        %2549 = vmatpush.msra.mxu0 %v2351
        %2550 = vmatpush.msra.mxu0 %v2347
        %2551 = vmatpush.msra.mxu0 %v2343
        %2552 = vmatpush.msra.mxu0 %v2339
        %2553 = vmatpush.msra.mxu0 %v2335
        %2554 = vmatpush.msra.mxu0 %v2331
        %2555 = vmatpush.msra.mxu0 %v2327
        %2556 = vmatpush.msra.mxu0 %v2323
        %2557 = vmatpush.msra.mxu0 %v2319
        %2558 = vmatpush.msra.mxu0 %v2315
        %2559 = vmatpush.msra.mxu0 %v2311
        %2560 = vmatpush.msra.mxu0 %v2307
        %2561 = vmatpush.msra.mxu0 %v2303
        %2562 = vmatpush.msra.mxu0 %v2299
        %2563 = vmatpush.msra.mxu0 %v2295
        %2564 = vmatpush.msra.mxu0 %v2291
        %2565 = vmatmul.f32.gmra.mxu0 %v2459
        %v2566 = vpop.f32.mrf.mxu0
        %v2567 = vadd.f32 0.0, %v2566
        %2568 = vmatmul.f32.gmra.mxu0 %v2467
        %v2569 = vpop.f32.mrf.mxu0
        %v2570 = vadd.f32 0.0, %v2569
        %2571 = vdwg.mxu0
        %2572 = vmatpush.msra.mxu0 %v2415
        %2573 = vmatpush.msra.mxu0 %v2411
        %2574 = vmatpush.msra.mxu0 %v2407
        %2575 = vmatpush.msra.mxu0 %v2403
        %2576 = vmatpush.msra.mxu0 %v2399
        %2577 = vmatpush.msra.mxu0 %v2395
        %2578 = vmatpush.msra.mxu0 %v2391
        %2579 = vmatpush.msra.mxu0 %v2387
        %2580 = vmatpush.msra.mxu0 %v2383
        %2581 = vmatpush.msra.mxu0 %v2379
        %2582 = vmatpush.msra.mxu0 %v2375
        %2583 = vmatpush.msra.mxu0 %v2371
        %2584 = vmatpush.msra.mxu0 %v2367
        %2585 = vmatpush.msra.mxu0 %v2363
        %2586 = vmatpush.msra.mxu0 %v2359
        %2587 = vmatpush.msra.mxu0 %v2355
        %2588 = vmatmul.f32.gmra.mxu0 %v2462
        %v2589 = vpop.f32.mrf.mxu0
        %v2590 = vadd.f32 %v2567, %v2589
        %2591 = vmatmul.f32.gmra.mxu0 %v2469
        %v2592 = vpop.f32.mrf.mxu0
        %v2593 = vadd.f32 %v2570, %v2592
        %2594 = vdwg.mxu0
        %2595 = vmatpush.msra.mxu0 0.0
        %2596 = vmatpush.msra.mxu0 0.0
        %2597 = vmatpush.msra.mxu0 0.0
        %2598 = vmatpush.msra.mxu0 0.0
        %2599 = vmatpush.msra.mxu0 0.0
        %2600 = vmatpush.msra.mxu0 0.0
        %2601 = vmatpush.msra.mxu0 0.0
        %2602 = vmatpush.msra.mxu0 0.0
        %2603 = vmatpush.msra.mxu0 %v2447
        %2604 = vmatpush.msra.mxu0 %v2443
        %2605 = vmatpush.msra.mxu0 %v2439
        %2606 = vmatpush.msra.mxu0 %v2435
        %2607 = vmatpush.msra.mxu0 %v2431
        %2608 = vmatpush.msra.mxu0 %v2427
        %2609 = vmatpush.msra.mxu0 %v2423
        %2610 = vmatpush.msra.mxu0 %v2419
        %2611 = vmatmul.f32.gmra.mxu0 %v2476
        %v2612 = vpop.f32.mrf.mxu0
        %v2613 = vadd.f32 %v2590, %v2612
        %2614 = vmatmul.f32.gmra.mxu0 %v2478
        %v2615 = vpop.f32.mrf.mxu0
        %v2616 = vadd.f32 %v2593, %v2615
        %2617 = vdwg.mxu0
        %2618 = vmatpush.msra.mxu0 %v2352
        %2619 = vmatpush.msra.mxu0 %v2348
        %2620 = vmatpush.msra.mxu0 %v2344
        %2621 = vmatpush.msra.mxu0 %v2340
        %2622 = vmatpush.msra.mxu0 %v2336
        %2623 = vmatpush.msra.mxu0 %v2332
        %2624 = vmatpush.msra.mxu0 %v2328
        %2625 = vmatpush.msra.mxu0 %v2324
        %2626 = vmatpush.msra.mxu0 %v2320
        %2627 = vmatpush.msra.mxu0 %v2316
        %2628 = vmatpush.msra.mxu0 %v2312
        %2629 = vmatpush.msra.mxu0 %v2308
        %2630 = vmatpush.msra.mxu0 %v2304
        %2631 = vmatpush.msra.mxu0 %v2300
        %2632 = vmatpush.msra.mxu0 %v2296
        %2633 = vmatpush.msra.mxu0 %v2292
        %2634 = vmatmul.f32.gmra.mxu0 %v2459
        %v2635 = vpop.f32.mrf.mxu0
        %v2636 = vadd.f32 0.0, %v2635
        %2637 = vmatmul.f32.gmra.mxu0 %v2467
        %v2638 = vpop.f32.mrf.mxu0
        %v2639 = vadd.f32 0.0, %v2638
        %2640 = vdwg.mxu0
        %2641 = vmatpush.msra.mxu0 %v2416
        %2642 = vmatpush.msra.mxu0 %v2412
        %2643 = vmatpush.msra.mxu0 %v2408
        %2644 = vmatpush.msra.mxu0 %v2404
        %2645 = vmatpush.msra.mxu0 %v2400
        %2646 = vmatpush.msra.mxu0 %v2396
        %2647 = vmatpush.msra.mxu0 %v2392
        %2648 = vmatpush.msra.mxu0 %v2388
        %2649 = vmatpush.msra.mxu0 %v2384
        %2650 = vmatpush.msra.mxu0 %v2380
        %2651 = vmatpush.msra.mxu0 %v2376
        %2652 = vmatpush.msra.mxu0 %v2372
        %2653 = vmatpush.msra.mxu0 %v2368
        %2654 = vmatpush.msra.mxu0 %v2364
        %2655 = vmatpush.msra.mxu0 %v2360
        %2656 = vmatpush.msra.mxu0 %v2356
        %2657 = vmatmul.f32.gmra.mxu0 %v2462
        %v2658 = vpop.f32.mrf.mxu0
        %v2659 = vadd.f32 %v2636, %v2658
        %2660 = vmatmul.f32.gmra.mxu0 %v2469
        %v2661 = vpop.f32.mrf.mxu0
        %v2662 = vadd.f32 %v2639, %v2661
        %2663 = vdwg.mxu0
        %2664 = vmatpush.msra.mxu0 0.0
        %2665 = vmatpush.msra.mxu0 0.0
        %2666 = vmatpush.msra.mxu0 0.0
        %2667 = vmatpush.msra.mxu0 0.0
        %2668 = vmatpush.msra.mxu0 0.0
        %2669 = vmatpush.msra.mxu0 0.0
        %2670 = vmatpush.msra.mxu0 0.0
        %2671 = vmatpush.msra.mxu0 0.0
        %2672 = vmatpush.msra.mxu0 %v2448
        %2673 = vmatpush.msra.mxu0 %v2444
        %2674 = vmatpush.msra.mxu0 %v2440
        %2675 = vmatpush.msra.mxu0 %v2436
        %2676 = vmatpush.msra.mxu0 %v2432
        %2677 = vmatpush.msra.mxu0 %v2428
        %2678 = vmatpush.msra.mxu0 %v2424
        %2679 = vmatpush.msra.mxu0 %v2420
        %2680 = vmatmul.f32.gmra.mxu0 %v2476
        %v2681 = vpop.f32.mrf.mxu0
        %v2682 = vadd.f32 %v2659, %v2681
        %2683 = vmatmul.f32.gmra.mxu0 %v2478
        %v2684 = vpop.f32.mrf.mxu0
        %v2685 = vadd.f32 %v2662, %v2684
        %2686 = vdwg.mxu0
        %2687 = vmatpush.msra.mxu0 %v2353
        %2688 = vmatpush.msra.mxu0 %v2349
        %2689 = vmatpush.msra.mxu0 %v2345
        %2690 = vmatpush.msra.mxu0 %v2341
        %2691 = vmatpush.msra.mxu0 %v2337
        %2692 = vmatpush.msra.mxu0 %v2333
        %2693 = vmatpush.msra.mxu0 %v2329
        %2694 = vmatpush.msra.mxu0 %v2325
        %2695 = vmatpush.msra.mxu0 %v2321
        %2696 = vmatpush.msra.mxu0 %v2317
        %2697 = vmatpush.msra.mxu0 %v2313
        %2698 = vmatpush.msra.mxu0 %v2309
        %2699 = vmatpush.msra.mxu0 %v2305
        %2700 = vmatpush.msra.mxu0 %v2301
        %2701 = vmatpush.msra.mxu0 %v2297
        %2702 = vmatpush.msra.mxu0 %v2293
        %2703 = vmatmul.f32.gmra.mxu0 %v2459
        %v2704 = vpop.f32.mrf.mxu0
        %v2705 = vadd.f32 0.0, %v2704
        %2706 = vmatmul.f32.gmra.mxu0 %v2467
        %v2707 = vpop.f32.mrf.mxu0
        %v2708 = vadd.f32 0.0, %v2707
        %2709 = vdwg.mxu0
        %2710 = vmatpush.msra.mxu0 %v2417
        %2711 = vmatpush.msra.mxu0 %v2413
        %2712 = vmatpush.msra.mxu0 %v2409
        %2713 = vmatpush.msra.mxu0 %v2405
        %2714 = vmatpush.msra.mxu0 %v2401
        %2715 = vmatpush.msra.mxu0 %v2397
        %2716 = vmatpush.msra.mxu0 %v2393
        %2717 = vmatpush.msra.mxu0 %v2389
        %2718 = vmatpush.msra.mxu0 %v2385
        %2719 = vmatpush.msra.mxu0 %v2381
        %2720 = vmatpush.msra.mxu0 %v2377
        %2721 = vmatpush.msra.mxu0 %v2373
        %2722 = vmatpush.msra.mxu0 %v2369
        %2723 = vmatpush.msra.mxu0 %v2365
        %2724 = vmatpush.msra.mxu0 %v2361
        %2725 = vmatpush.msra.mxu0 %v2357
        %2726 = vmatmul.f32.gmra.mxu0 %v2462
        %v2727 = vpop.f32.mrf.mxu0
        %v2728 = vadd.f32 %v2705, %v2727
        %2729 = vmatmul.f32.gmra.mxu0 %v2469
        %v2730 = vpop.f32.mrf.mxu0
        %v2731 = vadd.f32 %v2708, %v2730
        %2732 = vdwg.mxu0
        %2733 = vmatpush.msra.mxu0 0.0
        %2734 = vmatpush.msra.mxu0 0.0
        %2735 = vmatpush.msra.mxu0 0.0
        %2736 = vmatpush.msra.mxu0 0.0
        %2737 = vmatpush.msra.mxu0 0.0
        %2738 = vmatpush.msra.mxu0 0.0
        %2739 = vmatpush.msra.mxu0 0.0
        %2740 = vmatpush.msra.mxu0 0.0
        %2741 = vmatpush.msra.mxu0 %v2449
        %2742 = vmatpush.msra.mxu0 %v2445
        %2743 = vmatpush.msra.mxu0 %v2441
        %2744 = vmatpush.msra.mxu0 %v2437
        %2745 = vmatpush.msra.mxu0 %v2433
        %2746 = vmatpush.msra.mxu0 %v2429
        %2747 = vmatpush.msra.mxu0 %v2425
        %2748 = vmatpush.msra.mxu0 %v2421
        %2749 = vmatmul.f32.gmra.mxu0 %v2476
        %v2750 = vpop.f32.mrf.mxu0
        %v2751 = vadd.f32 %v2728, %v2750
        %2752 = vmatmul.f32.gmra.mxu0 %v2478
        %v2753 = vpop.f32.mrf.mxu0
        %v2754 = vadd.f32 %v2731, %v2753
        %2755 = vdwg.mxu0
        %v2756 = vadd.f32 %v2275, %v2544
        %v2757 = vadd.f32 %v2276, %v2613
        %v2758 = vadd.f32 %v2277, %v2682
        %v2759 = vadd.f32 %v2278, %v2751
        %v2760 = vadd.f32 %v2279, %v2547
        %v2761 = vadd.f32 %v2280, %v2616
        %v2762 = vadd.f32 %v2281, %v2685
        %v2763 = vadd.f32 %v2282, %v2754
        %v2764 = vld [vmem:[#allocation3] sm:$0xf0]
        %v2765 = vld [vmem:[#allocation3 + $0x8] sm:$0xf0]
        %v2766 = vld [vmem:[#allocation3 + $0x10] sm:$0xf0]
        %v2767 = vld [vmem:[#allocation3 + $0x30] sm:$0xf]
        %v2768 = vld [vmem:[#allocation3 + $0x38] sm:$0xf]
        %v2769 = vld [vmem:[#allocation3 + $0x40] sm:$0xf]
        %s2770 = scalar_lea.vmem [#allocation8], 5120
        %v2771 = vld [vmem:[%s2770] sm:$0xff]
        %v2772 = vld [vmem:[%s2770 + $0x8] sm:$0xff]
        %v2773 = vld [vmem:[%s2770 + $0x10] sm:$0xff]
        %v2774 = vld [vmem:[%s2770 + $0x18] sm:$0xff]
        %v2775 = vld [vmem:[%s2770 + $0x20] sm:$0xff]
        %v2776 = vld [vmem:[%s2770 + $0x28] sm:$0xff]
        %v2777 = vld [vmem:[%s2770 + $0x30] sm:$0xff]
        %v2778 = vld [vmem:[%s2770 + $0x38] sm:$0xff]
        %v2779 = vld [vmem:[%s2770 + $0x40] sm:$0xff]
        %v2780 = vld [vmem:[%s2770 + $0x48] sm:$0xff]
        %v2781 = vld [vmem:[%s2770 + $0x50] sm:$0xff]
        %v2782 = vld [vmem:[%s2770 + $0x58] sm:$0xff]
        %v2783 = vld [vmem:[%s2770 + $0x60] sm:$0xff]
        %v2784 = vld [vmem:[%s2770 + $0x68] sm:$0xff]
        %v2785 = vld [vmem:[%s2770 + $0x70] sm:$0xff]
        %v2786 = vld [vmem:[%s2770 + $0x78] sm:$0xff]
        %v2787 = vld [vmem:[%s2770 + $0x80] sm:$0xff]
        %v2788 = vld [vmem:[%s2770 + $0x88] sm:$0xff]
        %v2789 = vld [vmem:[%s2770 + $0x90] sm:$0xff]
        %v2790 = vld [vmem:[%s2770 + $0x98] sm:$0xff]
        %v2791 = vld [vmem:[%s2770 + $0xa0] sm:$0xff]
        %v2792 = vld [vmem:[%s2770 + $0xa8] sm:$0xff]
        %v2793 = vld [vmem:[%s2770 + $0xb0] sm:$0xff]
        %v2794 = vld [vmem:[%s2770 + $0xb8] sm:$0xff]
        %v2795 = vld [vmem:[%s2770 + $0xc0] sm:$0xff]
        %v2796 = vld [vmem:[%s2770 + $0xc8] sm:$0xff]
        %v2797 = vld [vmem:[%s2770 + $0xd0] sm:$0xff]
        %v2798 = vld [vmem:[%s2770 + $0xd8] sm:$0xff]
        %v2799 = vld [vmem:[%s2770 + $0xe0] sm:$0xff]
        %v2800 = vld [vmem:[%s2770 + $0xe8] sm:$0xff]
        %v2801 = vld [vmem:[%s2770 + $0xf0] sm:$0xff]
        %v2802 = vld [vmem:[%s2770 + $0xf8] sm:$0xff]
        %v2803 = vld [vmem:[%s2770 + $0x100] sm:$0xff]
        %v2804 = vld [vmem:[%s2770 + $0x108] sm:$0xff]
        %v2805 = vld [vmem:[%s2770 + $0x110] sm:$0xff]
        %v2806 = vld [vmem:[%s2770 + $0x118] sm:$0xff]
        %v2807 = vld [vmem:[%s2770 + $0x120] sm:$0xff]
        %v2808 = vld [vmem:[%s2770 + $0x128] sm:$0xff]
        %v2809 = vld [vmem:[%s2770 + $0x130] sm:$0xff]
        %v2810 = vld [vmem:[%s2770 + $0x138] sm:$0xff]
        %v2811 = vld [vmem:[%s2770 + $0x140] sm:$0xff]
        %v2812 = vld [vmem:[%s2770 + $0x148] sm:$0xff]
        %v2813 = vld [vmem:[%s2770 + $0x150] sm:$0xff]
        %v2814 = vld [vmem:[%s2770 + $0x158] sm:$0xff]
        %v2815 = vld [vmem:[%s2770 + $0x160] sm:$0xff]
        %v2816 = vld [vmem:[%s2770 + $0x168] sm:$0xff]
        %v2817 = vld [vmem:[%s2770 + $0x170] sm:$0xff]
        %v2818 = vld [vmem:[%s2770 + $0x178] sm:$0xff]
        %v2819 = vld [vmem:[%s2770 + $0x180] sm:$0xff]
        %v2820 = vld [vmem:[%s2770 + $0x188] sm:$0xff]
        %v2821 = vld [vmem:[%s2770 + $0x190] sm:$0xff]
        %v2822 = vld [vmem:[%s2770 + $0x198] sm:$0xff]
        %v2823 = vld [vmem:[%s2770 + $0x1a0] sm:$0xff]
        %v2824 = vld [vmem:[%s2770 + $0x1a8] sm:$0xff]
        %v2825 = vld [vmem:[%s2770 + $0x1b0] sm:$0xff]
        %v2826 = vld [vmem:[%s2770 + $0x1b8] sm:$0xff]
        %v2827 = vld [vmem:[%s2770 + $0x1c0] sm:$0xff]
        %v2828 = vld [vmem:[%s2770 + $0x1c8] sm:$0xff]
        %v2829 = vld [vmem:[%s2770 + $0x1d0] sm:$0xff]
        %v2830 = vld [vmem:[%s2770 + $0x1d8] sm:$0xff]
        %v2831 = vld [vmem:[%s2770 + $0x1e0] sm:$0xff]
        %v2832 = vld [vmem:[%s2770 + $0x1e8] sm:$0xff]
        %v2833 = vld [vmem:[%s2770 + $0x1f0] sm:$0xff]
        %v2834 = vld [vmem:[%s2770 + $0x1f8] sm:$0xff]
        %v2835 = vld [vmem:[%s2770 + $0x200] sm:$0xff]
        %v2836 = vld [vmem:[%s2770 + $0x208] sm:$0xff]
        %v2837 = vld [vmem:[%s2770 + $0x210] sm:$0xff]
        %v2838 = vld [vmem:[%s2770 + $0x218] sm:$0xff]
        %v2839 = vld [vmem:[%s2770 + $0x220] sm:$0xff]
        %v2840 = vld [vmem:[%s2770 + $0x228] sm:$0xff]
        %v2841 = vld [vmem:[%s2770 + $0x230] sm:$0xff]
        %v2842 = vld [vmem:[%s2770 + $0x238] sm:$0xff]
        %v2843 = vld [vmem:[%s2770 + $0x240] sm:$0xff]
        %v2844 = vld [vmem:[%s2770 + $0x248] sm:$0xff]
        %v2845 = vld [vmem:[%s2770 + $0x250] sm:$0xff]
        %v2846 = vld [vmem:[%s2770 + $0x258] sm:$0xff]
        %v2847 = vld [vmem:[%s2770 + $0x260] sm:$0xff]
        %v2848 = vld [vmem:[%s2770 + $0x268] sm:$0xff]
        %v2849 = vld [vmem:[%s2770 + $0x270] sm:$0xff]
        %v2850 = vld [vmem:[%s2770 + $0x278] sm:$0xff]
        %v2851 = vld [vmem:[%s2770 + $0x280] sm:$0xff]
        %v2852 = vld [vmem:[%s2770 + $0x288] sm:$0xff]
        %v2853 = vld [vmem:[%s2770 + $0x290] sm:$0xff]
        %v2854 = vld [vmem:[%s2770 + $0x298] sm:$0xff]
        %v2855 = vld [vmem:[%s2770 + $0x2a0] sm:$0xff]
        %v2856 = vld [vmem:[%s2770 + $0x2a8] sm:$0xff]
        %v2857 = vld [vmem:[%s2770 + $0x2b0] sm:$0xff]
        %v2858 = vld [vmem:[%s2770 + $0x2b8] sm:$0xff]
        %v2859 = vld [vmem:[%s2770 + $0x2c0] sm:$0xff]
        %v2860 = vld [vmem:[%s2770 + $0x2c8] sm:$0xff]
        %v2861 = vld [vmem:[%s2770 + $0x2d0] sm:$0xff]
        %v2862 = vld [vmem:[%s2770 + $0x2d8] sm:$0xff]
        %v2863 = vld [vmem:[%s2770 + $0x2e0] sm:$0xff]
        %v2864 = vld [vmem:[%s2770 + $0x2e8] sm:$0xff]
        %v2865 = vld [vmem:[%s2770 + $0x2f0] sm:$0xff]
        %v2866 = vld [vmem:[%s2770 + $0x2f8] sm:$0xff]
        %v2867 = vld [vmem:[%s2770 + $0x300] sm:$0xff]
        %v2868 = vld [vmem:[%s2770 + $0x308] sm:$0xff]
        %v2869 = vld [vmem:[%s2770 + $0x310] sm:$0xff]
        %v2870 = vld [vmem:[%s2770 + $0x318] sm:$0xff]
        %v2871 = vld [vmem:[%s2770 + $0x320] sm:$0xff]
        %v2872 = vld [vmem:[%s2770 + $0x328] sm:$0xff]
        %v2873 = vld [vmem:[%s2770 + $0x330] sm:$0xff]
        %v2874 = vld [vmem:[%s2770 + $0x338] sm:$0xff]
        %v2875 = vld [vmem:[%s2770 + $0x340] sm:$0xff]
        %v2876 = vld [vmem:[%s2770 + $0x348] sm:$0xff]
        %v2877 = vld [vmem:[%s2770 + $0x350] sm:$0xff]
        %v2878 = vld [vmem:[%s2770 + $0x358] sm:$0xff]
        %v2879 = vld [vmem:[%s2770 + $0x360] sm:$0xff]
        %v2880 = vld [vmem:[%s2770 + $0x368] sm:$0xff]
        %v2881 = vld [vmem:[%s2770 + $0x370] sm:$0xff]
        %v2882 = vld [vmem:[%s2770 + $0x378] sm:$0xff]
        %v2883 = vld [vmem:[%s2770 + $0x380] sm:$0xff]
        %v2884 = vld [vmem:[%s2770 + $0x388] sm:$0xff]
        %v2885 = vld [vmem:[%s2770 + $0x390] sm:$0xff]
        %v2886 = vld [vmem:[%s2770 + $0x398] sm:$0xff]
        %v2887 = vld [vmem:[%s2770 + $0x3a0] sm:$0xff]
        %v2888 = vld [vmem:[%s2770 + $0x3a8] sm:$0xff]
        %v2889 = vld [vmem:[%s2770 + $0x3b0] sm:$0xff]
        %v2890 = vld [vmem:[%s2770 + $0x3b8] sm:$0xff]
        %v2891 = vld [vmem:[%s2770 + $0x3c0] sm:$0xff]
        %v2892 = vld [vmem:[%s2770 + $0x3c8] sm:$0xff]
        %v2893 = vld [vmem:[%s2770 + $0x3d0] sm:$0xff]
        %v2894 = vld [vmem:[%s2770 + $0x3d8] sm:$0xff]
        %v2895 = vld [vmem:[%s2770 + $0x3e0] sm:$0xff]
        %v2896 = vld [vmem:[%s2770 + $0x3e8] sm:$0xff]
        %v2897 = vld [vmem:[%s2770 + $0x3f0] sm:$0xff]
        %v2898 = vld [vmem:[%s2770 + $0x3f8] sm:$0xff]
        %v2899 = vld [vmem:[%s2770 + $0x400] sm:$0xff]
        %v2900 = vld [vmem:[%s2770 + $0x408] sm:$0xff]
        %v2901 = vld [vmem:[%s2770 + $0x410] sm:$0xff]
        %v2902 = vld [vmem:[%s2770 + $0x418] sm:$0xff]
        %v2903 = vld [vmem:[%s2770 + $0x420] sm:$0xff]
        %v2904 = vld [vmem:[%s2770 + $0x428] sm:$0xff]
        %v2905 = vld [vmem:[%s2770 + $0x430] sm:$0xff]
        %v2906 = vld [vmem:[%s2770 + $0x438] sm:$0xff]
        %v2907 = vld [vmem:[%s2770 + $0x440] sm:$0xff]
        %v2908 = vld [vmem:[%s2770 + $0x448] sm:$0xff]
        %v2909 = vld [vmem:[%s2770 + $0x450] sm:$0xff]
        %v2910 = vld [vmem:[%s2770 + $0x458] sm:$0xff]
        %v2911 = vld [vmem:[%s2770 + $0x460] sm:$0xff]
        %v2912 = vld [vmem:[%s2770 + $0x468] sm:$0xff]
        %v2913 = vld [vmem:[%s2770 + $0x470] sm:$0xff]
        %v2914 = vld [vmem:[%s2770 + $0x478] sm:$0xff]
        %v2915 = vld [vmem:[%s2770 + $0x480] sm:$0xff]
        %v2916 = vld [vmem:[%s2770 + $0x488] sm:$0xff]
        %v2917 = vld [vmem:[%s2770 + $0x490] sm:$0xff]
        %v2918 = vld [vmem:[%s2770 + $0x498] sm:$0xff]
        %v2919 = vld [vmem:[%s2770 + $0x4a0] sm:$0xff]
        %v2920 = vld [vmem:[%s2770 + $0x4a8] sm:$0xff]
        %v2921 = vld [vmem:[%s2770 + $0x4b0] sm:$0xff]
        %v2922 = vld [vmem:[%s2770 + $0x4b8] sm:$0xff]
        %v2923 = vld [vmem:[%s2770 + $0x4c0] sm:$0xff]
        %v2924 = vld [vmem:[%s2770 + $0x4c8] sm:$0xff]
        %v2925 = vld [vmem:[%s2770 + $0x4d0] sm:$0xff]
        %v2926 = vld [vmem:[%s2770 + $0x4d8] sm:$0xff]
        %v2927 = vld [vmem:[%s2770 + $0x4e0] sm:$0xff]
        %v2928 = vld [vmem:[%s2770 + $0x4e8] sm:$0xff]
        %v2929 = vld [vmem:[%s2770 + $0x4f0] sm:$0xff]
        %v2930 = vld [vmem:[%s2770 + $0x4f8] sm:$0xff]
        %v2937 = vrot.slane %v2764, 4
        %v2938 = vrot.slane %v882, 4
        %v2939 = vsel %vm488, %v2937, %v2938
        %v2940 = vrot.slane %v2765, 4
        %v2941 = vrot.slane %v883, 4
        %v2942 = vsel %vm488, %v2940, %v2941
        %v2943 = vrot.slane %v2766, 4
        %v2944 = vrot.slane %v884, 4
        %v2945 = vsel %vm488, %v2943, %v2944
        %v2946 = vrot.slane %v2767, 4
        %v2947 = vsel %vm488, %v2938, %v2946
        %v2948 = vrot.slane %v2768, 4
        %v2949 = vsel %vm488, %v2941, %v2948
        %v2950 = vrot.slane %v2769, 4
        %v2951 = vsel %vm488, %v2944, %v2950
        %v2956 = vsel %vm407, %v2945, 0
        %v2958 = vsel %vm407, %v2951, 0
        %2960 = vmatpush.msra.mxu0 %v2831
        %2961 = vmatpush.msra.mxu0 %v2827
        %2962 = vmatpush.msra.mxu0 %v2823
        %2963 = vmatpush.msra.mxu0 %v2819
        %2964 = vmatpush.msra.mxu0 %v2815
        %2965 = vmatpush.msra.mxu0 %v2811
        %2966 = vmatpush.msra.mxu0 %v2807
        %2967 = vmatpush.msra.mxu0 %v2803
        %2968 = vmatpush.msra.mxu0 %v2799
        %2969 = vmatpush.msra.mxu0 %v2795
        %2970 = vmatpush.msra.mxu0 %v2791
        %2971 = vmatpush.msra.mxu0 %v2787
        %2972 = vmatpush.msra.mxu0 %v2783
        %2973 = vmatpush.msra.mxu0 %v2779
        %2974 = vmatpush.msra.mxu0 %v2775
        %2975 = vmatpush.msra.mxu0 %v2771
        %2976 = vmatmul.f32.gmra.mxu0 %v2939
        %v2977 = vpop.f32.mrf.mxu0
        %v2978 = vadd.f32 0.0, %v2977
        %2979 = vmatmul.f32.gmra.mxu0 %v2947
        %v2980 = vpop.f32.mrf.mxu0
        %v2981 = vadd.f32 0.0, %v2980
        %2982 = vdwg.mxu0
        %2983 = vmatpush.msra.mxu0 %v2895
        %2984 = vmatpush.msra.mxu0 %v2891
        %2985 = vmatpush.msra.mxu0 %v2887
        %2986 = vmatpush.msra.mxu0 %v2883
        %2987 = vmatpush.msra.mxu0 %v2879
        %2988 = vmatpush.msra.mxu0 %v2875
        %2989 = vmatpush.msra.mxu0 %v2871
        %2990 = vmatpush.msra.mxu0 %v2867
        %2991 = vmatpush.msra.mxu0 %v2863
        %2992 = vmatpush.msra.mxu0 %v2859
        %2993 = vmatpush.msra.mxu0 %v2855
        %2994 = vmatpush.msra.mxu0 %v2851
        %2995 = vmatpush.msra.mxu0 %v2847
        %2996 = vmatpush.msra.mxu0 %v2843
        %2997 = vmatpush.msra.mxu0 %v2839
        %2998 = vmatpush.msra.mxu0 %v2835
        %2999 = vmatmul.f32.gmra.mxu0 %v2942
        %v3000 = vpop.f32.mrf.mxu0
        %v3001 = vadd.f32 %v2978, %v3000
        %3002 = vmatmul.f32.gmra.mxu0 %v2949
        %v3003 = vpop.f32.mrf.mxu0
        %v3004 = vadd.f32 %v2981, %v3003
        %3005 = vdwg.mxu0
        %3006 = vmatpush.msra.mxu0 0.0
        %3007 = vmatpush.msra.mxu0 0.0
        %3008 = vmatpush.msra.mxu0 0.0
        %3009 = vmatpush.msra.mxu0 0.0
        %3010 = vmatpush.msra.mxu0 0.0
        %3011 = vmatpush.msra.mxu0 0.0
        %3012 = vmatpush.msra.mxu0 0.0
        %3013 = vmatpush.msra.mxu0 0.0
        %3014 = vmatpush.msra.mxu0 %v2927
        %3015 = vmatpush.msra.mxu0 %v2923
        %3016 = vmatpush.msra.mxu0 %v2919
        %3017 = vmatpush.msra.mxu0 %v2915
        %3018 = vmatpush.msra.mxu0 %v2911
        %3019 = vmatpush.msra.mxu0 %v2907
        %3020 = vmatpush.msra.mxu0 %v2903
        %3021 = vmatpush.msra.mxu0 %v2899
        %3022 = vmatmul.f32.gmra.mxu0 %v2956
        %v3023 = vpop.f32.mrf.mxu0
        %v3024 = vadd.f32 %v3001, %v3023
        %3025 = vmatmul.f32.gmra.mxu0 %v2958
        %v3026 = vpop.f32.mrf.mxu0
        %v3027 = vadd.f32 %v3004, %v3026
        %3028 = vdwg.mxu0
        %3029 = vmatpush.msra.mxu0 %v2832
        %3030 = vmatpush.msra.mxu0 %v2828
        %3031 = vmatpush.msra.mxu0 %v2824
        %3032 = vmatpush.msra.mxu0 %v2820
        %3033 = vmatpush.msra.mxu0 %v2816
        %3034 = vmatpush.msra.mxu0 %v2812
        %3035 = vmatpush.msra.mxu0 %v2808
        %3036 = vmatpush.msra.mxu0 %v2804
        %3037 = vmatpush.msra.mxu0 %v2800
        %3038 = vmatpush.msra.mxu0 %v2796
        %3039 = vmatpush.msra.mxu0 %v2792
        %3040 = vmatpush.msra.mxu0 %v2788
        %3041 = vmatpush.msra.mxu0 %v2784
        %3042 = vmatpush.msra.mxu0 %v2780
        %3043 = vmatpush.msra.mxu0 %v2776
        %3044 = vmatpush.msra.mxu0 %v2772
        %3045 = vmatmul.f32.gmra.mxu0 %v2939
        %v3046 = vpop.f32.mrf.mxu0
        %v3047 = vadd.f32 0.0, %v3046
        %3048 = vmatmul.f32.gmra.mxu0 %v2947
        %v3049 = vpop.f32.mrf.mxu0
        %v3050 = vadd.f32 0.0, %v3049
        %3051 = vdwg.mxu0
        %3052 = vmatpush.msra.mxu0 %v2896
        %3053 = vmatpush.msra.mxu0 %v2892
        %3054 = vmatpush.msra.mxu0 %v2888
        %3055 = vmatpush.msra.mxu0 %v2884
        %3056 = vmatpush.msra.mxu0 %v2880
        %3057 = vmatpush.msra.mxu0 %v2876
        %3058 = vmatpush.msra.mxu0 %v2872
        %3059 = vmatpush.msra.mxu0 %v2868
        %3060 = vmatpush.msra.mxu0 %v2864
        %3061 = vmatpush.msra.mxu0 %v2860
        %3062 = vmatpush.msra.mxu0 %v2856
        %3063 = vmatpush.msra.mxu0 %v2852
        %3064 = vmatpush.msra.mxu0 %v2848
        %3065 = vmatpush.msra.mxu0 %v2844
        %3066 = vmatpush.msra.mxu0 %v2840
        %3067 = vmatpush.msra.mxu0 %v2836
        %3068 = vmatmul.f32.gmra.mxu0 %v2942
        %v3069 = vpop.f32.mrf.mxu0
        %v3070 = vadd.f32 %v3047, %v3069
        %3071 = vmatmul.f32.gmra.mxu0 %v2949
        %v3072 = vpop.f32.mrf.mxu0
        %v3073 = vadd.f32 %v3050, %v3072
        %3074 = vdwg.mxu0
        %3075 = vmatpush.msra.mxu0 0.0
        %3076 = vmatpush.msra.mxu0 0.0
        %3077 = vmatpush.msra.mxu0 0.0
        %3078 = vmatpush.msra.mxu0 0.0
        %3079 = vmatpush.msra.mxu0 0.0
        %3080 = vmatpush.msra.mxu0 0.0
        %3081 = vmatpush.msra.mxu0 0.0
        %3082 = vmatpush.msra.mxu0 0.0
        %3083 = vmatpush.msra.mxu0 %v2928
        %3084 = vmatpush.msra.mxu0 %v2924
        %3085 = vmatpush.msra.mxu0 %v2920
        %3086 = vmatpush.msra.mxu0 %v2916
        %3087 = vmatpush.msra.mxu0 %v2912
        %3088 = vmatpush.msra.mxu0 %v2908
        %3089 = vmatpush.msra.mxu0 %v2904
        %3090 = vmatpush.msra.mxu0 %v2900
        %3091 = vmatmul.f32.gmra.mxu0 %v2956
        %v3092 = vpop.f32.mrf.mxu0
        %v3093 = vadd.f32 %v3070, %v3092
        %3094 = vmatmul.f32.gmra.mxu0 %v2958
        %v3095 = vpop.f32.mrf.mxu0
        %v3096 = vadd.f32 %v3073, %v3095
        %3097 = vdwg.mxu0
        %3098 = vmatpush.msra.mxu0 %v2833
        %3099 = vmatpush.msra.mxu0 %v2829
        %3100 = vmatpush.msra.mxu0 %v2825
        %3101 = vmatpush.msra.mxu0 %v2821
        %3102 = vmatpush.msra.mxu0 %v2817
        %3103 = vmatpush.msra.mxu0 %v2813
        %3104 = vmatpush.msra.mxu0 %v2809
        %3105 = vmatpush.msra.mxu0 %v2805
        %3106 = vmatpush.msra.mxu0 %v2801
        %3107 = vmatpush.msra.mxu0 %v2797
        %3108 = vmatpush.msra.mxu0 %v2793
        %3109 = vmatpush.msra.mxu0 %v2789
        %3110 = vmatpush.msra.mxu0 %v2785
        %3111 = vmatpush.msra.mxu0 %v2781
        %3112 = vmatpush.msra.mxu0 %v2777
        %3113 = vmatpush.msra.mxu0 %v2773
        %3114 = vmatmul.f32.gmra.mxu0 %v2939
        %v3115 = vpop.f32.mrf.mxu0
        %v3116 = vadd.f32 0.0, %v3115
        %3117 = vmatmul.f32.gmra.mxu0 %v2947
        %v3118 = vpop.f32.mrf.mxu0
        %v3119 = vadd.f32 0.0, %v3118
        %3120 = vdwg.mxu0
        %3121 = vmatpush.msra.mxu0 %v2897
        %3122 = vmatpush.msra.mxu0 %v2893
        %3123 = vmatpush.msra.mxu0 %v2889
        %3124 = vmatpush.msra.mxu0 %v2885
        %3125 = vmatpush.msra.mxu0 %v2881
        %3126 = vmatpush.msra.mxu0 %v2877
        %3127 = vmatpush.msra.mxu0 %v2873
        %3128 = vmatpush.msra.mxu0 %v2869
        %3129 = vmatpush.msra.mxu0 %v2865
        %3130 = vmatpush.msra.mxu0 %v2861
        %3131 = vmatpush.msra.mxu0 %v2857
        %3132 = vmatpush.msra.mxu0 %v2853
        %3133 = vmatpush.msra.mxu0 %v2849
        %3134 = vmatpush.msra.mxu0 %v2845
        %3135 = vmatpush.msra.mxu0 %v2841
        %3136 = vmatpush.msra.mxu0 %v2837
        %3137 = vmatmul.f32.gmra.mxu0 %v2942
        %v3138 = vpop.f32.mrf.mxu0
        %v3139 = vadd.f32 %v3116, %v3138
        %3140 = vmatmul.f32.gmra.mxu0 %v2949
        %v3141 = vpop.f32.mrf.mxu0
        %v3142 = vadd.f32 %v3119, %v3141
        %3143 = vdwg.mxu0
        %3144 = vmatpush.msra.mxu0 0.0
        %3145 = vmatpush.msra.mxu0 0.0
        %3146 = vmatpush.msra.mxu0 0.0
        %3147 = vmatpush.msra.mxu0 0.0
        %3148 = vmatpush.msra.mxu0 0.0
        %3149 = vmatpush.msra.mxu0 0.0
        %3150 = vmatpush.msra.mxu0 0.0
        %3151 = vmatpush.msra.mxu0 0.0
        %3152 = vmatpush.msra.mxu0 %v2929
        %3153 = vmatpush.msra.mxu0 %v2925
        %3154 = vmatpush.msra.mxu0 %v2921
        %3155 = vmatpush.msra.mxu0 %v2917
        %3156 = vmatpush.msra.mxu0 %v2913
        %3157 = vmatpush.msra.mxu0 %v2909
        %3158 = vmatpush.msra.mxu0 %v2905
        %3159 = vmatpush.msra.mxu0 %v2901
        %3160 = vmatmul.f32.gmra.mxu0 %v2956
        %v3161 = vpop.f32.mrf.mxu0
        %v3162 = vadd.f32 %v3139, %v3161
        %3163 = vmatmul.f32.gmra.mxu0 %v2958
        %v3164 = vpop.f32.mrf.mxu0
        %v3165 = vadd.f32 %v3142, %v3164
        %3166 = vdwg.mxu0
        %3167 = vmatpush.msra.mxu0 %v2834
        %3168 = vmatpush.msra.mxu0 %v2830
        %3169 = vmatpush.msra.mxu0 %v2826
        %3170 = vmatpush.msra.mxu0 %v2822
        %3171 = vmatpush.msra.mxu0 %v2818
        %3172 = vmatpush.msra.mxu0 %v2814
        %3173 = vmatpush.msra.mxu0 %v2810
        %3174 = vmatpush.msra.mxu0 %v2806
        %3175 = vmatpush.msra.mxu0 %v2802
        %3176 = vmatpush.msra.mxu0 %v2798
        %3177 = vmatpush.msra.mxu0 %v2794
        %3178 = vmatpush.msra.mxu0 %v2790
        %3179 = vmatpush.msra.mxu0 %v2786
        %3180 = vmatpush.msra.mxu0 %v2782
        %3181 = vmatpush.msra.mxu0 %v2778
        %3182 = vmatpush.msra.mxu0 %v2774
        %3183 = vmatmul.f32.gmra.mxu0 %v2939
        %v3184 = vpop.f32.mrf.mxu0
        %v3185 = vadd.f32 0.0, %v3184
        %3186 = vmatmul.f32.gmra.mxu0 %v2947
        %v3187 = vpop.f32.mrf.mxu0
        %v3188 = vadd.f32 0.0, %v3187
        %3189 = vdwg.mxu0
        %3190 = vmatpush.msra.mxu0 %v2898
        %3191 = vmatpush.msra.mxu0 %v2894
        %3192 = vmatpush.msra.mxu0 %v2890
        %3193 = vmatpush.msra.mxu0 %v2886
        %3194 = vmatpush.msra.mxu0 %v2882
        %3195 = vmatpush.msra.mxu0 %v2878
        %3196 = vmatpush.msra.mxu0 %v2874
        %3197 = vmatpush.msra.mxu0 %v2870
        %3198 = vmatpush.msra.mxu0 %v2866
        %3199 = vmatpush.msra.mxu0 %v2862
        %3200 = vmatpush.msra.mxu0 %v2858
        %3201 = vmatpush.msra.mxu0 %v2854
        %3202 = vmatpush.msra.mxu0 %v2850
        %3203 = vmatpush.msra.mxu0 %v2846
        %3204 = vmatpush.msra.mxu0 %v2842
        %3205 = vmatpush.msra.mxu0 %v2838
        %3206 = vmatmul.f32.gmra.mxu0 %v2942
        %v3207 = vpop.f32.mrf.mxu0
        %v3208 = vadd.f32 %v3185, %v3207
        %3209 = vmatmul.f32.gmra.mxu0 %v2949
        %v3210 = vpop.f32.mrf.mxu0
        %v3211 = vadd.f32 %v3188, %v3210
        %3212 = vdwg.mxu0
        %3213 = vmatpush.msra.mxu0 0.0
        %3214 = vmatpush.msra.mxu0 0.0
        %3215 = vmatpush.msra.mxu0 0.0
        %3216 = vmatpush.msra.mxu0 0.0
        %3217 = vmatpush.msra.mxu0 0.0
        %3218 = vmatpush.msra.mxu0 0.0
        %3219 = vmatpush.msra.mxu0 0.0
        %3220 = vmatpush.msra.mxu0 0.0
        %3221 = vmatpush.msra.mxu0 %v2930
        %3222 = vmatpush.msra.mxu0 %v2926
        %3223 = vmatpush.msra.mxu0 %v2922
        %3224 = vmatpush.msra.mxu0 %v2918
        %3225 = vmatpush.msra.mxu0 %v2914
        %3226 = vmatpush.msra.mxu0 %v2910
        %3227 = vmatpush.msra.mxu0 %v2906
        %3228 = vmatpush.msra.mxu0 %v2902
        %3229 = vmatmul.f32.gmra.mxu0 %v2956
        %v3230 = vpop.f32.mrf.mxu0
        %v3231 = vadd.f32 %v3208, %v3230
        %3232 = vmatmul.f32.gmra.mxu0 %v2958
        %v3233 = vpop.f32.mrf.mxu0
        %v3234 = vadd.f32 %v3211, %v3233
        %3235 = vdwg.mxu0
        %v3236 = vadd.f32 %v2756, %v3024
        %v3237 = vadd.f32 %v2757, %v3093
        %v3238 = vadd.f32 %v2758, %v3162
        %v3239 = vadd.f32 %v2759, %v3231
        %v3240 = vadd.f32 %v2760, %v3027
        %v3241 = vadd.f32 %v2761, %v3096
        %v3242 = vadd.f32 %v2762, %v3165
        %v3243 = vadd.f32 %v2763, %v3234
        %v3244 = vld [vmem:[%s4] sm:$0xf]
        %v3246 = vperm.slane %v3244, 0
        %v3247 = vperm.slane %v3244, 1
        %v3248 = vperm.slane %v3244, 2
        %v3249 = vperm.slane %v3244, 3
        %v3254 = vadd.f32 %v3236, %v3246
        %v3255 = vadd.f32 %v3237, %v3247
        %v3256 = vadd.f32 %v3238, %v3248
        %v3257 = vadd.f32 %v3239, %v3249
        %v3258 = vadd.f32 %v3240, %v3246
        %v3259 = vadd.f32 %v3241, %v3247
        %v3260 = vadd.f32 %v3242, %v3248
        %v3261 = vadd.f32 %v3243, %v3249
        %v3262 = vmax.f32 %v3254, 0.0
        %v3263 = vmax.f32 %v3255, 0.0
        %v3264 = vmax.f32 %v3256, 0.0
        %v3265 = vmax.f32 %v3257, 0.0
        %v3266 = vmax.f32 %v3258, 0.0
        %v3267 = vmax.f32 %v3259, 0.0
        %v3268 = vmax.f32 %v3260, 0.0
        %v3269 = vmax.f32 %v3261, 0.0
        %vm3278 = vcmask 1040384
        %v3279 = vrot.slane %v3262, 7
        %v3280 = vrot.slane %v3263, 7
        %v3281 = vrot.slane %v3264, 7
        %v3282 = vrot.slane %v3265, 7
        %v3283 = vrot.slane %v3266, 7
        %v3284 = vsel %vm3278, %v3279, %v3283
        %v3285 = vrot.slane %v3267, 7
        %v3286 = vsel %vm3278, %v3280, %v3285
        %v3287 = vrot.slane %v3268, 7
        %v3288 = vsel %vm3278, %v3281, %v3287
        %v3289 = vrot.slane %v3269, 7
        %v3290 = vsel %vm3278, %v3282, %v3289
        %3303 = vst [vmem:[#allocation4] sm:$0xfe] %v3279
        %3304 = vst [vmem:[#allocation4 + $0x8] sm:$0xfe] %v3280
        %3305 = vst [vmem:[#allocation4 + $0x10] sm:$0xfe] %v3281
        %3306 = vst [vmem:[#allocation4 + $0x18] sm:$0xfe] %v3282
        %3307 = vst [vmem:[#allocation4 + $0x28] sm:$0xff] %v3284
        %3308 = vst [vmem:[#allocation4 + $0x30] sm:$0xff] %v3286
        %3309 = vst [vmem:[#allocation4 + $0x38] sm:$0xff] %v3288
        %3310 = vst [vmem:[#allocation4 + $0x40] sm:$0xff] %v3290
        %3311 = vst [vmem:[#allocation4 + $0x50] sm:$0x1] %v3283
        %3312 = vst [vmem:[#allocation4 + $0x58] sm:$0x1] %v3285
        %3313 = vst [vmem:[#allocation4 + $0x60] sm:$0x1] %v3287
        %3314 = vst [vmem:[#allocation4 + $0x68] sm:$0x1] %v3289
        %v3315 = vld [vmem:[#allocation4] sm:$0xff]
        %v3316 = vld [vmem:[#allocation4 + $0x8] sm:$0xff]
        %v3317 = vld [vmem:[#allocation4 + $0x10] sm:$0xff]
        %v3318 = vld [vmem:[#allocation4 + $0x18] sm:$0xff]
        %v3319 = vld [vmem:[#allocation4 + $0x20] sm:$0xff]
        %v3320 = vld [vmem:[#allocation4 + $0x28] sm:$0xff]
        %v3321 = vld [vmem:[#allocation4 + $0x30] sm:$0xff]
        %v3322 = vld [vmem:[#allocation4 + $0x38] sm:$0xff]
        %v3323 = vld [vmem:[#allocation4 + $0x40] sm:$0xff]
        %v3324 = vld [vmem:[#allocation4 + $0x48] sm:$0xff]
        %v3325 = vld [vmem:[#allocation10] sm:$0xff]
        %v3326 = vld [vmem:[#allocation10 + $0x8] sm:$0xff]
        %v3327 = vld [vmem:[#allocation10 + $0x10] sm:$0xff]
        %v3328 = vld [vmem:[#allocation10 + $0x18] sm:$0xff]
        %v3329 = vld [vmem:[#allocation10 + $0x20] sm:$0xff]
        %v3330 = vld [vmem:[#allocation10 + $0x28] sm:$0xff]
        %v3331 = vld [vmem:[#allocation10 + $0x30] sm:$0xff]
        %v3332 = vld [vmem:[#allocation10 + $0x38] sm:$0xff]
        %v3333 = vld [vmem:[#allocation10 + $0x40] sm:$0xff]
        %v3334 = vld [vmem:[#allocation10 + $0x48] sm:$0xff]
        %v3335 = vld [vmem:[#allocation10 + $0x50] sm:$0xff]
        %v3336 = vld [vmem:[#allocation10 + $0x58] sm:$0xff]
        %v3337 = vld [vmem:[#allocation10 + $0x60] sm:$0xff]
        %v3338 = vld [vmem:[#allocation10 + $0x68] sm:$0xff]
        %v3339 = vld [vmem:[#allocation10 + $0x70] sm:$0xff]
        %v3340 = vld [vmem:[#allocation10 + $0x78] sm:$0xff]
        %v3341 = vld [vmem:[#allocation10 + $0x80] sm:$0xff]
        %v3342 = vld [vmem:[#allocation10 + $0x88] sm:$0xff]
        %v3343 = vld [vmem:[#allocation10 + $0x90] sm:$0xff]
        %v3344 = vld [vmem:[#allocation10 + $0x98] sm:$0xff]
        %v3345 = vld [vmem:[#allocation10 + $0xa0] sm:$0xff]
        %v3346 = vld [vmem:[#allocation10 + $0xa8] sm:$0xff]
        %v3347 = vld [vmem:[#allocation10 + $0xb0] sm:$0xff]
        %v3348 = vld [vmem:[#allocation10 + $0xb8] sm:$0xff]
        %v3349 = vld [vmem:[#allocation10 + $0xc0] sm:$0xff]
        %v3350 = vld [vmem:[#allocation10 + $0xc8] sm:$0xff]
        %v3351 = vld [vmem:[#allocation10 + $0xd0] sm:$0xff]
        %v3352 = vld [vmem:[#allocation10 + $0xd8] sm:$0xff]
        %v3353 = vld [vmem:[#allocation10 + $0xe0] sm:$0xff]
        %v3354 = vld [vmem:[#allocation10 + $0xe8] sm:$0xff]
        %v3355 = vld [vmem:[#allocation10 + $0xf0] sm:$0xff]
        %v3356 = vld [vmem:[#allocation10 + $0xf8] sm:$0xff]
        %v3357 = vld [vmem:[#allocation10 + $0x100] sm:$0xff]
        %v3358 = vld [vmem:[#allocation10 + $0x108] sm:$0xff]
        %v3359 = vld [vmem:[#allocation10 + $0x110] sm:$0xff]
        %v3360 = vld [vmem:[#allocation10 + $0x118] sm:$0xff]
        %v3361 = vld [vmem:[#allocation10 + $0x120] sm:$0xff]
        %v3362 = vld [vmem:[#allocation10 + $0x128] sm:$0xff]
        %v3363 = vld [vmem:[#allocation10 + $0x130] sm:$0xff]
        %v3364 = vld [vmem:[#allocation10 + $0x138] sm:$0xff]
        %v3365 = vld [vmem:[#allocation10 + $0x140] sm:$0xff]
        %v3366 = vld [vmem:[#allocation10 + $0x148] sm:$0xff]
        %v3367 = vld [vmem:[#allocation10 + $0x150] sm:$0xff]
        %v3368 = vld [vmem:[#allocation10 + $0x158] sm:$0xff]
        %v3369 = vld [vmem:[#allocation10 + $0x160] sm:$0xff]
        %v3370 = vld [vmem:[#allocation10 + $0x168] sm:$0xff]
        %v3371 = vld [vmem:[#allocation10 + $0x170] sm:$0xff]
        %v3372 = vld [vmem:[#allocation10 + $0x178] sm:$0xff]
        %v3373 = vld [vmem:[#allocation10 + $0x180] sm:$0xff]
        %v3374 = vld [vmem:[#allocation10 + $0x188] sm:$0xff]
        %v3375 = vld [vmem:[#allocation10 + $0x190] sm:$0xff]
        %v3376 = vld [vmem:[#allocation10 + $0x198] sm:$0xff]
        %v3377 = vld [vmem:[#allocation10 + $0x1a0] sm:$0xff]
        %v3378 = vld [vmem:[#allocation10 + $0x1a8] sm:$0xff]
        %v3379 = vld [vmem:[#allocation10 + $0x1b0] sm:$0xff]
        %v3380 = vld [vmem:[#allocation10 + $0x1b8] sm:$0xff]
        %v3381 = vld [vmem:[#allocation10 + $0x1c0] sm:$0xff]
        %v3382 = vld [vmem:[#allocation10 + $0x1c8] sm:$0xff]
        %v3383 = vld [vmem:[#allocation10 + $0x1d0] sm:$0xff]
        %v3384 = vld [vmem:[#allocation10 + $0x1d8] sm:$0xff]
        %v3385 = vld [vmem:[#allocation10 + $0x1e0] sm:$0xff]
        %v3386 = vld [vmem:[#allocation10 + $0x1e8] sm:$0xff]
        %v3387 = vld [vmem:[#allocation10 + $0x1f0] sm:$0xff]
        %v3388 = vld [vmem:[#allocation10 + $0x1f8] sm:$0xff]
        %v3389 = vld [vmem:[#allocation10 + $0x200] sm:$0xff]
        %v3390 = vld [vmem:[#allocation10 + $0x208] sm:$0xff]
        %v3391 = vld [vmem:[#allocation10 + $0x210] sm:$0xff]
        %v3392 = vld [vmem:[#allocation10 + $0x218] sm:$0xff]
        %v3393 = vld [vmem:[#allocation10 + $0x220] sm:$0xff]
        %v3394 = vld [vmem:[#allocation10 + $0x228] sm:$0xff]
        %v3395 = vld [vmem:[#allocation10 + $0x230] sm:$0xff]
        %v3396 = vld [vmem:[#allocation10 + $0x238] sm:$0xff]
        %v3397 = vld [vmem:[#allocation4] sm:$0xfe]
        %v3398 = vld [vmem:[#allocation4 + $0x8] sm:$0xfe]
        %v3399 = vld [vmem:[#allocation4 + $0x10] sm:$0xfe]
        %v3400 = vld [vmem:[#allocation4 + $0x18] sm:$0xfe]
        %v3401 = vld [vmem:[#allocation4 + $0x20] sm:$0xfe]
        %v3402 = vld [vmem:[#allocation4 + $0x50] sm:$0x1]
        %v3403 = vld [vmem:[#allocation4 + $0x58] sm:$0x1]
        %v3404 = vld [vmem:[#allocation4 + $0x60] sm:$0x1]
        %v3405 = vld [vmem:[#allocation4 + $0x68] sm:$0x1]
        %v3406 = vld [vmem:[#allocation4 + $0x70] sm:$0x1]
        %s3407 = scalar_lea.vmem [#allocation10], 576
        %v3408 = vld [vmem:[%s3407] sm:$0xff]
        %v3409 = vld [vmem:[%s3407 + $0x8] sm:$0xff]
        %v3410 = vld [vmem:[%s3407 + $0x10] sm:$0xff]
        %v3411 = vld [vmem:[%s3407 + $0x18] sm:$0xff]
        %v3412 = vld [vmem:[%s3407 + $0x20] sm:$0xff]
        %v3413 = vld [vmem:[%s3407 + $0x28] sm:$0xff]
        %v3414 = vld [vmem:[%s3407 + $0x30] sm:$0xff]
        %v3415 = vld [vmem:[%s3407 + $0x38] sm:$0xff]
        %v3416 = vld [vmem:[%s3407 + $0x40] sm:$0xff]
        %v3417 = vld [vmem:[%s3407 + $0x48] sm:$0xff]
        %v3418 = vld [vmem:[%s3407 + $0x50] sm:$0xff]
        %v3419 = vld [vmem:[%s3407 + $0x58] sm:$0xff]
        %v3420 = vld [vmem:[%s3407 + $0x60] sm:$0xff]
        %v3421 = vld [vmem:[%s3407 + $0x68] sm:$0xff]
        %v3422 = vld [vmem:[%s3407 + $0x70] sm:$0xff]
        %v3423 = vld [vmem:[%s3407 + $0x78] sm:$0xff]
        %v3424 = vld [vmem:[%s3407 + $0x80] sm:$0xff]
        %v3425 = vld [vmem:[%s3407 + $0x88] sm:$0xff]
        %v3426 = vld [vmem:[%s3407 + $0x90] sm:$0xff]
        %v3427 = vld [vmem:[%s3407 + $0x98] sm:$0xff]
        %v3428 = vld [vmem:[%s3407 + $0xa0] sm:$0xff]
        %v3429 = vld [vmem:[%s3407 + $0xa8] sm:$0xff]
        %v3430 = vld [vmem:[%s3407 + $0xb0] sm:$0xff]
        %v3431 = vld [vmem:[%s3407 + $0xb8] sm:$0xff]
        %v3432 = vld [vmem:[%s3407 + $0xc0] sm:$0xff]
        %v3433 = vld [vmem:[%s3407 + $0xc8] sm:$0xff]
        %v3434 = vld [vmem:[%s3407 + $0xd0] sm:$0xff]
        %v3435 = vld [vmem:[%s3407 + $0xd8] sm:$0xff]
        %v3436 = vld [vmem:[%s3407 + $0xe0] sm:$0xff]
        %v3437 = vld [vmem:[%s3407 + $0xe8] sm:$0xff]
        %v3438 = vld [vmem:[%s3407 + $0xf0] sm:$0xff]
        %v3439 = vld [vmem:[%s3407 + $0xf8] sm:$0xff]
        %v3440 = vld [vmem:[%s3407 + $0x100] sm:$0xff]
        %v3441 = vld [vmem:[%s3407 + $0x108] sm:$0xff]
        %v3442 = vld [vmem:[%s3407 + $0x110] sm:$0xff]
        %v3443 = vld [vmem:[%s3407 + $0x118] sm:$0xff]
        %v3444 = vld [vmem:[%s3407 + $0x120] sm:$0xff]
        %v3445 = vld [vmem:[%s3407 + $0x128] sm:$0xff]
        %v3446 = vld [vmem:[%s3407 + $0x130] sm:$0xff]
        %v3447 = vld [vmem:[%s3407 + $0x138] sm:$0xff]
        %v3448 = vld [vmem:[%s3407 + $0x140] sm:$0xff]
        %v3449 = vld [vmem:[%s3407 + $0x148] sm:$0xff]
        %v3450 = vld [vmem:[%s3407 + $0x150] sm:$0xff]
        %v3451 = vld [vmem:[%s3407 + $0x158] sm:$0xff]
        %v3452 = vld [vmem:[%s3407 + $0x160] sm:$0xff]
        %v3453 = vld [vmem:[%s3407 + $0x168] sm:$0xff]
        %v3454 = vld [vmem:[%s3407 + $0x170] sm:$0xff]
        %v3455 = vld [vmem:[%s3407 + $0x178] sm:$0xff]
        %v3456 = vld [vmem:[%s3407 + $0x180] sm:$0xff]
        %v3457 = vld [vmem:[%s3407 + $0x188] sm:$0xff]
        %v3458 = vld [vmem:[%s3407 + $0x190] sm:$0xff]
        %v3459 = vld [vmem:[%s3407 + $0x198] sm:$0xff]
        %v3460 = vld [vmem:[%s3407 + $0x1a0] sm:$0xff]
        %v3461 = vld [vmem:[%s3407 + $0x1a8] sm:$0xff]
        %v3462 = vld [vmem:[%s3407 + $0x1b0] sm:$0xff]
        %v3463 = vld [vmem:[%s3407 + $0x1b8] sm:$0xff]
        %v3464 = vld [vmem:[%s3407 + $0x1c0] sm:$0xff]
        %v3465 = vld [vmem:[%s3407 + $0x1c8] sm:$0xff]
        %v3466 = vld [vmem:[%s3407 + $0x1d0] sm:$0xff]
        %v3467 = vld [vmem:[%s3407 + $0x1d8] sm:$0xff]
        %v3468 = vld [vmem:[%s3407 + $0x1e0] sm:$0xff]
        %v3469 = vld [vmem:[%s3407 + $0x1e8] sm:$0xff]
        %v3470 = vld [vmem:[%s3407 + $0x1f0] sm:$0xff]
        %v3471 = vld [vmem:[%s3407 + $0x1f8] sm:$0xff]
        %v3472 = vld [vmem:[%s3407 + $0x200] sm:$0xff]
        %v3473 = vld [vmem:[%s3407 + $0x208] sm:$0xff]
        %v3474 = vld [vmem:[%s3407 + $0x210] sm:$0xff]
        %v3475 = vld [vmem:[%s3407 + $0x218] sm:$0xff]
        %v3476 = vld [vmem:[%s3407 + $0x220] sm:$0xff]
        %v3477 = vld [vmem:[%s3407 + $0x228] sm:$0xff]
        %v3478 = vld [vmem:[%s3407 + $0x230] sm:$0xff]
        %v3479 = vld [vmem:[%s3407 + $0x238] sm:$0xff]
        %v3495 = vrot.slane %v3397, 1
        %v3496 = vrot.slane %v3320, 1
        %v3497 = vsel %vm1221, %v3495, %v3496
        %v3498 = vrot.slane %v3398, 1
        %v3499 = vrot.slane %v3321, 1
        %v3500 = vsel %vm1221, %v3498, %v3499
        %v3501 = vrot.slane %v3399, 1
        %v3502 = vrot.slane %v3322, 1
        %v3503 = vsel %vm1221, %v3501, %v3502
        %v3504 = vrot.slane %v3400, 1
        %v3505 = vrot.slane %v3323, 1
        %v3506 = vsel %vm1221, %v3504, %v3505
        %v3507 = vrot.slane %v3401, 1
        %v3508 = vrot.slane %v3324, 1
        %v3509 = vsel %vm1221, %v3507, %v3508
        %v3510 = vrot.slane %v3402, 1
        %v3511 = vsel %vm1221, %v3496, %v3510
        %v3512 = vrot.slane %v3403, 1
        %v3513 = vsel %vm1221, %v3499, %v3512
        %v3514 = vrot.slane %v3404, 1
        %v3515 = vsel %vm1221, %v3502, %v3514
        %v3516 = vrot.slane %v3405, 1
        %v3517 = vsel %vm1221, %v3505, %v3516
        %v3518 = vrot.slane %v3406, 1
        %v3519 = vsel %vm1221, %v3508, %v3518
        %v3528 = vsel %vm407, %v3509, 0
        %v3530 = vsel %vm407, %v3519, 0
        %3532 = vmatpush.msra.mxu0 %v3423
        %3533 = vmatpush.msra.mxu0 %v3422
        %3534 = vmatpush.msra.mxu0 %v3421
        %3535 = vmatpush.msra.mxu0 %v3420
        %3536 = vmatpush.msra.mxu0 %v3419
        %3537 = vmatpush.msra.mxu0 %v3418
        %3538 = vmatpush.msra.mxu0 %v3417
        %3539 = vmatpush.msra.mxu0 %v3416
        %3540 = vmatpush.msra.mxu0 %v3415
        %3541 = vmatpush.msra.mxu0 %v3414
        %3542 = vmatpush.msra.mxu0 %v3413
        %3543 = vmatpush.msra.mxu0 %v3412
        %3544 = vmatpush.msra.mxu0 %v3411
        %3545 = vmatpush.msra.mxu0 %v3410
        %3546 = vmatpush.msra.mxu0 %v3409
        %3547 = vmatpush.msra.mxu0 %v3408
        %3548 = vmatmul.f32.gmra.mxu0 %v3497
        %v3549 = vpop.f32.mrf.mxu0
        %v3550 = vadd.f32 0.0, %v3549
        %3551 = vmatmul.f32.gmra.mxu0 %v3511
        %v3552 = vpop.f32.mrf.mxu0
        %v3553 = vadd.f32 0.0, %v3552
        %3554 = vdwg.mxu0
        %3555 = vmatpush.msra.mxu0 %v3439
        %3556 = vmatpush.msra.mxu0 %v3438
        %3557 = vmatpush.msra.mxu0 %v3437
        %3558 = vmatpush.msra.mxu0 %v3436
        %3559 = vmatpush.msra.mxu0 %v3435
        %3560 = vmatpush.msra.mxu0 %v3434
        %3561 = vmatpush.msra.mxu0 %v3433
        %3562 = vmatpush.msra.mxu0 %v3432
        %3563 = vmatpush.msra.mxu0 %v3431
        %3564 = vmatpush.msra.mxu0 %v3430
        %3565 = vmatpush.msra.mxu0 %v3429
        %3566 = vmatpush.msra.mxu0 %v3428
        %3567 = vmatpush.msra.mxu0 %v3427
        %3568 = vmatpush.msra.mxu0 %v3426
        %3569 = vmatpush.msra.mxu0 %v3425
        %3570 = vmatpush.msra.mxu0 %v3424
        %3571 = vmatmul.f32.gmra.mxu0 %v3500
        %v3572 = vpop.f32.mrf.mxu0
        %v3573 = vadd.f32 %v3550, %v3572
        %3574 = vmatmul.f32.gmra.mxu0 %v3513
        %v3575 = vpop.f32.mrf.mxu0
        %v3576 = vadd.f32 %v3553, %v3575
        %3577 = vdwg.mxu0
        %3578 = vmatpush.msra.mxu0 %v3455
        %3579 = vmatpush.msra.mxu0 %v3454
        %3580 = vmatpush.msra.mxu0 %v3453
        %3581 = vmatpush.msra.mxu0 %v3452
        %3582 = vmatpush.msra.mxu0 %v3451
        %3583 = vmatpush.msra.mxu0 %v3450
        %3584 = vmatpush.msra.mxu0 %v3449
        %3585 = vmatpush.msra.mxu0 %v3448
        %3586 = vmatpush.msra.mxu0 %v3447
        %3587 = vmatpush.msra.mxu0 %v3446
        %3588 = vmatpush.msra.mxu0 %v3445
        %3589 = vmatpush.msra.mxu0 %v3444
        %3590 = vmatpush.msra.mxu0 %v3443
        %3591 = vmatpush.msra.mxu0 %v3442
        %3592 = vmatpush.msra.mxu0 %v3441
        %3593 = vmatpush.msra.mxu0 %v3440
        %3594 = vmatmul.f32.gmra.mxu0 %v3503
        %v3595 = vpop.f32.mrf.mxu0
        %v3596 = vadd.f32 %v3573, %v3595
        %3597 = vmatmul.f32.gmra.mxu0 %v3515
        %v3598 = vpop.f32.mrf.mxu0
        %v3599 = vadd.f32 %v3576, %v3598
        %3600 = vdwg.mxu0
        %3601 = vmatpush.msra.mxu0 %v3471
        %3602 = vmatpush.msra.mxu0 %v3470
        %3603 = vmatpush.msra.mxu0 %v3469
        %3604 = vmatpush.msra.mxu0 %v3468
        %3605 = vmatpush.msra.mxu0 %v3467
        %3606 = vmatpush.msra.mxu0 %v3466
        %3607 = vmatpush.msra.mxu0 %v3465
        %3608 = vmatpush.msra.mxu0 %v3464
        %3609 = vmatpush.msra.mxu0 %v3463
        %3610 = vmatpush.msra.mxu0 %v3462
        %3611 = vmatpush.msra.mxu0 %v3461
        %3612 = vmatpush.msra.mxu0 %v3460
        %3613 = vmatpush.msra.mxu0 %v3459
        %3614 = vmatpush.msra.mxu0 %v3458
        %3615 = vmatpush.msra.mxu0 %v3457
        %3616 = vmatpush.msra.mxu0 %v3456
        %3617 = vmatmul.f32.gmra.mxu0 %v3506
        %v3618 = vpop.f32.mrf.mxu0
        %v3619 = vadd.f32 %v3596, %v3618
        %3620 = vmatmul.f32.gmra.mxu0 %v3517
        %v3621 = vpop.f32.mrf.mxu0
        %v3622 = vadd.f32 %v3599, %v3621
        %3623 = vdwg.mxu0
        %3624 = vmatpush.msra.mxu0 0.0
        %3625 = vmatpush.msra.mxu0 0.0
        %3626 = vmatpush.msra.mxu0 0.0
        %3627 = vmatpush.msra.mxu0 0.0
        %3628 = vmatpush.msra.mxu0 0.0
        %3629 = vmatpush.msra.mxu0 0.0
        %3630 = vmatpush.msra.mxu0 0.0
        %3631 = vmatpush.msra.mxu0 0.0
        %3632 = vmatpush.msra.mxu0 %v3479
        %3633 = vmatpush.msra.mxu0 %v3478
        %3634 = vmatpush.msra.mxu0 %v3477
        %3635 = vmatpush.msra.mxu0 %v3476
        %3636 = vmatpush.msra.mxu0 %v3475
        %3637 = vmatpush.msra.mxu0 %v3474
        %3638 = vmatpush.msra.mxu0 %v3473
        %3639 = vmatpush.msra.mxu0 %v3472
        %3640 = vmatmul.f32.gmra.mxu0 %v3528
        %v3641 = vpop.f32.mrf.mxu0
        %v3642 = vadd.f32 %v3619, %v3641
        %3643 = vmatmul.f32.gmra.mxu0 %v3530
        %v3644 = vpop.f32.mrf.mxu0
        %v3645 = vadd.f32 %v3622, %v3644
        %3646 = vdwg.mxu0
        %v3648 = vsel %vm407, %v3319, 0
        %v3650 = vsel %vm407, %v3324, 0
        %3652 = vmatpush.msra.mxu0 %v3340
        %3653 = vmatpush.msra.mxu0 %v3339
        %3654 = vmatpush.msra.mxu0 %v3338
        %3655 = vmatpush.msra.mxu0 %v3337
        %3656 = vmatpush.msra.mxu0 %v3336
        %3657 = vmatpush.msra.mxu0 %v3335
        %3658 = vmatpush.msra.mxu0 %v3334
        %3659 = vmatpush.msra.mxu0 %v3333
        %3660 = vmatpush.msra.mxu0 %v3332
        %3661 = vmatpush.msra.mxu0 %v3331
        %3662 = vmatpush.msra.mxu0 %v3330
        %3663 = vmatpush.msra.mxu0 %v3329
        %3664 = vmatpush.msra.mxu0 %v3328
        %3665 = vmatpush.msra.mxu0 %v3327
        %3666 = vmatpush.msra.mxu0 %v3326
        %3667 = vmatpush.msra.mxu0 %v3325
        %3668 = vmatmul.f32.gmra.mxu0 %v3315
        %v3669 = vpop.f32.mrf.mxu0
        %v3670 = vadd.f32 %v3642, %v3669
        %3671 = vmatmul.f32.gmra.mxu0 %v3320
        %v3672 = vpop.f32.mrf.mxu0
        %v3673 = vadd.f32 %v3645, %v3672
        %3674 = vdwg.mxu0
        %3675 = vmatpush.msra.mxu0 %v3356
        %3676 = vmatpush.msra.mxu0 %v3355
        %3677 = vmatpush.msra.mxu0 %v3354
        %3678 = vmatpush.msra.mxu0 %v3353
        %3679 = vmatpush.msra.mxu0 %v3352
        %3680 = vmatpush.msra.mxu0 %v3351
        %3681 = vmatpush.msra.mxu0 %v3350
        %3682 = vmatpush.msra.mxu0 %v3349
        %3683 = vmatpush.msra.mxu0 %v3348
        %3684 = vmatpush.msra.mxu0 %v3347
        %3685 = vmatpush.msra.mxu0 %v3346
        %3686 = vmatpush.msra.mxu0 %v3345
        %3687 = vmatpush.msra.mxu0 %v3344
        %3688 = vmatpush.msra.mxu0 %v3343
        %3689 = vmatpush.msra.mxu0 %v3342
        %3690 = vmatpush.msra.mxu0 %v3341
        %3691 = vmatmul.f32.gmra.mxu0 %v3316
        %v3692 = vpop.f32.mrf.mxu0
        %v3693 = vadd.f32 %v3670, %v3692
        %3694 = vmatmul.f32.gmra.mxu0 %v3321
        %v3695 = vpop.f32.mrf.mxu0
        %v3696 = vadd.f32 %v3673, %v3695
        %3697 = vdwg.mxu0
        %3698 = vmatpush.msra.mxu0 %v3372
        %3699 = vmatpush.msra.mxu0 %v3371
        %3700 = vmatpush.msra.mxu0 %v3370
        %3701 = vmatpush.msra.mxu0 %v3369
        %3702 = vmatpush.msra.mxu0 %v3368
        %3703 = vmatpush.msra.mxu0 %v3367
        %3704 = vmatpush.msra.mxu0 %v3366
        %3705 = vmatpush.msra.mxu0 %v3365
        %3706 = vmatpush.msra.mxu0 %v3364
        %3707 = vmatpush.msra.mxu0 %v3363
        %3708 = vmatpush.msra.mxu0 %v3362
        %3709 = vmatpush.msra.mxu0 %v3361
        %3710 = vmatpush.msra.mxu0 %v3360
        %3711 = vmatpush.msra.mxu0 %v3359
        %3712 = vmatpush.msra.mxu0 %v3358
        %3713 = vmatpush.msra.mxu0 %v3357
        %3714 = vmatmul.f32.gmra.mxu0 %v3317
        %v3715 = vpop.f32.mrf.mxu0
        %v3716 = vadd.f32 %v3693, %v3715
        %3717 = vmatmul.f32.gmra.mxu0 %v3322
        %v3718 = vpop.f32.mrf.mxu0
        %v3719 = vadd.f32 %v3696, %v3718
        %3720 = vdwg.mxu0
        %3721 = vmatpush.msra.mxu0 %v3388
        %3722 = vmatpush.msra.mxu0 %v3387
        %3723 = vmatpush.msra.mxu0 %v3386
        %3724 = vmatpush.msra.mxu0 %v3385
        %3725 = vmatpush.msra.mxu0 %v3384
        %3726 = vmatpush.msra.mxu0 %v3383
        %3727 = vmatpush.msra.mxu0 %v3382
        %3728 = vmatpush.msra.mxu0 %v3381
        %3729 = vmatpush.msra.mxu0 %v3380
        %3730 = vmatpush.msra.mxu0 %v3379
        %3731 = vmatpush.msra.mxu0 %v3378
        %3732 = vmatpush.msra.mxu0 %v3377
        %3733 = vmatpush.msra.mxu0 %v3376
        %3734 = vmatpush.msra.mxu0 %v3375
        %3735 = vmatpush.msra.mxu0 %v3374
        %3736 = vmatpush.msra.mxu0 %v3373
        %3737 = vmatmul.f32.gmra.mxu0 %v3318
        %v3738 = vpop.f32.mrf.mxu0
        %v3739 = vadd.f32 %v3716, %v3738
        %3740 = vmatmul.f32.gmra.mxu0 %v3323
        %v3741 = vpop.f32.mrf.mxu0
        %v3742 = vadd.f32 %v3719, %v3741
        %3743 = vdwg.mxu0
        %3744 = vmatpush.msra.mxu0 0.0
        %3745 = vmatpush.msra.mxu0 0.0
        %3746 = vmatpush.msra.mxu0 0.0
        %3747 = vmatpush.msra.mxu0 0.0
        %3748 = vmatpush.msra.mxu0 0.0
        %3749 = vmatpush.msra.mxu0 0.0
        %3750 = vmatpush.msra.mxu0 0.0
        %3751 = vmatpush.msra.mxu0 0.0
        %3752 = vmatpush.msra.mxu0 %v3396
        %3753 = vmatpush.msra.mxu0 %v3395
        %3754 = vmatpush.msra.mxu0 %v3394
        %3755 = vmatpush.msra.mxu0 %v3393
        %3756 = vmatpush.msra.mxu0 %v3392
        %3757 = vmatpush.msra.mxu0 %v3391
        %3758 = vmatpush.msra.mxu0 %v3390
        %3759 = vmatpush.msra.mxu0 %v3389
        %3760 = vmatmul.f32.gmra.mxu0 %v3648
        %v3761 = vpop.f32.mrf.mxu0
        %v3762 = vadd.f32 %v3739, %v3761
        %3763 = vmatmul.f32.gmra.mxu0 %v3650
        %v3764 = vpop.f32.mrf.mxu0
        %v3765 = vadd.f32 %v3742, %v3764
        %3766 = vdwg.mxu0
        %v3767 = vld [vmem:[#allocation4] sm:$0xfc]
        %v3768 = vld [vmem:[#allocation4 + $0x8] sm:$0xfc]
        %v3769 = vld [vmem:[#allocation4 + $0x10] sm:$0xfc]
        %v3770 = vld [vmem:[#allocation4 + $0x18] sm:$0xfc]
        %v3771 = vld [vmem:[#allocation4 + $0x20] sm:$0xfc]
        %v3772 = vld [vmem:[#allocation4 + $0x50] sm:$0x3]
        %v3773 = vld [vmem:[#allocation4 + $0x58] sm:$0x3]
        %v3774 = vld [vmem:[#allocation4 + $0x60] sm:$0x3]
        %v3775 = vld [vmem:[#allocation4 + $0x68] sm:$0x3]
        %v3776 = vld [vmem:[#allocation4 + $0x70] sm:$0x3]
        %s3777 = scalar_lea.vmem [#allocation10], 1152
        %v3778 = vld [vmem:[%s3777] sm:$0xff]
        %v3779 = vld [vmem:[%s3777 + $0x8] sm:$0xff]
        %v3780 = vld [vmem:[%s3777 + $0x10] sm:$0xff]
        %v3781 = vld [vmem:[%s3777 + $0x18] sm:$0xff]
        %v3782 = vld [vmem:[%s3777 + $0x20] sm:$0xff]
        %v3783 = vld [vmem:[%s3777 + $0x28] sm:$0xff]
        %v3784 = vld [vmem:[%s3777 + $0x30] sm:$0xff]
        %v3785 = vld [vmem:[%s3777 + $0x38] sm:$0xff]
        %v3786 = vld [vmem:[%s3777 + $0x40] sm:$0xff]
        %v3787 = vld [vmem:[%s3777 + $0x48] sm:$0xff]
        %v3788 = vld [vmem:[%s3777 + $0x50] sm:$0xff]
        %v3789 = vld [vmem:[%s3777 + $0x58] sm:$0xff]
        %v3790 = vld [vmem:[%s3777 + $0x60] sm:$0xff]
        %v3791 = vld [vmem:[%s3777 + $0x68] sm:$0xff]
        %v3792 = vld [vmem:[%s3777 + $0x70] sm:$0xff]
        %v3793 = vld [vmem:[%s3777 + $0x78] sm:$0xff]
        %v3794 = vld [vmem:[%s3777 + $0x80] sm:$0xff]
        %v3795 = vld [vmem:[%s3777 + $0x88] sm:$0xff]
        %v3796 = vld [vmem:[%s3777 + $0x90] sm:$0xff]
        %v3797 = vld [vmem:[%s3777 + $0x98] sm:$0xff]
        %v3798 = vld [vmem:[%s3777 + $0xa0] sm:$0xff]
        %v3799 = vld [vmem:[%s3777 + $0xa8] sm:$0xff]
        %v3800 = vld [vmem:[%s3777 + $0xb0] sm:$0xff]
        %v3801 = vld [vmem:[%s3777 + $0xb8] sm:$0xff]
        %v3802 = vld [vmem:[%s3777 + $0xc0] sm:$0xff]
        %v3803 = vld [vmem:[%s3777 + $0xc8] sm:$0xff]
        %v3804 = vld [vmem:[%s3777 + $0xd0] sm:$0xff]
        %v3805 = vld [vmem:[%s3777 + $0xd8] sm:$0xff]
        %v3806 = vld [vmem:[%s3777 + $0xe0] sm:$0xff]
        %v3807 = vld [vmem:[%s3777 + $0xe8] sm:$0xff]
        %v3808 = vld [vmem:[%s3777 + $0xf0] sm:$0xff]
        %v3809 = vld [vmem:[%s3777 + $0xf8] sm:$0xff]
        %v3810 = vld [vmem:[%s3777 + $0x100] sm:$0xff]
        %v3811 = vld [vmem:[%s3777 + $0x108] sm:$0xff]
        %v3812 = vld [vmem:[%s3777 + $0x110] sm:$0xff]
        %v3813 = vld [vmem:[%s3777 + $0x118] sm:$0xff]
        %v3814 = vld [vmem:[%s3777 + $0x120] sm:$0xff]
        %v3815 = vld [vmem:[%s3777 + $0x128] sm:$0xff]
        %v3816 = vld [vmem:[%s3777 + $0x130] sm:$0xff]
        %v3817 = vld [vmem:[%s3777 + $0x138] sm:$0xff]
        %v3818 = vld [vmem:[%s3777 + $0x140] sm:$0xff]
        %v3819 = vld [vmem:[%s3777 + $0x148] sm:$0xff]
        %v3820 = vld [vmem:[%s3777 + $0x150] sm:$0xff]
        %v3821 = vld [vmem:[%s3777 + $0x158] sm:$0xff]
        %v3822 = vld [vmem:[%s3777 + $0x160] sm:$0xff]
        %v3823 = vld [vmem:[%s3777 + $0x168] sm:$0xff]
        %v3824 = vld [vmem:[%s3777 + $0x170] sm:$0xff]
        %v3825 = vld [vmem:[%s3777 + $0x178] sm:$0xff]
        %v3826 = vld [vmem:[%s3777 + $0x180] sm:$0xff]
        %v3827 = vld [vmem:[%s3777 + $0x188] sm:$0xff]
        %v3828 = vld [vmem:[%s3777 + $0x190] sm:$0xff]
        %v3829 = vld [vmem:[%s3777 + $0x198] sm:$0xff]
        %v3830 = vld [vmem:[%s3777 + $0x1a0] sm:$0xff]
        %v3831 = vld [vmem:[%s3777 + $0x1a8] sm:$0xff]
        %v3832 = vld [vmem:[%s3777 + $0x1b0] sm:$0xff]
        %v3833 = vld [vmem:[%s3777 + $0x1b8] sm:$0xff]
        %v3834 = vld [vmem:[%s3777 + $0x1c0] sm:$0xff]
        %v3835 = vld [vmem:[%s3777 + $0x1c8] sm:$0xff]
        %v3836 = vld [vmem:[%s3777 + $0x1d0] sm:$0xff]
        %v3837 = vld [vmem:[%s3777 + $0x1d8] sm:$0xff]
        %v3838 = vld [vmem:[%s3777 + $0x1e0] sm:$0xff]
        %v3839 = vld [vmem:[%s3777 + $0x1e8] sm:$0xff]
        %v3840 = vld [vmem:[%s3777 + $0x1f0] sm:$0xff]
        %v3841 = vld [vmem:[%s3777 + $0x1f8] sm:$0xff]
        %v3842 = vld [vmem:[%s3777 + $0x200] sm:$0xff]
        %v3843 = vld [vmem:[%s3777 + $0x208] sm:$0xff]
        %v3844 = vld [vmem:[%s3777 + $0x210] sm:$0xff]
        %v3845 = vld [vmem:[%s3777 + $0x218] sm:$0xff]
        %v3846 = vld [vmem:[%s3777 + $0x220] sm:$0xff]
        %v3847 = vld [vmem:[%s3777 + $0x228] sm:$0xff]
        %v3848 = vld [vmem:[%s3777 + $0x230] sm:$0xff]
        %v3849 = vld [vmem:[%s3777 + $0x238] sm:$0xff]
        %v3860 = vrot.slane %v3767, 2
        %v3861 = vrot.slane %v3320, 2
        %v3862 = vsel %vm1975, %v3860, %v3861
        %v3863 = vrot.slane %v3768, 2
        %v3864 = vrot.slane %v3321, 2
        %v3865 = vsel %vm1975, %v3863, %v3864
        %v3866 = vrot.slane %v3769, 2
        %v3867 = vrot.slane %v3322, 2
        %v3868 = vsel %vm1975, %v3866, %v3867
        %v3869 = vrot.slane %v3770, 2
        %v3870 = vrot.slane %v3323, 2
        %v3871 = vsel %vm1975, %v3869, %v3870
        %v3872 = vrot.slane %v3771, 2
        %v3873 = vrot.slane %v3324, 2
        %v3874 = vsel %vm1975, %v3872, %v3873
        %v3875 = vrot.slane %v3772, 2
        %v3876 = vsel %vm1975, %v3861, %v3875
        %v3877 = vrot.slane %v3773, 2
        %v3878 = vsel %vm1975, %v3864, %v3877
        %v3879 = vrot.slane %v3774, 2
        %v3880 = vsel %vm1975, %v3867, %v3879
        %v3881 = vrot.slane %v3775, 2
        %v3882 = vsel %vm1975, %v3870, %v3881
        %v3883 = vrot.slane %v3776, 2
        %v3884 = vsel %vm1975, %v3873, %v3883
        %v3893 = vsel %vm407, %v3874, 0
        %v3895 = vsel %vm407, %v3884, 0
        %3897 = vmatpush.msra.mxu0 %v3793
        %3898 = vmatpush.msra.mxu0 %v3792
        %3899 = vmatpush.msra.mxu0 %v3791
        %3900 = vmatpush.msra.mxu0 %v3790
        %3901 = vmatpush.msra.mxu0 %v3789
        %3902 = vmatpush.msra.mxu0 %v3788
        %3903 = vmatpush.msra.mxu0 %v3787
        %3904 = vmatpush.msra.mxu0 %v3786
        %3905 = vmatpush.msra.mxu0 %v3785
        %3906 = vmatpush.msra.mxu0 %v3784
        %3907 = vmatpush.msra.mxu0 %v3783
        %3908 = vmatpush.msra.mxu0 %v3782
        %3909 = vmatpush.msra.mxu0 %v3781
        %3910 = vmatpush.msra.mxu0 %v3780
        %3911 = vmatpush.msra.mxu0 %v3779
        %3912 = vmatpush.msra.mxu0 %v3778
        %3913 = vmatmul.f32.gmra.mxu0 %v3862
        %v3914 = vpop.f32.mrf.mxu0
        %v3915 = vadd.f32 0.0, %v3914
        %3916 = vmatmul.f32.gmra.mxu0 %v3876
        %v3917 = vpop.f32.mrf.mxu0
        %v3918 = vadd.f32 0.0, %v3917
        %3919 = vdwg.mxu0
        %3920 = vmatpush.msra.mxu0 %v3809
        %3921 = vmatpush.msra.mxu0 %v3808
        %3922 = vmatpush.msra.mxu0 %v3807
        %3923 = vmatpush.msra.mxu0 %v3806
        %3924 = vmatpush.msra.mxu0 %v3805
        %3925 = vmatpush.msra.mxu0 %v3804
        %3926 = vmatpush.msra.mxu0 %v3803
        %3927 = vmatpush.msra.mxu0 %v3802
        %3928 = vmatpush.msra.mxu0 %v3801
        %3929 = vmatpush.msra.mxu0 %v3800
        %3930 = vmatpush.msra.mxu0 %v3799
        %3931 = vmatpush.msra.mxu0 %v3798
        %3932 = vmatpush.msra.mxu0 %v3797
        %3933 = vmatpush.msra.mxu0 %v3796
        %3934 = vmatpush.msra.mxu0 %v3795
        %3935 = vmatpush.msra.mxu0 %v3794
        %3936 = vmatmul.f32.gmra.mxu0 %v3865
        %v3937 = vpop.f32.mrf.mxu0
        %v3938 = vadd.f32 %v3915, %v3937
        %3939 = vmatmul.f32.gmra.mxu0 %v3878
        %v3940 = vpop.f32.mrf.mxu0
        %v3941 = vadd.f32 %v3918, %v3940
        %3942 = vdwg.mxu0
        %3943 = vmatpush.msra.mxu0 %v3825
        %3944 = vmatpush.msra.mxu0 %v3824
        %3945 = vmatpush.msra.mxu0 %v3823
        %3946 = vmatpush.msra.mxu0 %v3822
        %3947 = vmatpush.msra.mxu0 %v3821
        %3948 = vmatpush.msra.mxu0 %v3820
        %3949 = vmatpush.msra.mxu0 %v3819
        %3950 = vmatpush.msra.mxu0 %v3818
        %3951 = vmatpush.msra.mxu0 %v3817
        %3952 = vmatpush.msra.mxu0 %v3816
        %3953 = vmatpush.msra.mxu0 %v3815
        %3954 = vmatpush.msra.mxu0 %v3814
        %3955 = vmatpush.msra.mxu0 %v3813
        %3956 = vmatpush.msra.mxu0 %v3812
        %3957 = vmatpush.msra.mxu0 %v3811
        %3958 = vmatpush.msra.mxu0 %v3810
        %3959 = vmatmul.f32.gmra.mxu0 %v3868
        %v3960 = vpop.f32.mrf.mxu0
        %v3961 = vadd.f32 %v3938, %v3960
        %3962 = vmatmul.f32.gmra.mxu0 %v3880
        %v3963 = vpop.f32.mrf.mxu0
        %v3964 = vadd.f32 %v3941, %v3963
        %3965 = vdwg.mxu0
        %3966 = vmatpush.msra.mxu0 %v3841
        %3967 = vmatpush.msra.mxu0 %v3840
        %3968 = vmatpush.msra.mxu0 %v3839
        %3969 = vmatpush.msra.mxu0 %v3838
        %3970 = vmatpush.msra.mxu0 %v3837
        %3971 = vmatpush.msra.mxu0 %v3836
        %3972 = vmatpush.msra.mxu0 %v3835
        %3973 = vmatpush.msra.mxu0 %v3834
        %3974 = vmatpush.msra.mxu0 %v3833
        %3975 = vmatpush.msra.mxu0 %v3832
        %3976 = vmatpush.msra.mxu0 %v3831
        %3977 = vmatpush.msra.mxu0 %v3830
        %3978 = vmatpush.msra.mxu0 %v3829
        %3979 = vmatpush.msra.mxu0 %v3828
        %3980 = vmatpush.msra.mxu0 %v3827
        %3981 = vmatpush.msra.mxu0 %v3826
        %3982 = vmatmul.f32.gmra.mxu0 %v3871
        %v3983 = vpop.f32.mrf.mxu0
        %v3984 = vadd.f32 %v3961, %v3983
        %3985 = vmatmul.f32.gmra.mxu0 %v3882
        %v3986 = vpop.f32.mrf.mxu0
        %v3987 = vadd.f32 %v3964, %v3986
        %3988 = vdwg.mxu0
        %3989 = vmatpush.msra.mxu0 0.0
        %3990 = vmatpush.msra.mxu0 0.0
        %3991 = vmatpush.msra.mxu0 0.0
        %3992 = vmatpush.msra.mxu0 0.0
        %3993 = vmatpush.msra.mxu0 0.0
        %3994 = vmatpush.msra.mxu0 0.0
        %3995 = vmatpush.msra.mxu0 0.0
        %3996 = vmatpush.msra.mxu0 0.0
        %3997 = vmatpush.msra.mxu0 %v3849
        %3998 = vmatpush.msra.mxu0 %v3848
        %3999 = vmatpush.msra.mxu0 %v3847
        %4000 = vmatpush.msra.mxu0 %v3846
        %4001 = vmatpush.msra.mxu0 %v3845
        %4002 = vmatpush.msra.mxu0 %v3844
        %4003 = vmatpush.msra.mxu0 %v3843
        %4004 = vmatpush.msra.mxu0 %v3842
        %4005 = vmatmul.f32.gmra.mxu0 %v3893
        %v4006 = vpop.f32.mrf.mxu0
        %v4007 = vadd.f32 %v3984, %v4006
        %4008 = vmatmul.f32.gmra.mxu0 %v3895
        %v4009 = vpop.f32.mrf.mxu0
        %v4010 = vadd.f32 %v3987, %v4009
        %4011 = vdwg.mxu0
        %v4012 = vadd.f32 %v3762, %v4007
        %v4013 = vadd.f32 %v3765, %v4010
        %v4014 = vld [vmem:[%s6] sm:$0x1]
        %v4016 = vperm.slane %v4014, 0
        %v4018 = vadd.f32 %v4012, %v4016
        %v4019 = vadd.f32 %v4013, %v4016
        %v4020 = vmax.f32 %v4018, 0.0
        %v4021 = vmax.f32 %v4019, 0.0
        %v4024 = vrot.slane %v4020, 7
        %v4025 = vrot.slane %v4021, 7
        %v4026 = vsel %vm3278, %v4024, %v4025
        %4030 = vst [vmem:[#allocation5] sm:$0xfe] %v4024
        %4031 = vst [vmem:[#allocation5 + $0x10] sm:$0xff] %v4026
        %4032 = vst [vmem:[#allocation5 + $0x20] sm:$0x1] %v4025
        %v4033 = vld [vmem:[#allocation5] sm:$0xff]
        %v4034 = vld [vmem:[#allocation5 + $0x8] sm:$0xff]
        %v4035 = vld [vmem:[#allocation5 + $0x10] sm:$0xff]
        %v4036 = vld [vmem:[#allocation5 + $0x18] sm:$0xff]
        %v4037 = vld [vmem:[#allocation11] sm:$0xff]
        %v4038 = vld [vmem:[#allocation11 + $0x8] sm:$0xff]
        %v4039 = vld [vmem:[#allocation11 + $0x10] sm:$0xff]
        %v4040 = vld [vmem:[#allocation11 + $0x18] sm:$0xff]
        %v4041 = vld [vmem:[#allocation11 + $0x20] sm:$0xff]
        %v4042 = vld [vmem:[#allocation11 + $0x28] sm:$0xff]
        %v4043 = vld [vmem:[#allocation11 + $0x30] sm:$0xff]
        %v4044 = vld [vmem:[#allocation11 + $0x38] sm:$0xff]
        %v4045 = vld [vmem:[#allocation11 + $0x40] sm:$0xff]
        %v4046 = vld [vmem:[#allocation11 + $0x48] sm:$0xff]
        %v4047 = vld [vmem:[#allocation11 + $0x50] sm:$0xff]
        %v4048 = vld [vmem:[#allocation11 + $0x58] sm:$0xff]
        %v4049 = vld [vmem:[#allocation11 + $0x60] sm:$0xff]
        %v4050 = vld [vmem:[#allocation11 + $0x68] sm:$0xff]
        %v4051 = vld [vmem:[#allocation11 + $0x70] sm:$0xff]
        %v4052 = vld [vmem:[#allocation11 + $0x78] sm:$0xff]
        %v4053 = vld [vmem:[#allocation11 + $0x80] sm:$0xff]
        %v4054 = vld [vmem:[#allocation11 + $0x88] sm:$0xff]
        %v4055 = vld [vmem:[#allocation5] sm:$0xfe]
        %v4056 = vld [vmem:[#allocation5 + $0x8] sm:$0xfe]
        %v4057 = vld [vmem:[#allocation5 + $0x20] sm:$0x1]
        %v4058 = vld [vmem:[#allocation5 + $0x28] sm:$0x1]
        %s4059 = scalar_lea.vmem [#allocation11], 144
        %v4060 = vld [vmem:[%s4059] sm:$0xff]
        %v4061 = vld [vmem:[%s4059 + $0x8] sm:$0xff]
        %v4062 = vld [vmem:[%s4059 + $0x10] sm:$0xff]
        %v4063 = vld [vmem:[%s4059 + $0x18] sm:$0xff]
        %v4064 = vld [vmem:[%s4059 + $0x20] sm:$0xff]
        %v4065 = vld [vmem:[%s4059 + $0x28] sm:$0xff]
        %v4066 = vld [vmem:[%s4059 + $0x30] sm:$0xff]
        %v4067 = vld [vmem:[%s4059 + $0x38] sm:$0xff]
        %v4068 = vld [vmem:[%s4059 + $0x40] sm:$0xff]
        %v4069 = vld [vmem:[%s4059 + $0x48] sm:$0xff]
        %v4070 = vld [vmem:[%s4059 + $0x50] sm:$0xff]
        %v4071 = vld [vmem:[%s4059 + $0x58] sm:$0xff]
        %v4072 = vld [vmem:[%s4059 + $0x60] sm:$0xff]
        %v4073 = vld [vmem:[%s4059 + $0x68] sm:$0xff]
        %v4074 = vld [vmem:[%s4059 + $0x70] sm:$0xff]
        %v4075 = vld [vmem:[%s4059 + $0x78] sm:$0xff]
        %v4076 = vld [vmem:[%s4059 + $0x80] sm:$0xff]
        %v4077 = vld [vmem:[%s4059 + $0x88] sm:$0xff]
        %v4084 = vrot.slane %v4055, 1
        %v4085 = vrot.slane %v4035, 1
        %v4086 = vsel %vm1221, %v4084, %v4085
        %v4087 = vrot.slane %v4056, 1
        %v4088 = vrot.slane %v4036, 1
        %v4089 = vsel %vm1221, %v4087, %v4088
        %v4090 = vrot.slane %v4057, 1
        %v4091 = vsel %vm1221, %v4085, %v4090
        %v4092 = vrot.slane %v4058, 1
        %v4093 = vsel %vm1221, %v4088, %v4092
        %v4096 = vsel %vm433, %v4089, 0
        %v4098 = vsel %vm433, %v4093, 0
        %4100 = vmatpush.msra.mxu0 %v4075
        %4101 = vmatpush.msra.mxu0 %v4074
        %4102 = vmatpush.msra.mxu0 %v4073
        %4103 = vmatpush.msra.mxu0 %v4072
        %4104 = vmatpush.msra.mxu0 %v4071
        %4105 = vmatpush.msra.mxu0 %v4070
        %4106 = vmatpush.msra.mxu0 %v4069
        %4107 = vmatpush.msra.mxu0 %v4068
        %4108 = vmatpush.msra.mxu0 %v4067
        %4109 = vmatpush.msra.mxu0 %v4066
        %4110 = vmatpush.msra.mxu0 %v4065
        %4111 = vmatpush.msra.mxu0 %v4064
        %4112 = vmatpush.msra.mxu0 %v4063
        %4113 = vmatpush.msra.mxu0 %v4062
        %4114 = vmatpush.msra.mxu0 %v4061
        %4115 = vmatpush.msra.mxu0 %v4060
        %4116 = vmatmul.f32.gmra.mxu0 %v4086
        %v4117 = vpop.f32.mrf.mxu0
        %v4118 = vadd.f32 0.0, %v4117
        %4119 = vmatmul.f32.gmra.mxu0 %v4091
        %v4120 = vpop.f32.mrf.mxu0
        %v4121 = vadd.f32 0.0, %v4120
        %4122 = vdwg.mxu0
        %4123 = vmatpush.msra.mxu0 0.0
        %4124 = vmatpush.msra.mxu0 0.0
        %4125 = vmatpush.msra.mxu0 0.0
        %4126 = vmatpush.msra.mxu0 0.0
        %4127 = vmatpush.msra.mxu0 0.0
        %4128 = vmatpush.msra.mxu0 0.0
        %4129 = vmatpush.msra.mxu0 0.0
        %4130 = vmatpush.msra.mxu0 0.0
        %4131 = vmatpush.msra.mxu0 0.0
        %4132 = vmatpush.msra.mxu0 0.0
        %4133 = vmatpush.msra.mxu0 0.0
        %4134 = vmatpush.msra.mxu0 0.0
        %4135 = vmatpush.msra.mxu0 0.0
        %4136 = vmatpush.msra.mxu0 0.0
        %4137 = vmatpush.msra.mxu0 %v4077
        %4138 = vmatpush.msra.mxu0 %v4076
        %4139 = vmatmul.f32.gmra.mxu0 %v4096
        %v4140 = vpop.f32.mrf.mxu0
        %v4141 = vadd.f32 %v4118, %v4140
        %4142 = vmatmul.f32.gmra.mxu0 %v4098
        %v4143 = vpop.f32.mrf.mxu0
        %v4144 = vadd.f32 %v4121, %v4143
        %4145 = vdwg.mxu0
        %v4147 = vsel %vm433, %v4034, 0
        %v4149 = vsel %vm433, %v4036, 0
        %4151 = vmatpush.msra.mxu0 %v4052
        %4152 = vmatpush.msra.mxu0 %v4051
        %4153 = vmatpush.msra.mxu0 %v4050
        %4154 = vmatpush.msra.mxu0 %v4049
        %4155 = vmatpush.msra.mxu0 %v4048
        %4156 = vmatpush.msra.mxu0 %v4047
        %4157 = vmatpush.msra.mxu0 %v4046
        %4158 = vmatpush.msra.mxu0 %v4045
        %4159 = vmatpush.msra.mxu0 %v4044
        %4160 = vmatpush.msra.mxu0 %v4043
        %4161 = vmatpush.msra.mxu0 %v4042
        %4162 = vmatpush.msra.mxu0 %v4041
        %4163 = vmatpush.msra.mxu0 %v4040
        %4164 = vmatpush.msra.mxu0 %v4039
        %4165 = vmatpush.msra.mxu0 %v4038
        %4166 = vmatpush.msra.mxu0 %v4037
        %4167 = vmatmul.f32.gmra.mxu0 %v4033
        %v4168 = vpop.f32.mrf.mxu0
        %v4169 = vadd.f32 %v4141, %v4168
        %4170 = vmatmul.f32.gmra.mxu0 %v4035
        %v4171 = vpop.f32.mrf.mxu0
        %v4172 = vadd.f32 %v4144, %v4171
        %4173 = vdwg.mxu0
        %4174 = vmatpush.msra.mxu0 0.0
        %4175 = vmatpush.msra.mxu0 0.0
        %4176 = vmatpush.msra.mxu0 0.0
        %4177 = vmatpush.msra.mxu0 0.0
        %4178 = vmatpush.msra.mxu0 0.0
        %4179 = vmatpush.msra.mxu0 0.0
        %4180 = vmatpush.msra.mxu0 0.0
        %4181 = vmatpush.msra.mxu0 0.0
        %4182 = vmatpush.msra.mxu0 0.0
        %4183 = vmatpush.msra.mxu0 0.0
        %4184 = vmatpush.msra.mxu0 0.0
        %4185 = vmatpush.msra.mxu0 0.0
        %4186 = vmatpush.msra.mxu0 0.0
        %4187 = vmatpush.msra.mxu0 0.0
        %4188 = vmatpush.msra.mxu0 %v4054
        %4189 = vmatpush.msra.mxu0 %v4053
        %4190 = vmatmul.f32.gmra.mxu0 %v4147
        %v4191 = vpop.f32.mrf.mxu0
        %v4192 = vadd.f32 %v4169, %v4191
        %4193 = vmatmul.f32.gmra.mxu0 %v4149
        %v4194 = vpop.f32.mrf.mxu0
        %v4195 = vadd.f32 %v4172, %v4194
        %4196 = vdwg.mxu0
        %v4197 = vld [vmem:[#allocation5] sm:$0xfc]
        %v4198 = vld [vmem:[#allocation5 + $0x8] sm:$0xfc]
        %v4199 = vld [vmem:[#allocation5 + $0x20] sm:$0x3]
        %v4200 = vld [vmem:[#allocation5 + $0x28] sm:$0x3]
        %s4201 = scalar_lea.vmem [#allocation11], 288
        %v4202 = vld [vmem:[%s4201] sm:$0xff]
        %v4203 = vld [vmem:[%s4201 + $0x8] sm:$0xff]
        %v4204 = vld [vmem:[%s4201 + $0x10] sm:$0xff]
        %v4205 = vld [vmem:[%s4201 + $0x18] sm:$0xff]
        %v4206 = vld [vmem:[%s4201 + $0x20] sm:$0xff]
        %v4207 = vld [vmem:[%s4201 + $0x28] sm:$0xff]
        %v4208 = vld [vmem:[%s4201 + $0x30] sm:$0xff]
        %v4209 = vld [vmem:[%s4201 + $0x38] sm:$0xff]
        %v4210 = vld [vmem:[%s4201 + $0x40] sm:$0xff]
        %v4211 = vld [vmem:[%s4201 + $0x48] sm:$0xff]
        %v4212 = vld [vmem:[%s4201 + $0x50] sm:$0xff]
        %v4213 = vld [vmem:[%s4201 + $0x58] sm:$0xff]
        %v4214 = vld [vmem:[%s4201 + $0x60] sm:$0xff]
        %v4215 = vld [vmem:[%s4201 + $0x68] sm:$0xff]
        %v4216 = vld [vmem:[%s4201 + $0x70] sm:$0xff]
        %v4217 = vld [vmem:[%s4201 + $0x78] sm:$0xff]
        %v4218 = vld [vmem:[%s4201 + $0x80] sm:$0xff]
        %v4219 = vld [vmem:[%s4201 + $0x88] sm:$0xff]
        %v4224 = vrot.slane %v4197, 2
        %v4225 = vrot.slane %v4035, 2
        %v4226 = vsel %vm1975, %v4224, %v4225
        %v4227 = vrot.slane %v4198, 2
        %v4228 = vrot.slane %v4036, 2
        %v4229 = vsel %vm1975, %v4227, %v4228
        %v4230 = vrot.slane %v4199, 2
        %v4231 = vsel %vm1975, %v4225, %v4230
        %v4232 = vrot.slane %v4200, 2
        %v4233 = vsel %vm1975, %v4228, %v4232
        %v4236 = vsel %vm433, %v4229, 0
        %v4238 = vsel %vm433, %v4233, 0
        %4240 = vmatpush.msra.mxu0 %v4217
        %4241 = vmatpush.msra.mxu0 %v4216
        %4242 = vmatpush.msra.mxu0 %v4215
        %4243 = vmatpush.msra.mxu0 %v4214
        %4244 = vmatpush.msra.mxu0 %v4213
        %4245 = vmatpush.msra.mxu0 %v4212
        %4246 = vmatpush.msra.mxu0 %v4211
        %4247 = vmatpush.msra.mxu0 %v4210
        %4248 = vmatpush.msra.mxu0 %v4209
        %4249 = vmatpush.msra.mxu0 %v4208
        %4250 = vmatpush.msra.mxu0 %v4207
        %4251 = vmatpush.msra.mxu0 %v4206
        %4252 = vmatpush.msra.mxu0 %v4205
        %4253 = vmatpush.msra.mxu0 %v4204
        %4254 = vmatpush.msra.mxu0 %v4203
        %4255 = vmatpush.msra.mxu0 %v4202
        %4256 = vmatmul.f32.gmra.mxu0 %v4226
        %v4257 = vpop.f32.mrf.mxu0
        %v4258 = vadd.f32 0.0, %v4257
        %4259 = vmatmul.f32.gmra.mxu0 %v4231
        %v4260 = vpop.f32.mrf.mxu0
        %v4261 = vadd.f32 0.0, %v4260
        %4262 = vdwg.mxu0
        %4263 = vmatpush.msra.mxu0 0.0
        %4264 = vmatpush.msra.mxu0 0.0
        %4265 = vmatpush.msra.mxu0 0.0
        %4266 = vmatpush.msra.mxu0 0.0
        %4267 = vmatpush.msra.mxu0 0.0
        %4268 = vmatpush.msra.mxu0 0.0
        %4269 = vmatpush.msra.mxu0 0.0
        %4270 = vmatpush.msra.mxu0 0.0
        %4271 = vmatpush.msra.mxu0 0.0
        %4272 = vmatpush.msra.mxu0 0.0
        %4273 = vmatpush.msra.mxu0 0.0
        %4274 = vmatpush.msra.mxu0 0.0
        %4275 = vmatpush.msra.mxu0 0.0
        %4276 = vmatpush.msra.mxu0 0.0
        %4277 = vmatpush.msra.mxu0 %v4219
        %4278 = vmatpush.msra.mxu0 %v4218
        %4279 = vmatmul.f32.gmra.mxu0 %v4236
        %v4280 = vpop.f32.mrf.mxu0
        %v4281 = vadd.f32 %v4258, %v4280
        %4282 = vmatmul.f32.gmra.mxu0 %v4238
        %v4283 = vpop.f32.mrf.mxu0
        %v4284 = vadd.f32 %v4261, %v4283
        %4285 = vdwg.mxu0
        %v4286 = vadd.f32 %v4192, %v4281
        %v4287 = vadd.f32 %v4195, %v4284
        %v4288 = vld [vmem:[%s8] sm:$0x1]
        %v4290 = vperm.slane %v4288, 0
        %v4292 = vadd.f32 %v4286, %v4290
        %v4293 = vadd.f32 %v4287, %v4290
        %v4294 = vsub.f32 0.0, %v4292
        %v4295 = vsub.f32 0.0, %v4293
        %v4296 = vmul.f32 %v4294, 1.442695
        %v4297 = vpow.pop %v4296
        %v4298 = vmul.f32 %v4295, 1.442695
        %v4299 = vpow.pop %v4298
        %v4300 = vadd.f32 %v4297, 1.0
        %v4301 = vadd.f32 %v4299, 1.0
        %v4302 = vrcp.pop %v4300
        %v4303 = vmul.f32 %v4300, %v4302
        %v4304 = vsub.f32 1.0, %v4303
        %v4305 = vmul.f32 %v4302, %v4304
        %v4306 = vadd.f32 %v4302, %v4305
        %vm4307 = vweird.f32 %v4300
        %vm4308 = vweird.f32 %v4302
        %vm4309 = vmor %vm4307, %vm4308
        %v4310 = vsel %vm4309, %v4302, %v4306
        %v4311 = vand.u32 2147483647, %v4300
        %vm4312 = vcmp.eq.f32.partialorder %v4311, 8.507059e+37
        %v4313 = vand.u32 %v4300, 2147483648
        %v4314 = vor.u32 1.1754944e-38, %v4313
        %v4315 = vsel %vm4312, %v4314, %v4310
        %v4316 = vmul.f32 1.0, %v4315
        %v4317 = vrcp.pop %v4301
        %v4318 = vmul.f32 %v4301, %v4317
        %v4319 = vsub.f32 1.0, %v4318
        %v4320 = vmul.f32 %v4317, %v4319
        %v4321 = vadd.f32 %v4317, %v4320
        %vm4322 = vweird.f32 %v4301
        %vm4323 = vweird.f32 %v4317
        %vm4324 = vmor %vm4322, %vm4323
        %v4325 = vsel %vm4324, %v4317, %v4321
        %v4326 = vand.u32 2147483647, %v4301
        %vm4327 = vcmp.eq.f32.partialorder %v4326, 8.507059e+37
        %v4328 = vand.u32 %v4301, 2147483648
        %v4329 = vor.u32 1.1754944e-38, %v4328
        %v4330 = vsel %vm4327, %v4329, %v4325
        %v4331 = vmul.f32 1.0, %v4330
        %4332 = vst.msk [vmem:[%s399] sm:$0xff] %vm442, %v4316
        %4333 = vst.msk [vmem:[%s399 + $0x8] sm:$0xff] %vm442, %v4331
        %p4334 = scmp.lt.s32.totalorder %s23, 1
        %s4335 = scalar_select %p4334, %s23, 1
        %s4336 = smul.addr %s4335, 2
        %s4337 = smul.addr %s4336, 8
        %s4338 = scalar_lea.vmem %s9, %s4337
        // Predicated region
        $region73: #{_lambda_.1} parent=55 // pred_check
          %p4339 = pneg %p235
        $region74: #{_lambda_.1} parent=55 // pred_check_branch
          %4341 = sbr.rel (%p4339) target = $region76
        $region75: #{_lambda_.1} parent=55 // pred_region
          _
        $region76: #{_lambda_.1} parent=55 // pred_fallthru
          _
      $region56: #{_lambda_.1} parent=5 // pred_fallthru
        _
      %p4342 = scmp.le.s32.totalorder 2, %s18
      // Predicated region
      $region77: #{_lambda_.1} parent=5 // pred_check
        %p4343 = pneg %p4342
      $region78: #{_lambda_.1} parent=5 // pred_check_branch
        %4345 = sbr.rel (%p4343) target = $region80
      $region79: #{_lambda_.1} parent=5 // pred_region
        %s4346 = ssub.s32 %s18, 2
        // Predicated region
        $region81: #{_lambda_.1} parent=79 // pred_check
          %p4347 = pneg %p241
        $region82: #{_lambda_.1} parent=79 // pred_check_branch
          %4349 = sbr.rel (%p4347) target = $region84
        $region83: #{_lambda_.1} parent=79 // pred_region
          %p4350 = scmp.lt.s32.totalorder %s24, 1
          %s4351 = scalar_select %p4350, %s24, 1
          %s4352 = smul.addr %s4351, 2
          %s4353 = smul.addr %s4352, 8
          %s4354 = scalar_lea.vmem %s9, %s4353
        $region84: #{_lambda_.1} parent=79 // pred_fallthru
          _
      $region80: #{_lambda_.1} parent=5 // pred_fallthru
        _
    $region6: #{_lambda_.1} parent=1 // loop_footer
      %s22 = sadd.s32 1, %s18
    $region7: #{_lambda_.1} parent=1 // loop_footer_branch
      %17 = sbr.rel target = $region3
    $region8: #{_lambda_.1} parent=1 // loop_exit
      _
    %4355 = vsyncpa [#allocation7], 1
    %s4356 = scalar_lea.sflag [#allocation7], 1
    %4357 = vsyncpa %s4356, 1
    %4358 = vsyncpa [#allocation9], 1
    %4359 = vsyncpa [#allocation12], 1

</llo_original>
